<compile_context>
chip_gen: v5e
topology: v5e:2x2
jax: 0.10.0
libtpu: 0.0.40
codegen_flags: <defaults>
</compile_context>

<pallas_src>
import math
import functools

import jax
import jax.numpy as jnp
from jax.experimental import pallas as pl
from jax.experimental.pallas import tpu as pltpu

# ----------------------------- configuration --------------------------------
VOCAB_SIZE = 64
D_MODEL    = 32
NUM_HEADS  = 4
NUM_BLOCKS = 2
BATCH      = 2
SEQ        = 8
ENC_SEQ    = 8
OUT_PAD    = 128        # lane-dense padded vocab width -> single unmasked vst
LN_EPS     = 1e-5

_BLOCK_KEYS = ("w_q1", "b_q1", "w_kv1", "b_kv1", "wo1", "bo1",
               "w_q2", "b_q2", "w_kv2", "b_kv2", "wo2", "bo2",
               "ffn_w1", "ffn_b1", "ffn_w2", "ffn_b2",
               "ln_gamma", "ln_beta")
_NW = len(_BLOCK_KEYS)   # 18 parameter arrays per decoder block


# --------------------------- fused decoder kernel ----------------------------
def _fused_decoder_kernel(*refs, num_blocks, num_heads, has_prev):
    it = iter(refs)
    x_ref    = next(it)                               # (B, S, D)      f32
    enc_ref  = next(it)                               # (B, Senc, D)   f32
    prev_ref = next(it) if has_prev else None         # (NB, B, P, D)  f32
    block_w  = [tuple(next(it) for _ in range(_NW)) for _ in range(num_blocks)]
    w_out_ref = next(it)                              # (D, OUT_PAD)   bf16
    b_out_ref = next(it)                              # (1, OUT_PAD)   f32
    logits_ref = next(it)                             # (B*S, OUT_PAD) f32  out
    cache_refs = list(it)                             # (NB-1) x (B,S,D)    out

    B, S, D = x_ref.shape
    H  = num_heads
    Dh = D // H
    bf16 = jnp.bfloat16

    def dense(a2d, w_ref, b_ref):
        # bf16 MXU operands, f32 accumulation; bias add stays f32.
        return jnp.dot(a2d.astype(bf16), w_ref[...],
                       preferred_element_type=jnp.float32) + b_ref[...]

    def add_norm(y, r, gamma, beta):
        # One-pass LayerNorm(y + r): var = E[s^2] - mu^2 (one fewer reduction).
        s = y + r
        mu  = jnp.mean(s, axis=-1, keepdims=True)
        var = jnp.mean(s * s, axis=-1, keepdims=True) - mu * mu
        return (s - mu) * jax.lax.rsqrt(var + LN_EPS) * gamma + beta

    def heads_to_batch(a2d, seq_len, base):
        # (B*seq, lanes) -> (H*B, seq, Dh): move the head lane-block to the
        # leading einsum-batch dim with a cheap axis-0 stack (no lane/sublane
        # transposes); everything downstream is a single batched einsum.
        parts = [a2d[:, base + h * Dh: base + (h + 1) * Dh] for h in range(H)]
        return jnp.stack(parts, axis=0).reshape(H * B, seq_len, Dh)

    def mha(q3d, kv3d, w_q, b_q, w_kv, b_kv, w_o, b_o):
        Sq, Sk = q3d.shape[1], kv3d.shape[1]
        # 1/sqrt(Dh) is pre-folded into w_q / b_q at init time.
        q  = dense(q3d.reshape(B * Sq, D),  w_q,  b_q).astype(bf16)
        kv = dense(kv3d.reshape(B * Sk, D), w_kv, b_kv).astype(bf16)   # fused K|V
        qh = heads_to_batch(q,  Sq, 0)                 # (H*B, Sq, Dh)
        kh = heads_to_batch(kv, Sk, 0)                 # (H*B, Sk, Dh)
        vh = heads_to_batch(kv, Sk, D)                 # (H*B, Sk, Dh)

        # One batched score einsum + ONE softmax over all heads and batches.
        # TODO(synk): trg/src masks not applied (reference eval path / no padding).
        s = jnp.einsum("nqd,nkd->nqk", qh, kh, preferred_element_type=jnp.float32)
        m = jnp.max(s, axis=-1, keepdims=True)
        p = jnp.exp(s - m)
        p = p * pl.reciprocal(jnp.sum(p, axis=-1, keepdims=True), approx=True)
        o = jnp.einsum("nqk,nkd->nqd", p.astype(bf16), vh,
                       preferred_element_type=jnp.float32)             # (H*B,Sq,Dh)

        # Project each head through its row-slice of W_o and accumulate:
        # removes the concat-heads relayout entirely.
        wo  = w_o[...]                                                  # (D, D) bf16
        out = jnp.zeros((B * Sq, D), jnp.float32)
        for h in range(H):
            oh = o[h * B:(h + 1) * B].reshape(B * Sq, Dh).astype(bf16)
            out = out + jnp.dot(oh, wo[h * Dh:(h + 1) * Dh, :],
                                preferred_element_type=jnp.float32)
        return (out + b_o[...]).reshape(B, Sq, D)

    x   = x_ref[...]
    enc = enc_ref[...]
    for b in range(num_blocks):
        (w_q1, b_q1, w_kv1, b_kv1, wo1, bo1,
         w_q2, b_q2, w_kv2, b_kv2, wo2, bo2,
         w1, b1, w2, b2, g_r, be_r) = block_w[b]

        if b > 0:
            # Raw input to block b+1 -> emitted so JAX-side cache bookkeeping
            # (state[3][i] concat) keeps the reference semantics.
            cache_refs[b - 1][...] = x

        gamma, beta = g_r[...], be_r[...]

        # Self-attention: K/V = [previous cached rows ; current x]   (mask=None).
        kv_self = (jnp.concatenate([prev_ref[b], x], axis=1) if has_prev else x)
        x = add_norm(mha(x, kv_self, w_q1, b_q1, w_kv1, b_kv1, wo1, bo1),
                     x, gamma, beta)

        # Cross-attention with the encoder output.
        # TODO(synk): enc_valid (src_mask) not applied -- demo has no padded
        # encoder positions; add a key-length mask before the softmax if needed.
        x = add_norm(mha(x, enc, w_q2, b_q2, w_kv2, b_kv2, wo2, bo2),
                     x, gamma, beta)

        # Feed-forward (D -> 2D -> D, ReLU), same shared AddNorm (per reference).
        h2 = jnp.maximum(dense(x.reshape(B * S, D), w1, b1), 0.0)
        y  = dense(h2, w2, b2).reshape(B, S, D)
        x  = add_norm(y, x, gamma, beta)

    # Final vocab projection, padded to 128 lanes -> single unmasked vst.
    logits_ref[...] = dense(x.reshape(B * S, D), w_out_ref, b_out_ref)


def fused_decoder(params, x, enc, prev_stack):
    B, S, D = x.shape
    Senc = enc.shape[1]
    has_prev = prev_stack is not None
    Skv = S + (prev_stack.shape[2] if has_prev else 0)

    flat = [x, enc]
    if has_prev:
        flat.append(prev_stack)
    for blk in params["blocks"]:
        flat.extend(blk[k] for k in _BLOCK_KEYS)
    flat += [params["w_out_pad"], params["b_out_pad"]]

    out_shape = tuple(
        [jax.ShapeDtypeStruct((B * S, OUT_PAD), jnp.float32)]
        + [jax.ShapeDtypeStruct((B, S, D), jnp.float32)] * (NUM_BLOCKS - 1))

    Dh = D // NUM_HEADS
    mm = 2 * NUM_BLOCKS * (2 * B * S * D * D                      # q projections
                           + (B * Skv + B * Senc) * D * 2 * D     # fused K|V
                           + 2 * B * S * D * D                    # out projections
                           + 2 * B * S * D * 2 * D)               # FFN
    attn  = 2 * NUM_BLOCKS * 2 * B * NUM_HEADS * Dh * S * (Skv + Senc)
    vocab = 2 * B * S * D * OUT_PAD
    nbytes = (sum(int(a.size) * a.dtype.itemsize for a in flat)
              + sum(math.prod(o.shape) * o.dtype.itemsize for o in out_shape))
    cost = pl.CostEstimate(
        flops=int(mm + attn + vocab),
        transcendentals=int(NUM_BLOCKS * B * NUM_HEADS * S * (Skv + Senc)),
        bytes_accessed=int(nbytes))

    # No grid / no BlockSpecs: every operand is one full-array VMEM block, so
    # there is no double-buffering of the ~40 tiny operands and the prologue is
    # a single set of DMAs.  vmem_limit_bytes set explicitly (v7x has 64 MiB).
    # TODO(synk): on v7x, shard the batch across the 2 TensorCores (core_map /
    # leading parallel grid axis) once the batch is large enough to amortize it.
    return pl.pallas_call(
        functools.partial(_fused_decoder_kernel, num_blocks=NUM_BLOCKS,
                          num_heads=NUM_HEADS, has_prev=has_prev),
        out_shape=out_shape,
        compiler_params=pltpu.CompilerParams(vmem_limit_bytes=32 * 1024 * 1024),
        cost_estimate=cost,
    )(*flat)


# -------------------------- module-level wrappers ----------------------------
def positional_encoding(seq_len, d_model):
    pos = jnp.arange(seq_len, dtype=jnp.float32)[:, None]
    i = jnp.arange(d_model // 2, dtype=jnp.float32)[None, :]
    angle = pos / jnp.power(10000.0, (2.0 * i) / d_model)
    pe = jnp.zeros((seq_len, d_model), jnp.float32)
    pe = pe.at[:, 0::2].set(jnp.sin(angle))
    pe = pe.at[:, 1::2].set(jnp.cos(angle))
    return pe


def init_state(encoder_outputs, enc_valid, enc_max, num_blocks):
    return [encoder_outputs, enc_valid, enc_max,
            {i + 1: None for i in range(num_blocks)}]


def decoder_forward(params, tokens, state):
    B, S = tokens.shape
    # sqrt(d_model) is pre-folded into the embedding table.
    x = jnp.take(params["embedding"], tokens, axis=0)
    x = x + positional_encoding(S, D_MODEL)[None, :, :]

    caches = state[3]
    prev_list = [caches[i + 1] for i in range(NUM_BLOCKS)]
    has_prev = prev_list[0] is not None
    # Every block receives the same number of new rows per call, so the raw-x
    # caches share one length and stack into a single kernel input.
    # TODO(synk): for long multi-step decoding, switch to a fixed-size projected
    # K/V cache updated in place via input_output_aliases to avoid per-length
    # recompiles and per-step re-projection of the whole cache.
    prev_stack = jnp.stack(prev_list, axis=0) if has_prev else None

    outs = fused_decoder(params, x, state[0], prev_stack)
    logits_pad = outs[0]
    block_inputs = [x] + list(outs[1:])          # raw input fed to each block

    for i in range(NUM_BLOCKS):
        key = i + 1
        caches[key] = (block_inputs[i] if caches[key] is None
                       else jnp.concatenate([caches[key], block_inputs[i]], axis=1))

    logits = logits_pad[:, :VOCAB_SIZE].reshape(B, S, VOCAB_SIZE)
    return logits, state


# ------------------------------ param init -----------------------------------
def _dense_params(key, d_in, d_out, scale=1.0):
    # Matmul weights stored in bf16 (MXU operand dtype); biases stay f32 and are
    # pre-shaped (1, N).  `scale` folds constant factors (e.g. 1/sqrt(Dh)) into
    # the weights (and conceptually the bias, which is zero-initialized here).
    w = (jax.random.normal(key, (d_in, d_out), jnp.float32) * 0.02 * scale
         ).astype(jnp.bfloat16)
    b = jnp.zeros((1, d_out), jnp.float32)
    return w, b


def init_params(key):
    D, H = D_MODEL, NUM_HEADS
    q_scale = 1.0 / math.sqrt(D // H)        # attention scale folded into W_q
    keys = jax.random.split(key, 2 + NUM_BLOCKS)

    params = {
        # sqrt(d_model) embedding scale folded into the table.
        "embedding": jax.random.normal(keys[0], (VOCAB_SIZE, D), jnp.float32)
                     * 0.02 * math.sqrt(D),
    }

    # Vocab projection, padded to 128 output lanes (zeros beyond VOCAB_SIZE).
    w_out = jax.random.normal(keys[1], (D, VOCAB_SIZE), jnp.float32) * 0.02
    w_out_pad = jnp.zeros((D, OUT_PAD), jnp.float32).at[:, :VOCAB_SIZE].set(w_out)
    params["w_out_pad"] = w_out_pad.astype(jnp.bfloat16)
    params["b_out_pad"] = jnp.zeros((1, OUT_PAD), jnp.float32)

    blocks = []
    for b in range(NUM_BLOCKS):
        bk = jax.random.split(keys[2 + b], 8)
        w_q1, b_q1     = _dense_params(bk[0], D, D, scale=q_scale)
        w_kv1, b_kv1   = _dense_params(bk[1], D, 2 * D)        # fused K|V
        wo1, bo1       = _dense_params(bk[2], D, D)
        w_q2, b_q2     = _dense_params(bk[3], D, D, scale=q_scale)
        w_kv2, b_kv2   = _dense_params(bk[4], D, 2 * D)        # fused K|V
        wo2, bo2       = _dense_params(bk[5], D, D)
        ffn_w1, ffn_b1 = _dense_params(bk[6], D, 2 * D)
        ffn_w2, ffn_b2 = _dense_params(bk[7], 2 * D, D)
        blocks.append({
            "w_q1": w_q1, "b_q1": b_q1, "w_kv1": w_kv1, "b_kv1": b_kv1,
            "wo1": wo1, "bo1": bo1,
            "w_q2": w_q2, "b_q2": b_q2, "w_kv2": w_kv2, "b_kv2": b_kv2,
            "wo2": wo2, "bo2": bo2,
            "ffn_w1": ffn_w1, "ffn_b1": ffn_b1,
            "ffn_w2": ffn_w2, "ffn_b2": ffn_b2,
            # One AddNorm module shared by all three sublayers, as in the spec.
            "ln_gamma": jnp.ones((1, D), jnp.float32),
            "ln_beta":  jnp.zeros((1, D), jnp.float32),
        })
    params["blocks"] = blocks
    return params


# --------------------------------- main ---------------------------------------
if __name__ == "__main__":
    root = jax.random.PRNGKey(0)
    k_params, k_tokens, k_enc = jax.random.split(root, 3)

    params = init_params(k_params)
    tokens = jax.random.randint(k_tokens, (BATCH, SEQ), 0, VOCAB_SIZE)           # [B, S]
    encoder_output = jax.random.normal(k_enc, (BATCH, ENC_SEQ, D_MODEL), jnp.float32)
    enc_valid = jnp.full((BATCH,), ENC_SEQ, jnp.int32)

    state = init_state(encoder_output, enc_valid, ENC_SEQ, NUM_BLOCKS)
    logits, state = decoder_forward(params, tokens, state)
    logits = jax.block_until_ready(logits)

    assert logits.shape == (BATCH, SEQ, VOCAB_SIZE)
    assert bool(jnp.all(jnp.isfinite(logits)))
    assert state[3][1].shape == (BATCH, SEQ, D_MODEL)            # caches populated
    assert state[3][NUM_BLOCKS].shape == (BATCH, SEQ, D_MODEL)
    print("KERNEL_OK")
</pallas_src>

<mosaic_0001>
module attributes {stable_mosaic.version = 11 : i64} {
  func.func @_fused_decoder_kernel(%arg0: memref<2x8x32xf32, #tpu.memory_space<vmem>>, %arg1: memref<2x8x32xf32, #tpu.memory_space<vmem>>, %arg2: memref<32x32xbf16, #tpu.memory_space<vmem>>, %arg3: memref<1x32xf32, #tpu.memory_space<vmem>>, %arg4: memref<32x64xbf16, #tpu.memory_space<vmem>>, %arg5: memref<1x64xf32, #tpu.memory_space<vmem>>, %arg6: memref<32x32xbf16, #tpu.memory_space<vmem>>, %arg7: memref<1x32xf32, #tpu.memory_space<vmem>>, %arg8: memref<32x32xbf16, #tpu.memory_space<vmem>>, %arg9: memref<1x32xf32, #tpu.memory_space<vmem>>, %arg10: memref<32x64xbf16, #tpu.memory_space<vmem>>, %arg11: memref<1x64xf32, #tpu.memory_space<vmem>>, %arg12: memref<32x32xbf16, #tpu.memory_space<vmem>>, %arg13: memref<1x32xf32, #tpu.memory_space<vmem>>, %arg14: memref<32x64xbf16, #tpu.memory_space<vmem>>, %arg15: memref<1x64xf32, #tpu.memory_space<vmem>>, %arg16: memref<64x32xbf16, #tpu.memory_space<vmem>>, %arg17: memref<1x32xf32, #tpu.memory_space<vmem>>, %arg18: memref<1x32xf32, #tpu.memory_space<vmem>>, %arg19: memref<1x32xf32, #tpu.memory_space<vmem>>, %arg20: memref<32x32xbf16, #tpu.memory_space<vmem>>, %arg21: memref<1x32xf32, #tpu.memory_space<vmem>>, %arg22: memref<32x64xbf16, #tpu.memory_space<vmem>>, %arg23: memref<1x64xf32, #tpu.memory_space<vmem>>, %arg24: memref<32x32xbf16, #tpu.memory_space<vmem>>, %arg25: memref<1x32xf32, #tpu.memory_space<vmem>>, %arg26: memref<32x32xbf16, #tpu.memory_space<vmem>>, %arg27: memref<1x32xf32, #tpu.memory_space<vmem>>, %arg28: memref<32x64xbf16, #tpu.memory_space<vmem>>, %arg29: memref<1x64xf32, #tpu.memory_space<vmem>>, %arg30: memref<32x32xbf16, #tpu.memory_space<vmem>>, %arg31: memref<1x32xf32, #tpu.memory_space<vmem>>, %arg32: memref<32x64xbf16, #tpu.memory_space<vmem>>, %arg33: memref<1x64xf32, #tpu.memory_space<vmem>>, %arg34: memref<64x32xbf16, #tpu.memory_space<vmem>>, %arg35: memref<1x32xf32, #tpu.memory_space<vmem>>, %arg36: memref<1x32xf32, #tpu.memory_space<vmem>>, %arg37: memref<1x32xf32, #tpu.memory_space<vmem>>, %arg38: memref<32x128xbf16, #tpu.memory_space<vmem>>, %arg39: memref<1x128xf32, #tpu.memory_space<vmem>>, %arg40: memref<16x128xf32, #tpu.memory_space<vmem>>, %arg41: memref<2x8x32xf32, #tpu.memory_space<vmem>>) attributes {dimension_semantics = [], scalar_prefetch = 0 : i64, scratch_operands = 0 : i64, tpu.core_type = #tpu.core_type<tc>} {
    %c0 = arith.constant 0 : index
    %c0_0 = arith.constant 0 : index
    %c0_1 = arith.constant 0 : index
    %0 = vector.load %arg0[%c0, %c0_0, %c0_1] : memref<2x8x32xf32, #tpu.memory_space<vmem>>, vector<2x8x32xf32>
    %c0_2 = arith.constant 0 : index
    %c0_3 = arith.constant 0 : index
    %c0_4 = arith.constant 0 : index
    %1 = vector.load %arg1[%c0_2, %c0_3, %c0_4] : memref<2x8x32xf32, #tpu.memory_space<vmem>>, vector<2x8x32xf32>
    %c0_5 = arith.constant 0 : index
    %c0_6 = arith.constant 0 : index
    %2 = vector.load %arg18[%c0_5, %c0_6] : memref<1x32xf32, #tpu.memory_space<vmem>>, vector<1x32xf32>
    %c0_7 = arith.constant 0 : index
    %c0_8 = arith.constant 0 : index
    %3 = vector.load %arg19[%c0_7, %c0_8] : memref<1x32xf32, #tpu.memory_space<vmem>>, vector<1x32xf32>
    %4 = vector.shape_cast %0 : vector<2x8x32xf32> to vector<16x32xf32>
    %5 = arith.truncf %4 : vector<16x32xf32> to vector<16x32xbf16>
    %c0_9 = arith.constant 0 : index
    %c0_10 = arith.constant 0 : index
    %6 = vector.load %arg2[%c0_9, %c0_10] : memref<32x32xbf16, #tpu.memory_space<vmem>>, vector<32x32xbf16>
    %cst = arith.constant dense<0.000000e+00> : vector<16x32xf32>
    %7 = tpu.matmul %5, %6, %cst {dimension_numbers = #tpu.dot_dimension_numbers<[1], [0], [0], [1], [0, 0, 1, 1], [], []>} : vector<16x32xbf16>, vector<32x32xbf16>, vector<16x32xf32> -> vector<16x32xf32>
    %c0_11 = arith.constant 0 : index
    %c0_12 = arith.constant 0 : index
    %8 = vector.load %arg3[%c0_11, %c0_12] : memref<1x32xf32, #tpu.memory_space<vmem>>, vector<1x32xf32>
    %9 = vector.broadcast %8 : vector<1x32xf32> to vector<16x32xf32>
    %10 = arith.addf %7, %9 : vector<16x32xf32>
    %11 = arith.truncf %10 : vector<16x32xf32> to vector<16x32xbf16>
    %12 = vector.shape_cast %0 : vector<2x8x32xf32> to vector<16x32xf32>
    %13 = arith.truncf %12 : vector<16x32xf32> to vector<16x32xbf16>
    %c0_13 = arith.constant 0 : index
    %c0_14 = arith.constant 0 : index
    %14 = vector.load %arg4[%c0_13, %c0_14] : memref<32x64xbf16, #tpu.memory_space<vmem>>, vector<32x64xbf16>
    %cst_15 = arith.constant dense<0.000000e+00> : vector<16x64xf32>
    %15 = tpu.matmul %13, %14, %cst_15 {dimension_numbers = #tpu.dot_dimension_numbers<[1], [0], [0], [1], [0, 0, 1, 1], [], []>} : vector<16x32xbf16>, vector<32x64xbf16>, vector<16x64xf32> -> vector<16x64xf32>
    %c0_16 = arith.constant 0 : index
    %c0_17 = arith.constant 0 : index
    %16 = vector.load %arg5[%c0_16, %c0_17] : memref<1x64xf32, #tpu.memory_space<vmem>>, vector<1x64xf32>
    %17 = vector.broadcast %16 : vector<1x64xf32> to vector<16x64xf32>
    %18 = arith.addf %15, %17 : vector<16x64xf32>
    %19 = arith.truncf %18 : vector<16x64xf32> to vector<16x64xbf16>
    %20 = vector.extract_strided_slice %11 {offsets = [0, 0], sizes = [16, 8], strides = [1, 1]} : vector<16x32xbf16> to vector<16x8xbf16>
    %21 = vector.extract_strided_slice %11 {offsets = [0, 8], sizes = [16, 8], strides = [1, 1]} : vector<16x32xbf16> to vector<16x8xbf16>
    %22 = vector.extract_strided_slice %11 {offsets = [0, 16], sizes = [16, 8], strides = [1, 1]} : vector<16x32xbf16> to vector<16x8xbf16>
    %23 = vector.extract_strided_slice %11 {offsets = [0, 24], sizes = [16, 8], strides = [1, 1]} : vector<16x32xbf16> to vector<16x8xbf16>
    %24 = vector.shape_cast %20 : vector<16x8xbf16> to vector<1x16x8xbf16>
    %25 = vector.shape_cast %21 : vector<16x8xbf16> to vector<1x16x8xbf16>
    %26 = vector.shape_cast %22 : vector<16x8xbf16> to vector<1x16x8xbf16>
    %27 = vector.shape_cast %23 : vector<16x8xbf16> to vector<1x16x8xbf16>
    %28 = tpu.concatenate %24, %25, %26, %27 in 0 : vector<1x16x8xbf16>, vector<1x16x8xbf16>, vector<1x16x8xbf16>, vector<1x16x8xbf16> -> vector<4x16x8xbf16>
    %29 = vector.shape_cast %28 : vector<4x16x8xbf16> to vector<8x8x8xbf16>
    %30 = vector.extract_strided_slice %19 {offsets = [0, 0], sizes = [16, 8], strides = [1, 1]} : vector<16x64xbf16> to vector<16x8xbf16>
    %31 = vector.extract_strided_slice %19 {offsets = [0, 8], sizes = [16, 8], strides = [1, 1]} : vector<16x64xbf16> to vector<16x8xbf16>
    %32 = vector.extract_strided_slice %19 {offsets = [0, 16], sizes = [16, 8], strides = [1, 1]} : vector<16x64xbf16> to vector<16x8xbf16>
    %33 = vector.extract_strided_slice %19 {offsets = [0, 24], sizes = [16, 8], strides = [1, 1]} : vector<16x64xbf16> to vector<16x8xbf16>
    %34 = vector.shape_cast %30 : vector<16x8xbf16> to vector<1x16x8xbf16>
    %35 = vector.shape_cast %31 : vector<16x8xbf16> to vector<1x16x8xbf16>
    %36 = vector.shape_cast %32 : vector<16x8xbf16> to vector<1x16x8xbf16>
    %37 = vector.shape_cast %33 : vector<16x8xbf16> to vector<1x16x8xbf16>
    %38 = tpu.concatenate %34, %35, %36, %37 in 0 : vector<1x16x8xbf16>, vector<1x16x8xbf16>, vector<1x16x8xbf16>, vector<1x16x8xbf16> -> vector<4x16x8xbf16>
    %39 = vector.shape_cast %38 : vector<4x16x8xbf16> to vector<8x8x8xbf16>
    %40 = vector.extract_strided_slice %19 {offsets = [0, 32], sizes = [16, 8], strides = [1, 1]} : vector<16x64xbf16> to vector<16x8xbf16>
    %41 = vector.extract_strided_slice %19 {offsets = [0, 40], sizes = [16, 8], strides = [1, 1]} : vector<16x64xbf16> to vector<16x8xbf16>
    %42 = vector.extract_strided_slice %19 {offsets = [0, 48], sizes = [16, 8], strides = [1, 1]} : vector<16x64xbf16> to vector<16x8xbf16>
    %43 = vector.extract_strided_slice %19 {offsets = [0, 56], sizes = [16, 8], strides = [1, 1]} : vector<16x64xbf16> to vector<16x8xbf16>
    %44 = vector.shape_cast %40 : vector<16x8xbf16> to vector<1x16x8xbf16>
    %45 = vector.shape_cast %41 : vector<16x8xbf16> to vector<1x16x8xbf16>
    %46 = vector.shape_cast %42 : vector<16x8xbf16> to vector<1x16x8xbf16>
    %47 = vector.shape_cast %43 : vector<16x8xbf16> to vector<1x16x8xbf16>
    %48 = tpu.concatenate %44, %45, %46, %47 in 0 : vector<1x16x8xbf16>, vector<1x16x8xbf16>, vector<1x16x8xbf16>, vector<1x16x8xbf16> -> vector<4x16x8xbf16>
    %49 = vector.shape_cast %48 : vector<4x16x8xbf16> to vector<8x8x8xbf16>
    "tpu.trace_start"() <{level = 10 : i32, message = "nqd,nkd->nqk"}> : () -> ()
    %cst_18 = arith.constant dense<0.000000e+00> : vector<8x8x8xf32>
    %50 = tpu.matmul %29, %39, %cst_18 {dimension_numbers = #tpu.dot_dimension_numbers<[2], [2], [1], [1], [0, 0, 0, 1, 1, 1], [0], [0]>} : vector<8x8x8xbf16>, vector<8x8x8xbf16>, vector<8x8x8xf32> -> vector<8x8x8xf32>
    "tpu.trace_stop"() : () -> ()
    %cst_19 = arith.constant dense<0xFF800000> : vector<8x8xf32>
    %51 = vector.multi_reduction <maximumf>, %50, %cst_19 [2] : vector<8x8x8xf32> to vector<8x8xf32>
    %52 = vector.shape_cast %51 : vector<8x8xf32> to vector<8x8x1xf32>
    %53 = vector.broadcast %52 : vector<8x8x1xf32> to vector<8x8x8xf32>
    %54 = arith.subf %50, %53 : vector<8x8x8xf32>
    %55 = math.exp %54 : vector<8x8x8xf32>
    %cst_20 = arith.constant dense<0.000000e+00> : vector<8x8xf32>
    %56 = vector.multi_reduction <add>, %55, %cst_20 [2] : vector<8x8x8xf32> to vector<8x8xf32>
    %57 = vector.shape_cast %56 : vector<8x8xf32> to vector<8x8x1xf32>
    %58 = tpu.reciprocal %57 {approx = true} : vector<8x8x1xf32> -> vector<8x8x1xf32>
    %59 = vector.broadcast %58 : vector<8x8x1xf32> to vector<8x8x8xf32>
    %60 = arith.mulf %55, %59 : vector<8x8x8xf32>
    %61 = arith.truncf %60 : vector<8x8x8xf32> to vector<8x8x8xbf16>
    "tpu.trace_start"() <{level = 10 : i32, message = "nqk,nkd->nqd"}> : () -> ()
    %cst_21 = arith.constant dense<0.000000e+00> : vector<8x8x8xf32>
    %62 = tpu.matmul %61, %49, %cst_21 {dimension_numbers = #tpu.dot_dimension_numbers<[2], [1], [1], [2], [0, 0, 0, 1, 1, 2], [0], [0]>} : vector<8x8x8xbf16>, vector<8x8x8xbf16>, vector<8x8x8xf32> -> vector<8x8x8xf32>
    "tpu.trace_stop"() : () -> ()
    %c0_22 = arith.constant 0 : index
    %c0_23 = arith.constant 0 : index
    %63 = vector.load %arg6[%c0_22, %c0_23] : memref<32x32xbf16, #tpu.memory_space<vmem>>, vector<32x32xbf16>
    %cst_24 = arith.constant 0.000000e+00 : f32
    %64 = vector.broadcast %cst_24 : f32 to vector<16x32xf32>
    %65 = vector.extract_strided_slice %62 {offsets = [0, 0, 0], sizes = [2, 8, 8], strides = [1, 1, 1]} : vector<8x8x8xf32> to vector<2x8x8xf32>
    %66 = vector.shape_cast %65 : vector<2x8x8xf32> to vector<16x8xf32>
    %67 = arith.truncf %66 : vector<16x8xf32> to vector<16x8xbf16>
    %68 = vector.extract_strided_slice %63 {offsets = [0, 0], sizes = [8, 32], strides = [1, 1]} : vector<32x32xbf16> to vector<8x32xbf16>
    %cst_25 = arith.constant dense<0.000000e+00> : vector<16x32xf32>
    %69 = tpu.matmul %67, %68, %cst_25 {dimension_numbers = #tpu.dot_dimension_numbers<[1], [0], [0], [1], [0, 0, 1, 1], [], []>} : vector<16x8xbf16>, vector<8x32xbf16>, vector<16x32xf32> -> vector<16x32xf32>
    %70 = arith.addf %64, %69 : vector<16x32xf32>
    %71 = vector.extract_strided_slice %62 {offsets = [2, 0, 0], sizes = [2, 8, 8], strides = [1, 1, 1]} : vector<8x8x8xf32> to vector<2x8x8xf32>
    %72 = vector.shape_cast %71 : vector<2x8x8xf32> to vector<16x8xf32>
    %73 = arith.truncf %72 : vector<16x8xf32> to vector<16x8xbf16>
    %74 = vector.extract_strided_slice %63 {offsets = [8, 0], sizes = [8, 32], strides = [1, 1]} : vector<32x32xbf16> to vector<8x32xbf16>
    %cst_26 = arith.constant dense<0.000000e+00> : vector<16x32xf32>
    %75 = tpu.matmul %73, %74, %cst_26 {dimension_numbers = #tpu.dot_dimension_numbers<[1], [0], [0], [1], [0, 0, 1, 1], [], []>} : vector<16x8xbf16>, vector<8x32xbf16>, vector<16x32xf32> -> vector<16x32xf32>
    %76 = arith.addf %70, %75 : vector<16x32xf32>
    %77 = vector.extract_strided_slice %62 {offsets = [4, 0, 0], sizes = [2, 8, 8], strides = [1, 1, 1]} : vector<8x8x8xf32> to vector<2x8x8xf32>
    %78 = vector.shape_cast %77 : vector<2x8x8xf32> to vector<16x8xf32>
    %79 = arith.truncf %78 : vector<16x8xf32> to vector<16x8xbf16>
    %80 = vector.extract_strided_slice %63 {offsets = [16, 0], sizes = [8, 32], strides = [1, 1]} : vector<32x32xbf16> to vector<8x32xbf16>
    %cst_27 = arith.constant dense<0.000000e+00> : vector<16x32xf32>
    %81 = tpu.matmul %79, %80, %cst_27 {dimension_numbers = #tpu.dot_dimension_numbers<[1], [0], [0], [1], [0, 0, 1, 1], [], []>} : vector<16x8xbf16>, vector<8x32xbf16>, vector<16x32xf32> -> vector<16x32xf32>
    %82 = arith.addf %76, %81 : vector<16x32xf32>
    %83 = vector.extract_strided_slice %62 {offsets = [6, 0, 0], sizes = [2, 8, 8], strides = [1, 1, 1]} : vector<8x8x8xf32> to vector<2x8x8xf32>
    %84 = vector.shape_cast %83 : vector<2x8x8xf32> to vector<16x8xf32>
    %85 = arith.truncf %84 : vector<16x8xf32> to vector<16x8xbf16>
    %86 = vector.extract_strided_slice %63 {offsets = [24, 0], sizes = [8, 32], strides = [1, 1]} : vector<32x32xbf16> to vector<8x32xbf16>
    %cst_28 = arith.constant dense<0.000000e+00> : vector<16x32xf32>
    %87 = tpu.matmul %85, %86, %cst_28 {dimension_numbers = #tpu.dot_dimension_numbers<[1], [0], [0], [1], [0, 0, 1, 1], [], []>} : vector<16x8xbf16>, vector<8x32xbf16>, vector<16x32xf32> -> vector<16x32xf32>
    %88 = arith.addf %82, %87 : vector<16x32xf32>
    %c0_29 = arith.constant 0 : index
    %c0_30 = arith.constant 0 : index
    %89 = vector.load %arg7[%c0_29, %c0_30] : memref<1x32xf32, #tpu.memory_space<vmem>>, vector<1x32xf32>
    %90 = vector.broadcast %89 : vector<1x32xf32> to vector<16x32xf32>
    %91 = arith.addf %88, %90 : vector<16x32xf32>
    %92 = vector.shape_cast %91 : vector<16x32xf32> to vector<2x8x32xf32>
    %93 = arith.addf %92, %0 : vector<2x8x32xf32>
    %cst_31 = arith.constant dense<0.000000e+00> : vector<2x8xf32>
    %94 = vector.multi_reduction <add>, %93, %cst_31 [2] : vector<2x8x32xf32> to vector<2x8xf32>
    %95 = vector.shape_cast %94 : vector<2x8xf32> to vector<2x8x1xf32>
    %cst_32 = arith.constant 3.200000e+01 : f32
    %96 = vector.broadcast %cst_32 : f32 to vector<2x8x1xf32>
    %97 = arith.divf %95, %96 : vector<2x8x1xf32>
    %98 = arith.mulf %93, %93 : vector<2x8x32xf32>
    %cst_33 = arith.constant dense<0.000000e+00> : vector<2x8xf32>
    %99 = vector.multi_reduction <add>, %98, %cst_33 [2] : vector<2x8x32xf32> to vector<2x8xf32>
    %100 = vector.shape_cast %99 : vector<2x8xf32> to vector<2x8x1xf32>
    %cst_34 = arith.constant 3.200000e+01 : f32
    %101 = vector.broadcast %cst_34 : f32 to vector<2x8x1xf32>
    %102 = arith.divf %100, %101 : vector<2x8x1xf32>
    %103 = arith.mulf %97, %97 : vector<2x8x1xf32>
    %104 = arith.subf %102, %103 : vector<2x8x1xf32>
    %105 = vector.broadcast %97 : vector<2x8x1xf32> to vector<2x8x32xf32>
    %106 = arith.subf %93, %105 : vector<2x8x32xf32>
    %cst_35 = arith.constant 9.99999974E-6 : f32
    %107 = vector.broadcast %cst_35 : f32 to vector<2x8x1xf32>
    %108 = arith.addf %104, %107 : vector<2x8x1xf32>
    %109 = math.rsqrt %108 : vector<2x8x1xf32>
    %110 = vector.broadcast %109 : vector<2x8x1xf32> to vector<2x8x32xf32>
    %111 = arith.mulf %106, %110 : vector<2x8x32xf32>
    %112 = vector.shape_cast %2 : vector<1x32xf32> to vector<1x1x32xf32>
    %113 = vector.broadcast %112 : vector<1x1x32xf32> to vector<2x8x32xf32>
    %114 = arith.mulf %111, %113 : vector<2x8x32xf32>
    %115 = vector.shape_cast %3 : vector<1x32xf32> to vector<1x1x32xf32>
    %116 = vector.broadcast %115 : vector<1x1x32xf32> to vector<2x8x32xf32>
    %117 = arith.addf %114, %116 : vector<2x8x32xf32>
    %118 = vector.shape_cast %117 : vector<2x8x32xf32> to vector<16x32xf32>
    %119 = arith.truncf %118 : vector<16x32xf32> to vector<16x32xbf16>
    %c0_36 = arith.constant 0 : index
    %c0_37 = arith.constant 0 : index
    %120 = vector.load %arg8[%c0_36, %c0_37] : memref<32x32xbf16, #tpu.memory_space<vmem>>, vector<32x32xbf16>
    %cst_38 = arith.constant dense<0.000000e+00> : vector<16x32xf32>
    %121 = tpu.matmul %119, %120, %cst_38 {dimension_numbers = #tpu.dot_dimension_numbers<[1], [0], [0], [1], [0, 0, 1, 1], [], []>} : vector<16x32xbf16>, vector<32x32xbf16>, vector<16x32xf32> -> vector<16x32xf32>
    %c0_39 = arith.constant 0 : index
    %c0_40 = arith.constant 0 : index
    %122 = vector.load %arg9[%c0_39, %c0_40] : memref<1x32xf32, #tpu.memory_space<vmem>>, vector<1x32xf32>
    %123 = vector.broadcast %122 : vector<1x32xf32> to vector<16x32xf32>
    %124 = arith.addf %121, %123 : vector<16x32xf32>
    %125 = arith.truncf %124 : vector<16x32xf32> to vector<16x32xbf16>
    %126 = vector.shape_cast %1 : vector<2x8x32xf32> to vector<16x32xf32>
    %127 = arith.truncf %126 : vector<16x32xf32> to vector<16x32xbf16>
    %c0_41 = arith.constant 0 : index
    %c0_42 = arith.constant 0 : index
    %128 = vector.load %arg10[%c0_41, %c0_42] : memref<32x64xbf16, #tpu.memory_space<vmem>>, vector<32x64xbf16>
    %cst_43 = arith.constant dense<0.000000e+00> : vector<16x64xf32>
    %129 = tpu.matmul %127, %128, %cst_43 {dimension_numbers = #tpu.dot_dimension_numbers<[1], [0], [0], [1], [0, 0, 1, 1], [], []>} : vector<16x32xbf16>, vector<32x64xbf16>, vector<16x64xf32> -> vector<16x64xf32>
    %c0_44 = arith.constant 0 : index
    %c0_45 = arith.constant 0 : index
    %130 = vector.load %arg11[%c0_44, %c0_45] : memref<1x64xf32, #tpu.memory_space<vmem>>, vector<1x64xf32>
    %131 = vector.broadcast %130 : vector<1x64xf32> to vector<16x64xf32>
    %132 = arith.addf %129, %131 : vector<16x64xf32>
    %133 = arith.truncf %132 : vector<16x64xf32> to vector<16x64xbf16>
    %134 = vector.extract_strided_slice %125 {offsets = [0, 0], sizes = [16, 8], strides = [1, 1]} : vector<16x32xbf16> to vector<16x8xbf16>
    %135 = vector.extract_strided_slice %125 {offsets = [0, 8], sizes = [16, 8], strides = [1, 1]} : vector<16x32xbf16> to vector<16x8xbf16>
    %136 = vector.extract_strided_slice %125 {offsets = [0, 16], sizes = [16, 8], strides = [1, 1]} : vector<16x32xbf16> to vector<16x8xbf16>
    %137 = vector.extract_strided_slice %125 {offsets = [0, 24], sizes = [16, 8], strides = [1, 1]} : vector<16x32xbf16> to vector<16x8xbf16>
    %138 = vector.shape_cast %134 : vector<16x8xbf16> to vector<1x16x8xbf16>
    %139 = vector.shape_cast %135 : vector<16x8xbf16> to vector<1x16x8xbf16>
    %140 = vector.shape_cast %136 : vector<16x8xbf16> to vector<1x16x8xbf16>
    %141 = vector.shape_cast %137 : vector<16x8xbf16> to vector<1x16x8xbf16>
    %142 = tpu.concatenate %138, %139, %140, %141 in 0 : vector<1x16x8xbf16>, vector<1x16x8xbf16>, vector<1x16x8xbf16>, vector<1x16x8xbf16> -> vector<4x16x8xbf16>
    %143 = vector.shape_cast %142 : vector<4x16x8xbf16> to vector<8x8x8xbf16>
    %144 = vector.extract_strided_slice %133 {offsets = [0, 0], sizes = [16, 8], strides = [1, 1]} : vector<16x64xbf16> to vector<16x8xbf16>
    %145 = vector.extract_strided_slice %133 {offsets = [0, 8], sizes = [16, 8], strides = [1, 1]} : vector<16x64xbf16> to vector<16x8xbf16>
    %146 = vector.extract_strided_slice %133 {offsets = [0, 16], sizes = [16, 8], strides = [1, 1]} : vector<16x64xbf16> to vector<16x8xbf16>
    %147 = vector.extract_strided_slice %133 {offsets = [0, 24], sizes = [16, 8], strides = [1, 1]} : vector<16x64xbf16> to vector<16x8xbf16>
    %148 = vector.shape_cast %144 : vector<16x8xbf16> to vector<1x16x8xbf16>
    %149 = vector.shape_cast %145 : vector<16x8xbf16> to vector<1x16x8xbf16>
    %150 = vector.shape_cast %146 : vector<16x8xbf16> to vector<1x16x8xbf16>
    %151 = vector.shape_cast %147 : vector<16x8xbf16> to vector<1x16x8xbf16>
    %152 = tpu.concatenate %148, %149, %150, %151 in 0 : vector<1x16x8xbf16>, vector<1x16x8xbf16>, vector<1x16x8xbf16>, vector<1x16x8xbf16> -> vector<4x16x8xbf16>
    %153 = vector.shape_cast %152 : vector<4x16x8xbf16> to vector<8x8x8xbf16>
    %154 = vector.extract_strided_slice %133 {offsets = [0, 32], sizes = [16, 8], strides = [1, 1]} : vector<16x64xbf16> to vector<16x8xbf16>
    %155 = vector.extract_strided_slice %133 {offsets = [0, 40], sizes = [16, 8], strides = [1, 1]} : vector<16x64xbf16> to vector<16x8xbf16>
    %156 = vector.extract_strided_slice %133 {offsets = [0, 48], sizes = [16, 8], strides = [1, 1]} : vector<16x64xbf16> to vector<16x8xbf16>
    %157 = vector.extract_strided_slice %133 {offsets = [0, 56], sizes = [16, 8], strides = [1, 1]} : vector<16x64xbf16> to vector<16x8xbf16>
    %158 = vector.shape_cast %154 : vector<16x8xbf16> to vector<1x16x8xbf16>
    %159 = vector.shape_cast %155 : vector<16x8xbf16> to vector<1x16x8xbf16>
    %160 = vector.shape_cast %156 : vector<16x8xbf16> to vector<1x16x8xbf16>
    %161 = vector.shape_cast %157 : vector<16x8xbf16> to vector<1x16x8xbf16>
    %162 = tpu.concatenate %158, %159, %160, %161 in 0 : vector<1x16x8xbf16>, vector<1x16x8xbf16>, vector<1x16x8xbf16>, vector<1x16x8xbf16> -> vector<4x16x8xbf16>
    %163 = vector.shape_cast %162 : vector<4x16x8xbf16> to vector<8x8x8xbf16>
    "tpu.trace_start"() <{level = 10 : i32, message = "nqd,nkd->nqk"}> : () -> ()
    %cst_46 = arith.constant dense<0.000000e+00> : vector<8x8x8xf32>
    %164 = tpu.matmul %143, %153, %cst_46 {dimension_numbers = #tpu.dot_dimension_numbers<[2], [2], [1], [1], [0, 0, 0, 1, 1, 1], [0], [0]>} : vector<8x8x8xbf16>, vector<8x8x8xbf16>, vector<8x8x8xf32> -> vector<8x8x8xf32>
    "tpu.trace_stop"() : () -> ()
    %cst_47 = arith.constant dense<0xFF800000> : vector<8x8xf32>
    %165 = vector.multi_reduction <maximumf>, %164, %cst_47 [2] : vector<8x8x8xf32> to vector<8x8xf32>
    %166 = vector.shape_cast %165 : vector<8x8xf32> to vector<8x8x1xf32>
    %167 = vector.broadcast %166 : vector<8x8x1xf32> to vector<8x8x8xf32>
    %168 = arith.subf %164, %167 : vector<8x8x8xf32>
    %169 = math.exp %168 : vector<8x8x8xf32>
    %cst_48 = arith.constant dense<0.000000e+00> : vector<8x8xf32>
    %170 = vector.multi_reduction <add>, %169, %cst_48 [2] : vector<8x8x8xf32> to vector<8x8xf32>
    %171 = vector.shape_cast %170 : vector<8x8xf32> to vector<8x8x1xf32>
    %172 = tpu.reciprocal %171 {approx = true} : vector<8x8x1xf32> -> vector<8x8x1xf32>
    %173 = vector.broadcast %172 : vector<8x8x1xf32> to vector<8x8x8xf32>
    %174 = arith.mulf %169, %173 : vector<8x8x8xf32>
    %175 = arith.truncf %174 : vector<8x8x8xf32> to vector<8x8x8xbf16>
    "tpu.trace_start"() <{level = 10 : i32, message = "nqk,nkd->nqd"}> : () -> ()
    %cst_49 = arith.constant dense<0.000000e+00> : vector<8x8x8xf32>
    %176 = tpu.matmul %175, %163, %cst_49 {dimension_numbers = #tpu.dot_dimension_numbers<[2], [1], [1], [2], [0, 0, 0, 1, 1, 2], [0], [0]>} : vector<8x8x8xbf16>, vector<8x8x8xbf16>, vector<8x8x8xf32> -> vector<8x8x8xf32>
    "tpu.trace_stop"() : () -> ()
    %c0_50 = arith.constant 0 : index
    %c0_51 = arith.constant 0 : index
    %177 = vector.load %arg12[%c0_50, %c0_51] : memref<32x32xbf16, #tpu.memory_space<vmem>>, vector<32x32xbf16>
    %cst_52 = arith.constant 0.000000e+00 : f32
    %178 = vector.broadcast %cst_52 : f32 to vector<16x32xf32>
    %179 = vector.extract_strided_slice %176 {offsets = [0, 0, 0], sizes = [2, 8, 8], strides = [1, 1, 1]} : vector<8x8x8xf32> to vector<2x8x8xf32>
    %180 = vector.shape_cast %179 : vector<2x8x8xf32> to vector<16x8xf32>
    %181 = arith.truncf %180 : vector<16x8xf32> to vector<16x8xbf16>
    %182 = vector.extract_strided_slice %177 {offsets = [0, 0], sizes = [8, 32], strides = [1, 1]} : vector<32x32xbf16> to vector<8x32xbf16>
    %cst_53 = arith.constant dense<0.000000e+00> : vector<16x32xf32>
    %183 = tpu.matmul %181, %182, %cst_53 {dimension_numbers = #tpu.dot_dimension_numbers<[1], [0], [0], [1], [0, 0, 1, 1], [], []>} : vector<16x8xbf16>, vector<8x32xbf16>, vector<16x32xf32> -> vector<16x32xf32>
    %184 = arith.addf %178, %183 : vector<16x32xf32>
    %185 = vector.extract_strided_slice %176 {offsets = [2, 0, 0], sizes = [2, 8, 8], strides = [1, 1, 1]} : vector<8x8x8xf32> to vector<2x8x8xf32>
    %186 = vector.shape_cast %185 : vector<2x8x8xf32> to vector<16x8xf32>
    %187 = arith.truncf %186 : vector<16x8xf32> to vector<16x8xbf16>
    %188 = vector.extract_strided_slice %177 {offsets = [8, 0], sizes = [8, 32], strides = [1, 1]} : vector<32x32xbf16> to vector<8x32xbf16>
    %cst_54 = arith.constant dense<0.000000e+00> : vector<16x32xf32>
    %189 = tpu.matmul %187, %188, %cst_54 {dimension_numbers = #tpu.dot_dimension_numbers<[1], [0], [0], [1], [0, 0, 1, 1], [], []>} : vector<16x8xbf16>, vector<8x32xbf16>, vector<16x32xf32> -> vector<16x32xf32>
    %190 = arith.addf %184, %189 : vector<16x32xf32>
    %191 = vector.extract_strided_slice %176 {offsets = [4, 0, 0], sizes = [2, 8, 8], strides = [1, 1, 1]} : vector<8x8x8xf32> to vector<2x8x8xf32>
    %192 = vector.shape_cast %191 : vector<2x8x8xf32> to vector<16x8xf32>
    %193 = arith.truncf %192 : vector<16x8xf32> to vector<16x8xbf16>
    %194 = vector.extract_strided_slice %177 {offsets = [16, 0], sizes = [8, 32], strides = [1, 1]} : vector<32x32xbf16> to vector<8x32xbf16>
    %cst_55 = arith.constant dense<0.000000e+00> : vector<16x32xf32>
    %195 = tpu.matmul %193, %194, %cst_55 {dimension_numbers = #tpu.dot_dimension_numbers<[1], [0], [0], [1], [0, 0, 1, 1], [], []>} : vector<16x8xbf16>, vector<8x32xbf16>, vector<16x32xf32> -> vector<16x32xf32>
    %196 = arith.addf %190, %195 : vector<16x32xf32>
    %197 = vector.extract_strided_slice %176 {offsets = [6, 0, 0], sizes = [2, 8, 8], strides = [1, 1, 1]} : vector<8x8x8xf32> to vector<2x8x8xf32>
    %198 = vector.shape_cast %197 : vector<2x8x8xf32> to vector<16x8xf32>
    %199 = arith.truncf %198 : vector<16x8xf32> to vector<16x8xbf16>
    %200 = vector.extract_strided_slice %177 {offsets = [24, 0], sizes = [8, 32], strides = [1, 1]} : vector<32x32xbf16> to vector<8x32xbf16>
    %cst_56 = arith.constant dense<0.000000e+00> : vector<16x32xf32>
    %201 = tpu.matmul %199, %200, %cst_56 {dimension_numbers = #tpu.dot_dimension_numbers<[1], [0], [0], [1], [0, 0, 1, 1], [], []>} : vector<16x8xbf16>, vector<8x32xbf16>, vector<16x32xf32> -> vector<16x32xf32>
    %202 = arith.addf %196, %201 : vector<16x32xf32>
    %c0_57 = arith.constant 0 : index
    %c0_58 = arith.constant 0 : index
    %203 = vector.load %arg13[%c0_57, %c0_58] : memref<1x32xf32, #tpu.memory_space<vmem>>, vector<1x32xf32>
    %204 = vector.broadcast %203 : vector<1x32xf32> to vector<16x32xf32>
    %205 = arith.addf %202, %204 : vector<16x32xf32>
    %206 = vector.shape_cast %205 : vector<16x32xf32> to vector<2x8x32xf32>
    %207 = arith.addf %206, %117 : vector<2x8x32xf32>
    %cst_59 = arith.constant dense<0.000000e+00> : vector<2x8xf32>
    %208 = vector.multi_reduction <add>, %207, %cst_59 [2] : vector<2x8x32xf32> to vector<2x8xf32>
    %209 = vector.shape_cast %208 : vector<2x8xf32> to vector<2x8x1xf32>
    %cst_60 = arith.constant 3.200000e+01 : f32
    %210 = vector.broadcast %cst_60 : f32 to vector<2x8x1xf32>
    %211 = arith.divf %209, %210 : vector<2x8x1xf32>
    %212 = arith.mulf %207, %207 : vector<2x8x32xf32>
    %cst_61 = arith.constant dense<0.000000e+00> : vector<2x8xf32>
    %213 = vector.multi_reduction <add>, %212, %cst_61 [2] : vector<2x8x32xf32> to vector<2x8xf32>
    %214 = vector.shape_cast %213 : vector<2x8xf32> to vector<2x8x1xf32>
    %cst_62 = arith.constant 3.200000e+01 : f32
    %215 = vector.broadcast %cst_62 : f32 to vector<2x8x1xf32>
    %216 = arith.divf %214, %215 : vector<2x8x1xf32>
    %217 = arith.mulf %211, %211 : vector<2x8x1xf32>
    %218 = arith.subf %216, %217 : vector<2x8x1xf32>
    %219 = vector.broadcast %211 : vector<2x8x1xf32> to vector<2x8x32xf32>
    %220 = arith.subf %207, %219 : vector<2x8x32xf32>
    %cst_63 = arith.constant 9.99999974E-6 : f32
    %221 = vector.broadcast %cst_63 : f32 to vector<2x8x1xf32>
    %222 = arith.addf %218, %221 : vector<2x8x1xf32>
    %223 = math.rsqrt %222 : vector<2x8x1xf32>
    %224 = vector.broadcast %223 : vector<2x8x1xf32> to vector<2x8x32xf32>
    %225 = arith.mulf %220, %224 : vector<2x8x32xf32>
    %226 = vector.shape_cast %2 : vector<1x32xf32> to vector<1x1x32xf32>
    %227 = vector.broadcast %226 : vector<1x1x32xf32> to vector<2x8x32xf32>
    %228 = arith.mulf %225, %227 : vector<2x8x32xf32>
    %229 = vector.shape_cast %3 : vector<1x32xf32> to vector<1x1x32xf32>
    %230 = vector.broadcast %229 : vector<1x1x32xf32> to vector<2x8x32xf32>
    %231 = arith.addf %228, %230 : vector<2x8x32xf32>
    %232 = vector.shape_cast %231 : vector<2x8x32xf32> to vector<16x32xf32>
    %233 = arith.truncf %232 : vector<16x32xf32> to vector<16x32xbf16>
    %c0_64 = arith.constant 0 : index
    %c0_65 = arith.constant 0 : index
    %234 = vector.load %arg14[%c0_64, %c0_65] : memref<32x64xbf16, #tpu.memory_space<vmem>>, vector<32x64xbf16>
    %cst_66 = arith.constant dense<0.000000e+00> : vector<16x64xf32>
    %235 = tpu.matmul %233, %234, %cst_66 {dimension_numbers = #tpu.dot_dimension_numbers<[1], [0], [0], [1], [0, 0, 1, 1], [], []>} : vector<16x32xbf16>, vector<32x64xbf16>, vector<16x64xf32> -> vector<16x64xf32>
    %c0_67 = arith.constant 0 : index
    %c0_68 = arith.constant 0 : index
    %236 = vector.load %arg15[%c0_67, %c0_68] : memref<1x64xf32, #tpu.memory_space<vmem>>, vector<1x64xf32>
    %237 = vector.broadcast %236 : vector<1x64xf32> to vector<16x64xf32>
    %238 = arith.addf %235, %237 : vector<16x64xf32>
    %cst_69 = arith.constant 0.000000e+00 : f32
    %239 = vector.broadcast %cst_69 : f32 to vector<16x64xf32>
    %240 = arith.maximumf %238, %239 : vector<16x64xf32>
    %241 = arith.truncf %240 : vector<16x64xf32> to vector<16x64xbf16>
    %c0_70 = arith.constant 0 : index
    %c0_71 = arith.constant 0 : index
    %242 = vector.load %arg16[%c0_70, %c0_71] : memref<64x32xbf16, #tpu.memory_space<vmem>>, vector<64x32xbf16>
    %cst_72 = arith.constant dense<0.000000e+00> : vector<16x32xf32>
    %243 = tpu.matmul %241, %242, %cst_72 {dimension_numbers = #tpu.dot_dimension_numbers<[1], [0], [0], [1], [0, 0, 1, 1], [], []>} : vector<16x64xbf16>, vector<64x32xbf16>, vector<16x32xf32> -> vector<16x32xf32>
    %c0_73 = arith.constant 0 : index
    %c0_74 = arith.constant 0 : index
    %244 = vector.load %arg17[%c0_73, %c0_74] : memref<1x32xf32, #tpu.memory_space<vmem>>, vector<1x32xf32>
    %245 = vector.broadcast %244 : vector<1x32xf32> to vector<16x32xf32>
    %246 = arith.addf %243, %245 : vector<16x32xf32>
    %247 = vector.shape_cast %246 : vector<16x32xf32> to vector<2x8x32xf32>
    %248 = arith.addf %247, %231 : vector<2x8x32xf32>
    %cst_75 = arith.constant dense<0.000000e+00> : vector<2x8xf32>
    %249 = vector.multi_reduction <add>, %248, %cst_75 [2] : vector<2x8x32xf32> to vector<2x8xf32>
    %250 = vector.shape_cast %249 : vector<2x8xf32> to vector<2x8x1xf32>
    %cst_76 = arith.constant 3.200000e+01 : f32
    %251 = vector.broadcast %cst_76 : f32 to vector<2x8x1xf32>
    %252 = arith.divf %250, %251 : vector<2x8x1xf32>
    %253 = arith.mulf %248, %248 : vector<2x8x32xf32>
    %cst_77 = arith.constant dense<0.000000e+00> : vector<2x8xf32>
    %254 = vector.multi_reduction <add>, %253, %cst_77 [2] : vector<2x8x32xf32> to vector<2x8xf32>
    %255 = vector.shape_cast %254 : vector<2x8xf32> to vector<2x8x1xf32>
    %cst_78 = arith.constant 3.200000e+01 : f32
    %256 = vector.broadcast %cst_78 : f32 to vector<2x8x1xf32>
    %257 = arith.divf %255, %256 : vector<2x8x1xf32>
    %258 = arith.mulf %252, %252 : vector<2x8x1xf32>
    %259 = arith.subf %257, %258 : vector<2x8x1xf32>
    %260 = vector.broadcast %252 : vector<2x8x1xf32> to vector<2x8x32xf32>
    %261 = arith.subf %248, %260 : vector<2x8x32xf32>
    %cst_79 = arith.constant 9.99999974E-6 : f32
    %262 = vector.broadcast %cst_79 : f32 to vector<2x8x1xf32>
    %263 = arith.addf %259, %262 : vector<2x8x1xf32>
    %264 = math.rsqrt %263 : vector<2x8x1xf32>
    %265 = vector.broadcast %264 : vector<2x8x1xf32> to vector<2x8x32xf32>
    %266 = arith.mulf %261, %265 : vector<2x8x32xf32>
    %267 = vector.shape_cast %2 : vector<1x32xf32> to vector<1x1x32xf32>
    %268 = vector.broadcast %267 : vector<1x1x32xf32> to vector<2x8x32xf32>
    %269 = arith.mulf %266, %268 : vector<2x8x32xf32>
    %270 = vector.shape_cast %3 : vector<1x32xf32> to vector<1x1x32xf32>
    %271 = vector.broadcast %270 : vector<1x1x32xf32> to vector<2x8x32xf32>
    %272 = arith.addf %269, %271 : vector<2x8x32xf32>
    %c0_80 = arith.constant 0 : index
    %c0_81 = arith.constant 0 : index
    %c0_82 = arith.constant 0 : index
    %273 = vector.load %arg41[%c0_80, %c0_81, %c0_82] : memref<2x8x32xf32, #tpu.memory_space<vmem>>, vector<2x8x32xf32>
    tpu.vector_store %arg41[%c0_80, %c0_81, %c0_82], %272 {strides = array<i32>} : memref<2x8x32xf32, #tpu.memory_space<vmem>>, vector<2x8x32xf32>,
    %c0_83 = arith.constant 0 : index
    %c0_84 = arith.constant 0 : index
    %274 = vector.load %arg36[%c0_83, %c0_84] : memref<1x32xf32, #tpu.memory_space<vmem>>, vector<1x32xf32>
    %c0_85 = arith.constant 0 : index
    %c0_86 = arith.constant 0 : index
    %275 = vector.load %arg37[%c0_85, %c0_86] : memref<1x32xf32, #tpu.memory_space<vmem>>, vector<1x32xf32>
    %276 = vector.shape_cast %272 : vector<2x8x32xf32> to vector<16x32xf32>
    %277 = arith.truncf %276 : vector<16x32xf32> to vector<16x32xbf16>
    %c0_87 = arith.constant 0 : index
    %c0_88 = arith.constant 0 : index
    %278 = vector.load %arg20[%c0_87, %c0_88] : memref<32x32xbf16, #tpu.memory_space<vmem>>, vector<32x32xbf16>
    %cst_89 = arith.constant dense<0.000000e+00> : vector<16x32xf32>
    %279 = tpu.matmul %277, %278, %cst_89 {dimension_numbers = #tpu.dot_dimension_numbers<[1], [0], [0], [1], [0, 0, 1, 1], [], []>} : vector<16x32xbf16>, vector<32x32xbf16>, vector<16x32xf32> -> vector<16x32xf32>
    %c0_90 = arith.constant 0 : index
    %c0_91 = arith.constant 0 : index
    %280 = vector.load %arg21[%c0_90, %c0_91] : memref<1x32xf32, #tpu.memory_space<vmem>>, vector<1x32xf32>
    %281 = vector.broadcast %280 : vector<1x32xf32> to vector<16x32xf32>
    %282 = arith.addf %279, %281 : vector<16x32xf32>
    %283 = arith.truncf %282 : vector<16x32xf32> to vector<16x32xbf16>
    %284 = vector.shape_cast %272 : vector<2x8x32xf32> to vector<16x32xf32>
    %285 = arith.truncf %284 : vector<16x32xf32> to vector<16x32xbf16>
    %c0_92 = arith.constant 0 : index
    %c0_93 = arith.constant 0 : index
    %286 = vector.load %arg22[%c0_92, %c0_93] : memref<32x64xbf16, #tpu.memory_space<vmem>>, vector<32x64xbf16>
    %cst_94 = arith.constant dense<0.000000e+00> : vector<16x64xf32>
    %287 = tpu.matmul %285, %286, %cst_94 {dimension_numbers = #tpu.dot_dimension_numbers<[1], [0], [0], [1], [0, 0, 1, 1], [], []>} : vector<16x32xbf16>, vector<32x64xbf16>, vector<16x64xf32> -> vector<16x64xf32>
    %c0_95 = arith.constant 0 : index
    %c0_96 = arith.constant 0 : index
    %288 = vector.load %arg23[%c0_95, %c0_96] : memref<1x64xf32, #tpu.memory_space<vmem>>, vector<1x64xf32>
    %289 = vector.broadcast %288 : vector<1x64xf32> to vector<16x64xf32>
    %290 = arith.addf %287, %289 : vector<16x64xf32>
    %291 = arith.truncf %290 : vector<16x64xf32> to vector<16x64xbf16>
    %292 = vector.extract_strided_slice %283 {offsets = [0, 0], sizes = [16, 8], strides = [1, 1]} : vector<16x32xbf16> to vector<16x8xbf16>
    %293 = vector.extract_strided_slice %283 {offsets = [0, 8], sizes = [16, 8], strides = [1, 1]} : vector<16x32xbf16> to vector<16x8xbf16>
    %294 = vector.extract_strided_slice %283 {offsets = [0, 16], sizes = [16, 8], strides = [1, 1]} : vector<16x32xbf16> to vector<16x8xbf16>
    %295 = vector.extract_strided_slice %283 {offsets = [0, 24], sizes = [16, 8], strides = [1, 1]} : vector<16x32xbf16> to vector<16x8xbf16>
    %296 = vector.shape_cast %292 : vector<16x8xbf16> to vector<1x16x8xbf16>
    %297 = vector.shape_cast %293 : vector<16x8xbf16> to vector<1x16x8xbf16>
    %298 = vector.shape_cast %294 : vector<16x8xbf16> to vector<1x16x8xbf16>
    %299 = vector.shape_cast %295 : vector<16x8xbf16> to vector<1x16x8xbf16>
    %300 = tpu.concatenate %296, %297, %298, %299 in 0 : vector<1x16x8xbf16>, vector<1x16x8xbf16>, vector<1x16x8xbf16>, vector<1x16x8xbf16> -> vector<4x16x8xbf16>
    %301 = vector.shape_cast %300 : vector<4x16x8xbf16> to vector<8x8x8xbf16>
    %302 = vector.extract_strided_slice %291 {offsets = [0, 0], sizes = [16, 8], strides = [1, 1]} : vector<16x64xbf16> to vector<16x8xbf16>
    %303 = vector.extract_strided_slice %291 {offsets = [0, 8], sizes = [16, 8], strides = [1, 1]} : vector<16x64xbf16> to vector<16x8xbf16>
    %304 = vector.extract_strided_slice %291 {offsets = [0, 16], sizes = [16, 8], strides = [1, 1]} : vector<16x64xbf16> to vector<16x8xbf16>
    %305 = vector.extract_strided_slice %291 {offsets = [0, 24], sizes = [16, 8], strides = [1, 1]} : vector<16x64xbf16> to vector<16x8xbf16>
    %306 = vector.shape_cast %302 : vector<16x8xbf16> to vector<1x16x8xbf16>
    %307 = vector.shape_cast %303 : vector<16x8xbf16> to vector<1x16x8xbf16>
    %308 = vector.shape_cast %304 : vector<16x8xbf16> to vector<1x16x8xbf16>
    %309 = vector.shape_cast %305 : vector<16x8xbf16> to vector<1x16x8xbf16>
    %310 = tpu.concatenate %306, %307, %308, %309 in 0 : vector<1x16x8xbf16>, vector<1x16x8xbf16>, vector<1x16x8xbf16>, vector<1x16x8xbf16> -> vector<4x16x8xbf16>
    %311 = vector.shape_cast %310 : vector<4x16x8xbf16> to vector<8x8x8xbf16>
    %312 = vector.extract_strided_slice %291 {offsets = [0, 32], sizes = [16, 8], strides = [1, 1]} : vector<16x64xbf16> to vector<16x8xbf16>
    %313 = vector.extract_strided_slice %291 {offsets = [0, 40], sizes = [16, 8], strides = [1, 1]} : vector<16x64xbf16> to vector<16x8xbf16>
    %314 = vector.extract_strided_slice %291 {offsets = [0, 48], sizes = [16, 8], strides = [1, 1]} : vector<16x64xbf16> to vector<16x8xbf16>
    %315 = vector.extract_strided_slice %291 {offsets = [0, 56], sizes = [16, 8], strides = [1, 1]} : vector<16x64xbf16> to vector<16x8xbf16>
    %316 = vector.shape_cast %312 : vector<16x8xbf16> to vector<1x16x8xbf16>
    %317 = vector.shape_cast %313 : vector<16x8xbf16> to vector<1x16x8xbf16>
    %318 = vector.shape_cast %314 : vector<16x8xbf16> to vector<1x16x8xbf16>
    %319 = vector.shape_cast %315 : vector<16x8xbf16> to vector<1x16x8xbf16>
    %320 = tpu.concatenate %316, %317, %318, %319 in 0 : vector<1x16x8xbf16>, vector<1x16x8xbf16>, vector<1x16x8xbf16>, vector<1x16x8xbf16> -> vector<4x16x8xbf16>
    %321 = vector.shape_cast %320 : vector<4x16x8xbf16> to vector<8x8x8xbf16>
    "tpu.trace_start"() <{level = 10 : i32, message = "nqd,nkd->nqk"}> : () -> ()
    %cst_97 = arith.constant dense<0.000000e+00> : vector<8x8x8xf32>
    %322 = tpu.matmul %301, %311, %cst_97 {dimension_numbers = #tpu.dot_dimension_numbers<[2], [2], [1], [1], [0, 0, 0, 1, 1, 1], [0], [0]>} : vector<8x8x8xbf16>, vector<8x8x8xbf16>, vector<8x8x8xf32> -> vector<8x8x8xf32>
    "tpu.trace_stop"() : () -> ()
    %cst_98 = arith.constant dense<0xFF800000> : vector<8x8xf32>
    %323 = vector.multi_reduction <maximumf>, %322, %cst_98 [2] : vector<8x8x8xf32> to vector<8x8xf32>
    %324 = vector.shape_cast %323 : vector<8x8xf32> to vector<8x8x1xf32>
    %325 = vector.broadcast %324 : vector<8x8x1xf32> to vector<8x8x8xf32>
    %326 = arith.subf %322, %325 : vector<8x8x8xf32>
    %327 = math.exp %326 : vector<8x8x8xf32>
    %cst_99 = arith.constant dense<0.000000e+00> : vector<8x8xf32>
    %328 = vector.multi_reduction <add>, %327, %cst_99 [2] : vector<8x8x8xf32> to vector<8x8xf32>
    %329 = vector.shape_cast %328 : vector<8x8xf32> to vector<8x8x1xf32>
    %330 = tpu.reciprocal %329 {approx = true} : vector<8x8x1xf32> -> vector<8x8x1xf32>
    %331 = vector.broadcast %330 : vector<8x8x1xf32> to vector<8x8x8xf32>
    %332 = arith.mulf %327, %331 : vector<8x8x8xf32>
    %333 = arith.truncf %332 : vector<8x8x8xf32> to vector<8x8x8xbf16>
    "tpu.trace_start"() <{level = 10 : i32, message = "nqk,nkd->nqd"}> : () -> ()
    %cst_100 = arith.constant dense<0.000000e+00> : vector<8x8x8xf32>
    %334 = tpu.matmul %333, %321, %cst_100 {dimension_numbers = #tpu.dot_dimension_numbers<[2], [1], [1], [2], [0, 0, 0, 1, 1, 2], [0], [0]>} : vector<8x8x8xbf16>, vector<8x8x8xbf16>, vector<8x8x8xf32> -> vector<8x8x8xf32>
    "tpu.trace_stop"() : () -> ()
    %c0_101 = arith.constant 0 : index
    %c0_102 = arith.constant 0 : index
    %335 = vector.load %arg24[%c0_101, %c0_102] : memref<32x32xbf16, #tpu.memory_space<vmem>>, vector<32x32xbf16>
    %cst_103 = arith.constant 0.000000e+00 : f32
    %336 = vector.broadcast %cst_103 : f32 to vector<16x32xf32>
    %337 = vector.extract_strided_slice %334 {offsets = [0, 0, 0], sizes = [2, 8, 8], strides = [1, 1, 1]} : vector<8x8x8xf32> to vector<2x8x8xf32>
    %338 = vector.shape_cast %337 : vector<2x8x8xf32> to vector<16x8xf32>
    %339 = arith.truncf %338 : vector<16x8xf32> to vector<16x8xbf16>
    %340 = vector.extract_strided_slice %335 {offsets = [0, 0], sizes = [8, 32], strides = [1, 1]} : vector<32x32xbf16> to vector<8x32xbf16>
    %cst_104 = arith.constant dense<0.000000e+00> : vector<16x32xf32>
    %341 = tpu.matmul %339, %340, %cst_104 {dimension_numbers = #tpu.dot_dimension_numbers<[1], [0], [0], [1], [0, 0, 1, 1], [], []>} : vector<16x8xbf16>, vector<8x32xbf16>, vector<16x32xf32> -> vector<16x32xf32>
    %342 = arith.addf %336, %341 : vector<16x32xf32>
    %343 = vector.extract_strided_slice %334 {offsets = [2, 0, 0], sizes = [2, 8, 8], strides = [1, 1, 1]} : vector<8x8x8xf32> to vector<2x8x8xf32>
    %344 = vector.shape_cast %343 : vector<2x8x8xf32> to vector<16x8xf32>
    %345 = arith.truncf %344 : vector<16x8xf32> to vector<16x8xbf16>
    %346 = vector.extract_strided_slice %335 {offsets = [8, 0], sizes = [8, 32], strides = [1, 1]} : vector<32x32xbf16> to vector<8x32xbf16>
    %cst_105 = arith.constant dense<0.000000e+00> : vector<16x32xf32>
    %347 = tpu.matmul %345, %346, %cst_105 {dimension_numbers = #tpu.dot_dimension_numbers<[1], [0], [0], [1], [0, 0, 1, 1], [], []>} : vector<16x8xbf16>, vector<8x32xbf16>, vector<16x32xf32> -> vector<16x32xf32>
    %348 = arith.addf %342, %347 : vector<16x32xf32>
    %349 = vector.extract_strided_slice %334 {offsets = [4, 0, 0], sizes = [2, 8, 8], strides = [1, 1, 1]} : vector<8x8x8xf32> to vector<2x8x8xf32>
    %350 = vector.shape_cast %349 : vector<2x8x8xf32> to vector<16x8xf32>
    %351 = arith.truncf %350 : vector<16x8xf32> to vector<16x8xbf16>
    %352 = vector.extract_strided_slice %335 {offsets = [16, 0], sizes = [8, 32], strides = [1, 1]} : vector<32x32xbf16> to vector<8x32xbf16>
    %cst_106 = arith.constant dense<0.000000e+00> : vector<16x32xf32>
    %353 = tpu.matmul %351, %352, %cst_106 {dimension_numbers = #tpu.dot_dimension_numbers<[1], [0], [0], [1], [0, 0, 1, 1], [], []>} : vector<16x8xbf16>, vector<8x32xbf16>, vector<16x32xf32> -> vector<16x32xf32>
    %354 = arith.addf %348, %353 : vector<16x32xf32>
    %355 = vector.extract_strided_slice %334 {offsets = [6, 0, 0], sizes = [2, 8, 8], strides = [1, 1, 1]} : vector<8x8x8xf32> to vector<2x8x8xf32>
    %356 = vector.shape_cast %355 : vector<2x8x8xf32> to vector<16x8xf32>
    %357 = arith.truncf %356 : vector<16x8xf32> to vector<16x8xbf16>
    %358 = vector.extract_strided_slice %335 {offsets = [24, 0], sizes = [8, 32], strides = [1, 1]} : vector<32x32xbf16> to vector<8x32xbf16>
    %cst_107 = arith.constant dense<0.000000e+00> : vector<16x32xf32>
    %359 = tpu.matmul %357, %358, %cst_107 {dimension_numbers = #tpu.dot_dimension_numbers<[1], [0], [0], [1], [0, 0, 1, 1], [], []>} : vector<16x8xbf16>, vector<8x32xbf16>, vector<16x32xf32> -> vector<16x32xf32>
    %360 = arith.addf %354, %359 : vector<16x32xf32>
    %c0_108 = arith.constant 0 : index
    %c0_109 = arith.constant 0 : index
    %361 = vector.load %arg25[%c0_108, %c0_109] : memref<1x32xf32, #tpu.memory_space<vmem>>, vector<1x32xf32>
    %362 = vector.broadcast %361 : vector<1x32xf32> to vector<16x32xf32>
    %363 = arith.addf %360, %362 : vector<16x32xf32>
    %364 = vector.shape_cast %363 : vector<16x32xf32> to vector<2x8x32xf32>
    %365 = arith.addf %364, %272 : vector<2x8x32xf32>
    %cst_110 = arith.constant dense<0.000000e+00> : vector<2x8xf32>
    %366 = vector.multi_reduction <add>, %365, %cst_110 [2] : vector<2x8x32xf32> to vector<2x8xf32>
    %367 = vector.shape_cast %366 : vector<2x8xf32> to vector<2x8x1xf32>
    %cst_111 = arith.constant 3.200000e+01 : f32
    %368 = vector.broadcast %cst_111 : f32 to vector<2x8x1xf32>
    %369 = arith.divf %367, %368 : vector<2x8x1xf32>
    %370 = arith.mulf %365, %365 : vector<2x8x32xf32>
    %cst_112 = arith.constant dense<0.000000e+00> : vector<2x8xf32>
    %371 = vector.multi_reduction <add>, %370, %cst_112 [2] : vector<2x8x32xf32> to vector<2x8xf32>
    %372 = vector.shape_cast %371 : vector<2x8xf32> to vector<2x8x1xf32>
    %cst_113 = arith.constant 3.200000e+01 : f32
    %373 = vector.broadcast %cst_113 : f32 to vector<2x8x1xf32>
    %374 = arith.divf %372, %373 : vector<2x8x1xf32>
    %375 = arith.mulf %369, %369 : vector<2x8x1xf32>
    %376 = arith.subf %374, %375 : vector<2x8x1xf32>
    %377 = vector.broadcast %369 : vector<2x8x1xf32> to vector<2x8x32xf32>
    %378 = arith.subf %365, %377 : vector<2x8x32xf32>
    %cst_114 = arith.constant 9.99999974E-6 : f32
    %379 = vector.broadcast %cst_114 : f32 to vector<2x8x1xf32>
    %380 = arith.addf %376, %379 : vector<2x8x1xf32>
    %381 = math.rsqrt %380 : vector<2x8x1xf32>
    %382 = vector.broadcast %381 : vector<2x8x1xf32> to vector<2x8x32xf32>
    %383 = arith.mulf %378, %382 : vector<2x8x32xf32>
    %384 = vector.shape_cast %274 : vector<1x32xf32> to vector<1x1x32xf32>
    %385 = vector.broadcast %384 : vector<1x1x32xf32> to vector<2x8x32xf32>
    %386 = arith.mulf %383, %385 : vector<2x8x32xf32>
    %387 = vector.shape_cast %275 : vector<1x32xf32> to vector<1x1x32xf32>
    %388 = vector.broadcast %387 : vector<1x1x32xf32> to vector<2x8x32xf32>
    %389 = arith.addf %386, %388 : vector<2x8x32xf32>
    %390 = vector.shape_cast %389 : vector<2x8x32xf32> to vector<16x32xf32>
    %391 = arith.truncf %390 : vector<16x32xf32> to vector<16x32xbf16>
    %c0_115 = arith.constant 0 : index
    %c0_116 = arith.constant 0 : index
    %392 = vector.load %arg26[%c0_115, %c0_116] : memref<32x32xbf16, #tpu.memory_space<vmem>>, vector<32x32xbf16>
    %cst_117 = arith.constant dense<0.000000e+00> : vector<16x32xf32>
    %393 = tpu.matmul %391, %392, %cst_117 {dimension_numbers = #tpu.dot_dimension_numbers<[1], [0], [0], [1], [0, 0, 1, 1], [], []>} : vector<16x32xbf16>, vector<32x32xbf16>, vector<16x32xf32> -> vector<16x32xf32>
    %c0_118 = arith.constant 0 : index
    %c0_119 = arith.constant 0 : index
    %394 = vector.load %arg27[%c0_118, %c0_119] : memref<1x32xf32, #tpu.memory_space<vmem>>, vector<1x32xf32>
    %395 = vector.broadcast %394 : vector<1x32xf32> to vector<16x32xf32>
    %396 = arith.addf %393, %395 : vector<16x32xf32>
    %397 = arith.truncf %396 : vector<16x32xf32> to vector<16x32xbf16>
    %398 = vector.shape_cast %1 : vector<2x8x32xf32> to vector<16x32xf32>
    %399 = arith.truncf %398 : vector<16x32xf32> to vector<16x32xbf16>
    %c0_120 = arith.constant 0 : index
    %c0_121 = arith.constant 0 : index
    %400 = vector.load %arg28[%c0_120, %c0_121] : memref<32x64xbf16, #tpu.memory_space<vmem>>, vector<32x64xbf16>
    %cst_122 = arith.constant dense<0.000000e+00> : vector<16x64xf32>
    %401 = tpu.matmul %399, %400, %cst_122 {dimension_numbers = #tpu.dot_dimension_numbers<[1], [0], [0], [1], [0, 0, 1, 1], [], []>} : vector<16x32xbf16>, vector<32x64xbf16>, vector<16x64xf32> -> vector<16x64xf32>
    %c0_123 = arith.constant 0 : index
    %c0_124 = arith.constant 0 : index
    %402 = vector.load %arg29[%c0_123, %c0_124] : memref<1x64xf32, #tpu.memory_space<vmem>>, vector<1x64xf32>
    %403 = vector.broadcast %402 : vector<1x64xf32> to vector<16x64xf32>
    %404 = arith.addf %401, %403 : vector<16x64xf32>
    %405 = arith.truncf %404 : vector<16x64xf32> to vector<16x64xbf16>
    %406 = vector.extract_strided_slice %397 {offsets = [0, 0], sizes = [16, 8], strides = [1, 1]} : vector<16x32xbf16> to vector<16x8xbf16>
    %407 = vector.extract_strided_slice %397 {offsets = [0, 8], sizes = [16, 8], strides = [1, 1]} : vector<16x32xbf16> to vector<16x8xbf16>
    %408 = vector.extract_strided_slice %397 {offsets = [0, 16], sizes = [16, 8], strides = [1, 1]} : vector<16x32xbf16> to vector<16x8xbf16>
    %409 = vector.extract_strided_slice %397 {offsets = [0, 24], sizes = [16, 8], strides = [1, 1]} : vector<16x32xbf16> to vector<16x8xbf16>
    %410 = vector.shape_cast %406 : vector<16x8xbf16> to vector<1x16x8xbf16>
    %411 = vector.shape_cast %407 : vector<16x8xbf16> to vector<1x16x8xbf16>
    %412 = vector.shape_cast %408 : vector<16x8xbf16> to vector<1x16x8xbf16>
    %413 = vector.shape_cast %409 : vector<16x8xbf16> to vector<1x16x8xbf16>
    %414 = tpu.concatenate %410, %411, %412, %413 in 0 : vector<1x16x8xbf16>, vector<1x16x8xbf16>, vector<1x16x8xbf16>, vector<1x16x8xbf16> -> vector<4x16x8xbf16>
    %415 = vector.shape_cast %414 : vector<4x16x8xbf16> to vector<8x8x8xbf16>
    %416 = vector.extract_strided_slice %405 {offsets = [0, 0], sizes = [16, 8], strides = [1, 1]} : vector<16x64xbf16> to vector<16x8xbf16>
    %417 = vector.extract_strided_slice %405 {offsets = [0, 8], sizes = [16, 8], strides = [1, 1]} : vector<16x64xbf16> to vector<16x8xbf16>
    %418 = vector.extract_strided_slice %405 {offsets = [0, 16], sizes = [16, 8], strides = [1, 1]} : vector<16x64xbf16> to vector<16x8xbf16>
    %419 = vector.extract_strided_slice %405 {offsets = [0, 24], sizes = [16, 8], strides = [1, 1]} : vector<16x64xbf16> to vector<16x8xbf16>
    %420 = vector.shape_cast %416 : vector<16x8xbf16> to vector<1x16x8xbf16>
    %421 = vector.shape_cast %417 : vector<16x8xbf16> to vector<1x16x8xbf16>
    %422 = vector.shape_cast %418 : vector<16x8xbf16> to vector<1x16x8xbf16>
    %423 = vector.shape_cast %419 : vector<16x8xbf16> to vector<1x16x8xbf16>
    %424 = tpu.concatenate %420, %421, %422, %423 in 0 : vector<1x16x8xbf16>, vector<1x16x8xbf16>, vector<1x16x8xbf16>, vector<1x16x8xbf16> -> vector<4x16x8xbf16>
    %425 = vector.shape_cast %424 : vector<4x16x8xbf16> to vector<8x8x8xbf16>
    %426 = vector.extract_strided_slice %405 {offsets = [0, 32], sizes = [16, 8], strides = [1, 1]} : vector<16x64xbf16> to vector<16x8xbf16>
    %427 = vector.extract_strided_slice %405 {offsets = [0, 40], sizes = [16, 8], strides = [1, 1]} : vector<16x64xbf16> to vector<16x8xbf16>
    %428 = vector.extract_strided_slice %405 {offsets = [0, 48], sizes = [16, 8], strides = [1, 1]} : vector<16x64xbf16> to vector<16x8xbf16>
    %429 = vector.extract_strided_slice %405 {offsets = [0, 56], sizes = [16, 8], strides = [1, 1]} : vector<16x64xbf16> to vector<16x8xbf16>
    %430 = vector.shape_cast %426 : vector<16x8xbf16> to vector<1x16x8xbf16>
    %431 = vector.shape_cast %427 : vector<16x8xbf16> to vector<1x16x8xbf16>
    %432 = vector.shape_cast %428 : vector<16x8xbf16> to vector<1x16x8xbf16>
    %433 = vector.shape_cast %429 : vector<16x8xbf16> to vector<1x16x8xbf16>
    %434 = tpu.concatenate %430, %431, %432, %433 in 0 : vector<1x16x8xbf16>, vector<1x16x8xbf16>, vector<1x16x8xbf16>, vector<1x16x8xbf16> -> vector<4x16x8xbf16>
    %435 = vector.shape_cast %434 : vector<4x16x8xbf16> to vector<8x8x8xbf16>
    "tpu.trace_start"() <{level = 10 : i32, message = "nqd,nkd->nqk"}> : () -> ()
    %cst_125 = arith.constant dense<0.000000e+00> : vector<8x8x8xf32>
    %436 = tpu.matmul %415, %425, %cst_125 {dimension_numbers = #tpu.dot_dimension_numbers<[2], [2], [1], [1], [0, 0, 0, 1, 1, 1], [0], [0]>} : vector<8x8x8xbf16>, vector<8x8x8xbf16>, vector<8x8x8xf32> -> vector<8x8x8xf32>
    "tpu.trace_stop"() : () -> ()
    %cst_126 = arith.constant dense<0xFF800000> : vector<8x8xf32>
    %437 = vector.multi_reduction <maximumf>, %436, %cst_126 [2] : vector<8x8x8xf32> to vector<8x8xf32>
    %438 = vector.shape_cast %437 : vector<8x8xf32> to vector<8x8x1xf32>
    %439 = vector.broadcast %438 : vector<8x8x1xf32> to vector<8x8x8xf32>
    %440 = arith.subf %436, %439 : vector<8x8x8xf32>
    %441 = math.exp %440 : vector<8x8x8xf32>
    %cst_127 = arith.constant dense<0.000000e+00> : vector<8x8xf32>
    %442 = vector.multi_reduction <add>, %441, %cst_127 [2] : vector<8x8x8xf32> to vector<8x8xf32>
    %443 = vector.shape_cast %442 : vector<8x8xf32> to vector<8x8x1xf32>
    %444 = tpu.reciprocal %443 {approx = true} : vector<8x8x1xf32> -> vector<8x8x1xf32>
    %445 = vector.broadcast %444 : vector<8x8x1xf32> to vector<8x8x8xf32>
    %446 = arith.mulf %441, %445 : vector<8x8x8xf32>
    %447 = arith.truncf %446 : vector<8x8x8xf32> to vector<8x8x8xbf16>
    "tpu.trace_start"() <{level = 10 : i32, message = "nqk,nkd->nqd"}> : () -> ()
    %cst_128 = arith.constant dense<0.000000e+00> : vector<8x8x8xf32>
    %448 = tpu.matmul %447, %435, %cst_128 {dimension_numbers = #tpu.dot_dimension_numbers<[2], [1], [1], [2], [0, 0, 0, 1, 1, 2], [0], [0]>} : vector<8x8x8xbf16>, vector<8x8x8xbf16>, vector<8x8x8xf32> -> vector<8x8x8xf32>
    "tpu.trace_stop"() : () -> ()
    %c0_129 = arith.constant 0 : index
    %c0_130 = arith.constant 0 : index
    %449 = vector.load %arg30[%c0_129, %c0_130] : memref<32x32xbf16, #tpu.memory_space<vmem>>, vector<32x32xbf16>
    %cst_131 = arith.constant 0.000000e+00 : f32
    %450 = vector.broadcast %cst_131 : f32 to vector<16x32xf32>
    %451 = vector.extract_strided_slice %448 {offsets = [0, 0, 0], sizes = [2, 8, 8], strides = [1, 1, 1]} : vector<8x8x8xf32> to vector<2x8x8xf32>
    %452 = vector.shape_cast %451 : vector<2x8x8xf32> to vector<16x8xf32>
    %453 = arith.truncf %452 : vector<16x8xf32> to vector<16x8xbf16>
    %454 = vector.extract_strided_slice %449 {offsets = [0, 0], sizes = [8, 32], strides = [1, 1]} : vector<32x32xbf16> to vector<8x32xbf16>
    %cst_132 = arith.constant dense<0.000000e+00> : vector<16x32xf32>
    %455 = tpu.matmul %453, %454, %cst_132 {dimension_numbers = #tpu.dot_dimension_numbers<[1], [0], [0], [1], [0, 0, 1, 1], [], []>} : vector<16x8xbf16>, vector<8x32xbf16>, vector<16x32xf32> -> vector<16x32xf32>
    %456 = arith.addf %450, %455 : vector<16x32xf32>
    %457 = vector.extract_strided_slice %448 {offsets = [2, 0, 0], sizes = [2, 8, 8], strides = [1, 1, 1]} : vector<8x8x8xf32> to vector<2x8x8xf32>
    %458 = vector.shape_cast %457 : vector<2x8x8xf32> to vector<16x8xf32>
    %459 = arith.truncf %458 : vector<16x8xf32> to vector<16x8xbf16>
    %460 = vector.extract_strided_slice %449 {offsets = [8, 0], sizes = [8, 32], strides = [1, 1]} : vector<32x32xbf16> to vector<8x32xbf16>
    %cst_133 = arith.constant dense<0.000000e+00> : vector<16x32xf32>
    %461 = tpu.matmul %459, %460, %cst_133 {dimension_numbers = #tpu.dot_dimension_numbers<[1], [0], [0], [1], [0, 0, 1, 1], [], []>} : vector<16x8xbf16>, vector<8x32xbf16>, vector<16x32xf32> -> vector<16x32xf32>
    %462 = arith.addf %456, %461 : vector<16x32xf32>
    %463 = vector.extract_strided_slice %448 {offsets = [4, 0, 0], sizes = [2, 8, 8], strides = [1, 1, 1]} : vector<8x8x8xf32> to vector<2x8x8xf32>
    %464 = vector.shape_cast %463 : vector<2x8x8xf32> to vector<16x8xf32>
    %465 = arith.truncf %464 : vector<16x8xf32> to vector<16x8xbf16>
    %466 = vector.extract_strided_slice %449 {offsets = [16, 0], sizes = [8, 32], strides = [1, 1]} : vector<32x32xbf16> to vector<8x32xbf16>
    %cst_134 = arith.constant dense<0.000000e+00> : vector<16x32xf32>
    %467 = tpu.matmul %465, %466, %cst_134 {dimension_numbers = #tpu.dot_dimension_numbers<[1], [0], [0], [1], [0, 0, 1, 1], [], []>} : vector<16x8xbf16>, vector<8x32xbf16>, vector<16x32xf32> -> vector<16x32xf32>
    %468 = arith.addf %462, %467 : vector<16x32xf32>
    %469 = vector.extract_strided_slice %448 {offsets = [6, 0, 0], sizes = [2, 8, 8], strides = [1, 1, 1]} : vector<8x8x8xf32> to vector<2x8x8xf32>
    %470 = vector.shape_cast %469 : vector<2x8x8xf32> to vector<16x8xf32>
    %471 = arith.truncf %470 : vector<16x8xf32> to vector<16x8xbf16>
    %472 = vector.extract_strided_slice %449 {offsets = [24, 0], sizes = [8, 32], strides = [1, 1]} : vector<32x32xbf16> to vector<8x32xbf16>
    %cst_135 = arith.constant dense<0.000000e+00> : vector<16x32xf32>
    %473 = tpu.matmul %471, %472, %cst_135 {dimension_numbers = #tpu.dot_dimension_numbers<[1], [0], [0], [1], [0, 0, 1, 1], [], []>} : vector<16x8xbf16>, vector<8x32xbf16>, vector<16x32xf32> -> vector<16x32xf32>
    %474 = arith.addf %468, %473 : vector<16x32xf32>
    %c0_136 = arith.constant 0 : index
    %c0_137 = arith.constant 0 : index
    %475 = vector.load %arg31[%c0_136, %c0_137] : memref<1x32xf32, #tpu.memory_space<vmem>>, vector<1x32xf32>
    %476 = vector.broadcast %475 : vector<1x32xf32> to vector<16x32xf32>
    %477 = arith.addf %474, %476 : vector<16x32xf32>
    %478 = vector.shape_cast %477 : vector<16x32xf32> to vector<2x8x32xf32>
    %479 = arith.addf %478, %389 : vector<2x8x32xf32>
    %cst_138 = arith.constant dense<0.000000e+00> : vector<2x8xf32>
    %480 = vector.multi_reduction <add>, %479, %cst_138 [2] : vector<2x8x32xf32> to vector<2x8xf32>
    %481 = vector.shape_cast %480 : vector<2x8xf32> to vector<2x8x1xf32>
    %cst_139 = arith.constant 3.200000e+01 : f32
    %482 = vector.broadcast %cst_139 : f32 to vector<2x8x1xf32>
    %483 = arith.divf %481, %482 : vector<2x8x1xf32>
    %484 = arith.mulf %479, %479 : vector<2x8x32xf32>
    %cst_140 = arith.constant dense<0.000000e+00> : vector<2x8xf32>
    %485 = vector.multi_reduction <add>, %484, %cst_140 [2] : vector<2x8x32xf32> to vector<2x8xf32>
    %486 = vector.shape_cast %485 : vector<2x8xf32> to vector<2x8x1xf32>
    %cst_141 = arith.constant 3.200000e+01 : f32
    %487 = vector.broadcast %cst_141 : f32 to vector<2x8x1xf32>
    %488 = arith.divf %486, %487 : vector<2x8x1xf32>
    %489 = arith.mulf %483, %483 : vector<2x8x1xf32>
    %490 = arith.subf %488, %489 : vector<2x8x1xf32>
    %491 = vector.broadcast %483 : vector<2x8x1xf32> to vector<2x8x32xf32>
    %492 = arith.subf %479, %491 : vector<2x8x32xf32>
    %cst_142 = arith.constant 9.99999974E-6 : f32
    %493 = vector.broadcast %cst_142 : f32 to vector<2x8x1xf32>
    %494 = arith.addf %490, %493 : vector<2x8x1xf32>
    %495 = math.rsqrt %494 : vector<2x8x1xf32>
    %496 = vector.broadcast %495 : vector<2x8x1xf32> to vector<2x8x32xf32>
    %497 = arith.mulf %492, %496 : vector<2x8x32xf32>
    %498 = vector.shape_cast %274 : vector<1x32xf32> to vector<1x1x32xf32>
    %499 = vector.broadcast %498 : vector<1x1x32xf32> to vector<2x8x32xf32>
    %500 = arith.mulf %497, %499 : vector<2x8x32xf32>
    %501 = vector.shape_cast %275 : vector<1x32xf32> to vector<1x1x32xf32>
    %502 = vector.broadcast %501 : vector<1x1x32xf32> to vector<2x8x32xf32>
    %503 = arith.addf %500, %502 : vector<2x8x32xf32>
    %504 = vector.shape_cast %503 : vector<2x8x32xf32> to vector<16x32xf32>
    %505 = arith.truncf %504 : vector<16x32xf32> to vector<16x32xbf16>
    %c0_143 = arith.constant 0 : index
    %c0_144 = arith.constant 0 : index
    %506 = vector.load %arg32[%c0_143, %c0_144] : memref<32x64xbf16, #tpu.memory_space<vmem>>, vector<32x64xbf16>
    %cst_145 = arith.constant dense<0.000000e+00> : vector<16x64xf32>
    %507 = tpu.matmul %505, %506, %cst_145 {dimension_numbers = #tpu.dot_dimension_numbers<[1], [0], [0], [1], [0, 0, 1, 1], [], []>} : vector<16x32xbf16>, vector<32x64xbf16>, vector<16x64xf32> -> vector<16x64xf32>
    %c0_146 = arith.constant 0 : index
    %c0_147 = arith.constant 0 : index
    %508 = vector.load %arg33[%c0_146, %c0_147] : memref<1x64xf32, #tpu.memory_space<vmem>>, vector<1x64xf32>
    %509 = vector.broadcast %508 : vector<1x64xf32> to vector<16x64xf32>
    %510 = arith.addf %507, %509 : vector<16x64xf32>
    %cst_148 = arith.constant 0.000000e+00 : f32
    %511 = vector.broadcast %cst_148 : f32 to vector<16x64xf32>
    %512 = arith.maximumf %510, %511 : vector<16x64xf32>
    %513 = arith.truncf %512 : vector<16x64xf32> to vector<16x64xbf16>
    %c0_149 = arith.constant 0 : index
    %c0_150 = arith.constant 0 : index
    %514 = vector.load %arg34[%c0_149, %c0_150] : memref<64x32xbf16, #tpu.memory_space<vmem>>, vector<64x32xbf16>
    %cst_151 = arith.constant dense<0.000000e+00> : vector<16x32xf32>
    %515 = tpu.matmul %513, %514, %cst_151 {dimension_numbers = #tpu.dot_dimension_numbers<[1], [0], [0], [1], [0, 0, 1, 1], [], []>} : vector<16x64xbf16>, vector<64x32xbf16>, vector<16x32xf32> -> vector<16x32xf32>
    %c0_152 = arith.constant 0 : index
    %c0_153 = arith.constant 0 : index
    %516 = vector.load %arg35[%c0_152, %c0_153] : memref<1x32xf32, #tpu.memory_space<vmem>>, vector<1x32xf32>
    %517 = vector.broadcast %516 : vector<1x32xf32> to vector<16x32xf32>
    %518 = arith.addf %515, %517 : vector<16x32xf32>
    %519 = vector.shape_cast %518 : vector<16x32xf32> to vector<2x8x32xf32>
    %520 = arith.addf %519, %503 : vector<2x8x32xf32>
    %cst_154 = arith.constant dense<0.000000e+00> : vector<2x8xf32>
    %521 = vector.multi_reduction <add>, %520, %cst_154 [2] : vector<2x8x32xf32> to vector<2x8xf32>
    %522 = vector.shape_cast %521 : vector<2x8xf32> to vector<2x8x1xf32>
    %cst_155 = arith.constant 3.200000e+01 : f32
    %523 = vector.broadcast %cst_155 : f32 to vector<2x8x1xf32>
    %524 = arith.divf %522, %523 : vector<2x8x1xf32>
    %525 = arith.mulf %520, %520 : vector<2x8x32xf32>
    %cst_156 = arith.constant dense<0.000000e+00> : vector<2x8xf32>
    %526 = vector.multi_reduction <add>, %525, %cst_156 [2] : vector<2x8x32xf32> to vector<2x8xf32>
    %527 = vector.shape_cast %526 : vector<2x8xf32> to vector<2x8x1xf32>
    %cst_157 = arith.constant 3.200000e+01 : f32
    %528 = vector.broadcast %cst_157 : f32 to vector<2x8x1xf32>
    %529 = arith.divf %527, %528 : vector<2x8x1xf32>
    %530 = arith.mulf %524, %524 : vector<2x8x1xf32>
    %531 = arith.subf %529, %530 : vector<2x8x1xf32>
    %532 = vector.broadcast %524 : vector<2x8x1xf32> to vector<2x8x32xf32>
    %533 = arith.subf %520, %532 : vector<2x8x32xf32>
    %cst_158 = arith.constant 9.99999974E-6 : f32
    %534 = vector.broadcast %cst_158 : f32 to vector<2x8x1xf32>
    %535 = arith.addf %531, %534 : vector<2x8x1xf32>
    %536 = math.rsqrt %535 : vector<2x8x1xf32>
    %537 = vector.broadcast %536 : vector<2x8x1xf32> to vector<2x8x32xf32>
    %538 = arith.mulf %533, %537 : vector<2x8x32xf32>
    %539 = vector.shape_cast %274 : vector<1x32xf32> to vector<1x1x32xf32>
    %540 = vector.broadcast %539 : vector<1x1x32xf32> to vector<2x8x32xf32>
    %541 = arith.mulf %538, %540 : vector<2x8x32xf32>
    %542 = vector.shape_cast %275 : vector<1x32xf32> to vector<1x1x32xf32>
    %543 = vector.broadcast %542 : vector<1x1x32xf32> to vector<2x8x32xf32>
    %544 = arith.addf %541, %543 : vector<2x8x32xf32>
    %545 = vector.shape_cast %544 : vector<2x8x32xf32> to vector<16x32xf32>
    %546 = arith.truncf %545 : vector<16x32xf32> to vector<16x32xbf16>
    %c0_159 = arith.constant 0 : index
    %c0_160 = arith.constant 0 : index
    %547 = vector.load %arg38[%c0_159, %c0_160] : memref<32x128xbf16, #tpu.memory_space<vmem>>, vector<32x128xbf16>
    %cst_161 = arith.constant dense<0.000000e+00> : vector<16x128xf32>
    %548 = tpu.matmul %546, %547, %cst_161 {dimension_numbers = #tpu.dot_dimension_numbers<[1], [0], [0], [1], [0, 0, 1, 1], [], []>} : vector<16x32xbf16>, vector<32x128xbf16>, vector<16x128xf32> -> vector<16x128xf32>
    %c0_162 = arith.constant 0 : index
    %c0_163 = arith.constant 0 : index
    %549 = vector.load %arg39[%c0_162, %c0_163] : memref<1x128xf32, #tpu.memory_space<vmem>>, vector<1x128xf32>
    %550 = vector.broadcast %549 : vector<1x128xf32> to vector<16x128xf32>
    %551 = arith.addf %548, %550 : vector<16x128xf32>
    %c0_164 = arith.constant 0 : index
    %c0_165 = arith.constant 0 : index
    %552 = vector.load %arg40[%c0_164, %c0_165] : memref<16x128xf32, #tpu.memory_space<vmem>>, vector<16x128xf32>
    tpu.vector_store %arg40[%c0_164, %c0_165], %551 {strides = array<i32>} : memref<16x128xf32, #tpu.memory_space<vmem>>, vector<16x128xf32>,
    return
  }
}

</mosaic_0001>

<llo_original>
// kernel: tpu_custom_call.1
$region0: #{tpu_custom_call.1}
  #allocation0 [shape = 'u32[]', space=smem, size = 0x4, offset = 0x4, fixed_abs, tag = 'smem constant byte address 0x4 - core index']
  #allocation1 [shape = 'u32[72,128]{1,0:T(1,128)}', space=vmem, size = 0x9000, scoped, tag = 'internal scratch']
  %s0 = inlined_call_operand.smem [shape: u32[42], index: -1, kind: input, shape index: {}]
  %s1 = sld [smem:[%s0]]
  %s2 = scalar_lea.smem %s0, 1
  %s3 = sld [smem:[%s2]]
  %s4 = scalar_lea.smem %s0, 2
  %s5 = sld [smem:[%s4]]
  %s6 = scalar_lea.smem %s0, 3
  %s7 = sld [smem:[%s6]]
  %s8 = scalar_lea.smem %s0, 4
  %s9 = sld [smem:[%s8]]
  %s10 = scalar_lea.smem %s0, 5
  %s11 = sld [smem:[%s10]]
  %s12 = scalar_lea.smem %s0, 6
  %s13 = sld [smem:[%s12]]
  %s14 = scalar_lea.smem %s0, 7
  %s15 = sld [smem:[%s14]]
  %s16 = scalar_lea.smem %s0, 8
  %s17 = sld [smem:[%s16]]
  %s18 = scalar_lea.smem %s0, 9
  %s19 = sld [smem:[%s18]]
  %s20 = scalar_lea.smem %s0, 10
  %s21 = sld [smem:[%s20]]
  %s22 = scalar_lea.smem %s0, 11
  %s23 = sld [smem:[%s22]]
  %s24 = scalar_lea.smem %s0, 12
  %s25 = sld [smem:[%s24]]
  %s26 = scalar_lea.smem %s0, 13
  %s27 = sld [smem:[%s26]]
  %s28 = scalar_lea.smem %s0, 14
  %s29 = sld [smem:[%s28]]
  %s30 = scalar_lea.smem %s0, 15
  %s31 = sld [smem:[%s30]]
  %s32 = scalar_lea.smem %s0, 16
  %s33 = sld [smem:[%s32]]
  %s34 = scalar_lea.smem %s0, 17
  %s35 = sld [smem:[%s34]]
  %s36 = scalar_lea.smem %s0, 18
  %s37 = sld [smem:[%s36]]
  %s38 = scalar_lea.smem %s0, 19
  %s39 = sld [smem:[%s38]]
  %s40 = scalar_lea.smem %s0, 20
  %s41 = sld [smem:[%s40]]
  %s42 = scalar_lea.smem %s0, 21
  %s43 = sld [smem:[%s42]]
  %s44 = scalar_lea.smem %s0, 22
  %s45 = sld [smem:[%s44]]
  %s46 = scalar_lea.smem %s0, 23
  %s47 = sld [smem:[%s46]]
  %s48 = scalar_lea.smem %s0, 24
  %s49 = sld [smem:[%s48]]
  %s50 = scalar_lea.smem %s0, 25
  %s51 = sld [smem:[%s50]]
  %s52 = scalar_lea.smem %s0, 26
  %s53 = sld [smem:[%s52]]
  %s54 = scalar_lea.smem %s0, 27
  %s55 = sld [smem:[%s54]]
  %s56 = scalar_lea.smem %s0, 28
  %s57 = sld [smem:[%s56]]
  %s58 = scalar_lea.smem %s0, 29
  %s59 = sld [smem:[%s58]]
  %s60 = scalar_lea.smem %s0, 30
  %s61 = sld [smem:[%s60]]
  %s62 = scalar_lea.smem %s0, 31
  %s63 = sld [smem:[%s62]]
  %s64 = scalar_lea.smem %s0, 32
  %s65 = sld [smem:[%s64]]
  %s66 = scalar_lea.smem %s0, 33
  %s67 = sld [smem:[%s66]]
  %s68 = scalar_lea.smem %s0, 34
  %s69 = sld [smem:[%s68]]
  %s70 = scalar_lea.smem %s0, 35
  %s71 = sld [smem:[%s70]]
  %s72 = scalar_lea.smem %s0, 36
  %s73 = sld [smem:[%s72]]
  %s74 = scalar_lea.smem %s0, 37
  %s75 = sld [smem:[%s74]]
  %s76 = scalar_lea.smem %s0, 38
  %s77 = sld [smem:[%s76]]
  %s78 = scalar_lea.smem %s0, 39
  %s79 = sld [smem:[%s78]]
  %s80 = scalar_lea.smem %s0, 40
  %s81 = sld [smem:[%s80]]
  %s82 = scalar_lea.smem %s0, 41
  %s83 = sld [smem:[%s82]]
  %84 = xla_tuple %s81, %s83
  %s85 = sld [smem:[#allocation0]]
  $region286: #{tpu_custom_call.1} parent=0
    _
  %s87 = ssub.s32 1, %s85
  %s88 = scalar_select 0, %s87, %s85
  $region1: #{tpu_custom_call.1} parent=0
    #allocation2 [shape = 'u8[512]{0}', space=vmem, size = 0x400, scoped, tag = 'input window, operand 3, single buffered']
    #allocation3 [shape = 's32[1]{0}', space=sflag, size = 0x4, scoped, tag = 'scoped memory for tpu_custom_call.1']
    #allocation4 [shape = 's32[1]{0}', space=sflag, size = 0x4, scoped, tag = 'scoped memory for tpu_custom_call.1']
    #allocation5 [shape = 'u8[512]{0}', space=vmem, size = 0x400, scoped, tag = 'input window, operand 5, single buffered']
    #allocation6 [shape = 's32[1]{0}', space=sflag, size = 0x4, scoped, tag = 'scoped memory for tpu_custom_call.1']
    #allocation7 [shape = 'u8[512]{0}', space=vmem, size = 0x400, scoped, tag = 'input window, operand 7, single buffered']
    #allocation8 [shape = 'u8[512]{0}', space=vmem, size = 0x400, scoped, tag = 'input window, operand 9, single buffered']
    #allocation9 [shape = 's32[1]{0}', space=sflag, size = 0x4, scoped, tag = 'scoped memory for tpu_custom_call.1']
    #allocation10 [shape = 'u8[8192]{0}', space=vmem, size = 0x2000, scoped, tag = 'input window, operand 10, single buffered']
    #allocation11 [shape = 'u8[512]{0}', space=vmem, size = 0x400, scoped, tag = 'input window, operand 11, single buffered']
    #allocation12 [shape = 's32[1]{0}', space=sflag, size = 0x4, scoped, tag = 'scoped memory for tpu_custom_call.1']
    #allocation13 [shape = 'u8[8192]{0}', space=vmem, size = 0x2000, scoped, tag = 'input window, operand 12, single buffered']
    #allocation14 [shape = 'u8[512]{0}', space=vmem, size = 0x400, scoped, tag = 'input window, operand 13, single buffered']
    #allocation15 [shape = 's32[1]{0}', space=sflag, size = 0x4, scoped, tag = 'scoped memory for tpu_custom_call.1']
    #allocation16 [shape = 'u8[8192]{0}', space=vmem, size = 0x2000, scoped, tag = 'input window, operand 14, single buffered']
    #allocation17 [shape = 'u8[512]{0}', space=vmem, size = 0x400, scoped, tag = 'input window, operand 15, single buffered']
    #allocation18 [shape = 's32[1]{0}', space=sflag, size = 0x4, scoped, tag = 'scoped memory for tpu_custom_call.1']
    #allocation19 [shape = 'u8[512]{0}', space=vmem, size = 0x400, scoped, tag = 'input window, operand 17, single buffered']
    #allocation20 [shape = 'u8[512]{0}', space=vmem, size = 0x400, scoped, tag = 'input window, operand 18, single buffered']
    #allocation21 [shape = 's32[1]{0}', space=sflag, size = 0x4, scoped, tag = 'scoped memory for tpu_custom_call.1']
    #allocation22 [shape = 'u8[512]{0}', space=vmem, size = 0x400, scoped, tag = 'input window, operand 19, single buffered']
    #allocation23 [shape = 'u8[512]{0}', space=vmem, size = 0x400, scoped, tag = 'input window, operand 21, single buffered']
    #allocation24 [shape = 's32[1]{0}', space=sflag, size = 0x4, scoped, tag = 'scoped memory for tpu_custom_call.1']
    #allocation25 [shape = 'u8[8192]{0}', space=vmem, size = 0x2000, scoped, tag = 'input window, operand 22, single buffered']
    #allocation26 [shape = 'u8[512]{0}', space=vmem, size = 0x400, scoped, tag = 'input window, operand 23, single buffered']
    #allocation27 [shape = 's32[1]{0}', space=sflag, size = 0x4, scoped, tag = 'scoped memory for tpu_custom_call.1']
    #allocation28 [shape = 'u8[8192]{0}', space=vmem, size = 0x2000, scoped, tag = 'input window, operand 24, single buffered']
    #allocation29 [shape = 'u8[512]{0}', space=vmem, size = 0x400, scoped, tag = 'input window, operand 25, single buffered']
    #allocation30 [shape = 's32[1]{0}', space=sflag, size = 0x4, scoped, tag = 'scoped memory for tpu_custom_call.1']
    #allocation31 [shape = 'u8[8192]{0}', space=vmem, size = 0x2000, scoped, tag = 'input window, operand 26, single buffered']
    #allocation32 [shape = 'u8[512]{0}', space=vmem, size = 0x400, scoped, tag = 'input window, operand 27, single buffered']
    #allocation33 [shape = 's32[1]{0}', space=sflag, size = 0x4, scoped, tag = 'scoped memory for tpu_custom_call.1']
    #allocation34 [shape = 'u8[8192]{0}', space=vmem, size = 0x2000, scoped, tag = 'input window, operand 28, single buffered']
    #allocation35 [shape = 'u8[512]{0}', space=vmem, size = 0x400, scoped, tag = 'input window, operand 29, single buffered']
    #allocation36 [shape = 's32[1]{0}', space=sflag, size = 0x4, scoped, tag = 'scoped memory for tpu_custom_call.1']
    #allocation37 [shape = 'u8[8192]{0}', space=vmem, size = 0x2000, scoped, tag = 'input window, operand 30, single buffered']
    #allocation38 [shape = 'u8[512]{0}', space=vmem, size = 0x400, scoped, tag = 'input window, operand 31, single buffered']
    #allocation39 [shape = 's32[1]{0}', space=sflag, size = 0x4, scoped, tag = 'scoped memory for tpu_custom_call.1']
    #allocation40 [shape = 'u8[8192]{0}', space=vmem, size = 0x2000, scoped, tag = 'input window, operand 32, single buffered']
    #allocation41 [shape = 'u8[512]{0}', space=vmem, size = 0x400, scoped, tag = 'input window, operand 33, single buffered']
    #allocation42 [shape = 's32[1]{0}', space=sflag, size = 0x4, scoped, tag = 'scoped memory for tpu_custom_call.1']
    #allocation43 [shape = 'u8[512]{0}', space=vmem, size = 0x400, scoped, tag = 'input window, operand 35, single buffered']
    #allocation44 [shape = 'u8[8192]{0}', space=vmem, size = 0x2000, scoped, tag = 'output window, operand 0, single buffered']
    #allocation45 [shape = 'u8[8192]{0}', space=vmem, size = 0x2000, scoped, tag = 'output window, operand 1, single buffered']
    #allocation46 [shape = 's32[1]{0}', space=sflag, size = 0x4, scoped, tag = 'scoped memory for tpu_custom_call.1']
    %89 = vsyncpa [#allocation3], 0
    %90 = vsyncpa [#allocation6], 0
    %91 = vsyncpa [#allocation9], 0
    %92 = vsyncpa [#allocation12], 0
    %93 = vsyncpa [#allocation15], 0
    %94 = vsyncpa [#allocation18], 0
    %95 = vsyncpa [#allocation21], 0
    %96 = vsyncpa [#allocation24], 0
    %97 = vsyncpa [#allocation27], 0
    %98 = vsyncpa [#allocation30], 0
    %99 = vsyncpa [#allocation33], 0
    %100 = vsyncpa [#allocation36], 0
    %101 = vsyncpa [#allocation39], 0
    %102 = vsyncpa [#allocation42], 0
    %103 = vsyncpa [#allocation4], 0
    %104 = vsyncpa [#allocation46], 0
    // Predicated region
    $region2: #{tpu_custom_call.1} parent=1 // pred_check
      _
    $region3: #{tpu_custom_call.1} parent=1 // pred_check_branch
      %106 = sbr.rel (0) target = $region5
    $region4: #{tpu_custom_call.1} parent=1 // pred_region
      _
    $region5: #{tpu_custom_call.1} parent=1 // pred_fallthru
      _
    // Predicated region
    $region6: #{tpu_custom_call.1} parent=1 // pred_check
      _
    $region7: #{tpu_custom_call.1} parent=1 // pred_check_branch
      %108 = sbr.rel (0) target = $region9
    $region8: #{tpu_custom_call.1} parent=1 // pred_region
      _
    $region9: #{tpu_custom_call.1} parent=1 // pred_fallthru
      _
    // Predicated region
    $region10: #{tpu_custom_call.1} parent=1 // pred_check
      _
    $region11: #{tpu_custom_call.1} parent=1 // pred_check_branch
      %110 = sbr.rel (0) target = $region13
    $region12: #{tpu_custom_call.1} parent=1 // pred_region
      _
    $region13: #{tpu_custom_call.1} parent=1 // pred_fallthru
      _
    // Predicated region
    $region14: #{tpu_custom_call.1} parent=1 // pred_check
      _
    $region15: #{tpu_custom_call.1} parent=1 // pred_check_branch
      %112 = sbr.rel (0) target = $region17
    $region16: #{tpu_custom_call.1} parent=1 // pred_region
      %114 = vsyncadd [#allocation3], 0
      %s116 = sshll.u32 %s7, 4
      %s117 = int_to_ptr.hbm [resolvable:$true] %s116
      %s118 = sshll.u32 [#allocation2], 4
      %s119 = int_to_ptr.vmem [resolvable:$true] %s118
      %121 = dma.hbm_to_vmem [thread:$0]  %s117, 16, %s119, [#allocation3]
    $region17: #{tpu_custom_call.1} parent=1 // pred_fallthru
      _
    // Predicated region
    $region18: #{tpu_custom_call.1} parent=1 // pred_check
      _
    $region19: #{tpu_custom_call.1} parent=1 // pred_check_branch
      %123 = sbr.rel (0) target = $region21
    $region20: #{tpu_custom_call.1} parent=1 // pred_region
      _
    $region21: #{tpu_custom_call.1} parent=1 // pred_fallthru
      _
    // Predicated region
    $region22: #{tpu_custom_call.1} parent=1 // pred_check
      _
    $region23: #{tpu_custom_call.1} parent=1 // pred_check_branch
      %125 = sbr.rel (0) target = $region25
    $region24: #{tpu_custom_call.1} parent=1 // pred_region
      %127 = vsyncadd [#allocation6], 0
      %s129 = sshll.u32 %s11, 4
      %s130 = int_to_ptr.hbm [resolvable:$true] %s129
      %s131 = sshll.u32 [#allocation5], 4
      %s132 = int_to_ptr.vmem [resolvable:$true] %s131
      %134 = dma.hbm_to_vmem [thread:$0]  %s130, 16, %s132, [#allocation6]
    $region25: #{tpu_custom_call.1} parent=1 // pred_fallthru
      _
    // Predicated region
    $region26: #{tpu_custom_call.1} parent=1 // pred_check
      _
    $region27: #{tpu_custom_call.1} parent=1 // pred_check_branch
      %136 = sbr.rel (0) target = $region29
    $region28: #{tpu_custom_call.1} parent=1 // pred_region
      _
    $region29: #{tpu_custom_call.1} parent=1 // pred_fallthru
      _
    // Predicated region
    $region30: #{tpu_custom_call.1} parent=1 // pred_check
      _
    $region31: #{tpu_custom_call.1} parent=1 // pred_check_branch
      %138 = sbr.rel (0) target = $region33
    $region32: #{tpu_custom_call.1} parent=1 // pred_region
      %140 = vsyncadd [#allocation6], 0
      %s142 = sshll.u32 %s15, 4
      %s143 = int_to_ptr.hbm [resolvable:$true] %s142
      %s144 = sshll.u32 [#allocation7], 4
      %s145 = int_to_ptr.vmem [resolvable:$true] %s144
      %147 = dma.hbm_to_vmem [thread:$0]  %s143, 16, %s145, [#allocation6]
    $region33: #{tpu_custom_call.1} parent=1 // pred_fallthru
      _
    // Predicated region
    $region34: #{tpu_custom_call.1} parent=1 // pred_check
      _
    $region35: #{tpu_custom_call.1} parent=1 // pred_check_branch
      %149 = sbr.rel (0) target = $region37
    $region36: #{tpu_custom_call.1} parent=1 // pred_region
      _
    $region37: #{tpu_custom_call.1} parent=1 // pred_fallthru
      _
    // Predicated region
    $region38: #{tpu_custom_call.1} parent=1 // pred_check
      _
    $region39: #{tpu_custom_call.1} parent=1 // pred_check_branch
      %151 = sbr.rel (0) target = $region41
    $region40: #{tpu_custom_call.1} parent=1 // pred_region
      %153 = vsyncadd [#allocation9], 0
      %s155 = sshll.u32 %s19, 4
      %s156 = int_to_ptr.hbm [resolvable:$true] %s155
      %s157 = sshll.u32 [#allocation8], 4
      %s158 = int_to_ptr.vmem [resolvable:$true] %s157
      %160 = dma.hbm_to_vmem [thread:$0]  %s156, 16, %s158, [#allocation9]
    $region41: #{tpu_custom_call.1} parent=1 // pred_fallthru
      _
    // Predicated region
    $region42: #{tpu_custom_call.1} parent=1 // pred_check
      _
    $region43: #{tpu_custom_call.1} parent=1 // pred_check_branch
      %162 = sbr.rel (0) target = $region45
    $region44: #{tpu_custom_call.1} parent=1 // pred_region
      %164 = vsyncadd [#allocation9], 0
      %s165 = sshll.u32 %s21, 4
      %s166 = int_to_ptr.hbm [resolvable:$true] %s165
      %s167 = sshll.u32 [#allocation10], 4
      %s168 = int_to_ptr.vmem [resolvable:$true] %s167
      %173 = dma.hbm_to_vmem [thread:$0]  %s166, 256, %s168, [#allocation9], 64, 64, 4
    $region45: #{tpu_custom_call.1} parent=1 // pred_fallthru
      _
    // Predicated region
    $region46: #{tpu_custom_call.1} parent=1 // pred_check
      _
    $region47: #{tpu_custom_call.1} parent=1 // pred_check_branch
      %175 = sbr.rel (0) target = $region49
    $region48: #{tpu_custom_call.1} parent=1 // pred_region
      %177 = vsyncadd [#allocation12], 0
      %s179 = sshll.u32 %s23, 4
      %s180 = int_to_ptr.hbm [resolvable:$true] %s179
      %s181 = sshll.u32 [#allocation11], 4
      %s182 = int_to_ptr.vmem [resolvable:$true] %s181
      %184 = dma.hbm_to_vmem [thread:$0]  %s180, 16, %s182, [#allocation12]
    $region49: #{tpu_custom_call.1} parent=1 // pred_fallthru
      _
    // Predicated region
    $region50: #{tpu_custom_call.1} parent=1 // pred_check
      _
    $region51: #{tpu_custom_call.1} parent=1 // pred_check_branch
      %186 = sbr.rel (0) target = $region53
    $region52: #{tpu_custom_call.1} parent=1 // pred_region
      %188 = vsyncadd [#allocation12], 0
      %s189 = sshll.u32 %s25, 4
      %s190 = int_to_ptr.hbm [resolvable:$true] %s189
      %s191 = sshll.u32 [#allocation13], 4
      %s192 = int_to_ptr.vmem [resolvable:$true] %s191
      %197 = dma.hbm_to_vmem [thread:$0]  %s190, 256, %s192, [#allocation12], 64, 64, 4
    $region53: #{tpu_custom_call.1} parent=1 // pred_fallthru
      _
    // Predicated region
    $region54: #{tpu_custom_call.1} parent=1 // pred_check
      _
    $region55: #{tpu_custom_call.1} parent=1 // pred_check_branch
      %199 = sbr.rel (0) target = $region57
    $region56: #{tpu_custom_call.1} parent=1 // pred_region
      %201 = vsyncadd [#allocation15], 0
      %s203 = sshll.u32 %s27, 4
      %s204 = int_to_ptr.hbm [resolvable:$true] %s203
      %s205 = sshll.u32 [#allocation14], 4
      %s206 = int_to_ptr.vmem [resolvable:$true] %s205
      %208 = dma.hbm_to_vmem [thread:$0]  %s204, 16, %s206, [#allocation15]
    $region57: #{tpu_custom_call.1} parent=1 // pred_fallthru
      _
    // Predicated region
    $region58: #{tpu_custom_call.1} parent=1 // pred_check
      _
    $region59: #{tpu_custom_call.1} parent=1 // pred_check_branch
      %210 = sbr.rel (0) target = $region61
    $region60: #{tpu_custom_call.1} parent=1 // pred_region
      %212 = vsyncadd [#allocation15], 0
      %s213 = sshll.u32 %s29, 4
      %s214 = int_to_ptr.hbm [resolvable:$true] %s213
      %s215 = sshll.u32 [#allocation16], 4
      %s216 = int_to_ptr.vmem [resolvable:$true] %s215
      %221 = dma.hbm_to_vmem [thread:$0]  %s214, 256, %s216, [#allocation15], 64, 64, 4
    $region61: #{tpu_custom_call.1} parent=1 // pred_fallthru
      _
    // Predicated region
    $region62: #{tpu_custom_call.1} parent=1 // pred_check
      _
    $region63: #{tpu_custom_call.1} parent=1 // pred_check_branch
      %223 = sbr.rel (0) target = $region65
    $region64: #{tpu_custom_call.1} parent=1 // pred_region
      %225 = vsyncadd [#allocation18], 0
      %s227 = sshll.u32 %s31, 4
      %s228 = int_to_ptr.hbm [resolvable:$true] %s227
      %s229 = sshll.u32 [#allocation17], 4
      %s230 = int_to_ptr.vmem [resolvable:$true] %s229
      %232 = dma.hbm_to_vmem [thread:$0]  %s228, 16, %s230, [#allocation18]
    $region65: #{tpu_custom_call.1} parent=1 // pred_fallthru
      _
    // Predicated region
    $region66: #{tpu_custom_call.1} parent=1 // pred_check
      _
    $region67: #{tpu_custom_call.1} parent=1 // pred_check_branch
      %234 = sbr.rel (0) target = $region69
    $region68: #{tpu_custom_call.1} parent=1 // pred_region
      _
    $region69: #{tpu_custom_call.1} parent=1 // pred_fallthru
      _
    // Predicated region
    $region70: #{tpu_custom_call.1} parent=1 // pred_check
      _
    $region71: #{tpu_custom_call.1} parent=1 // pred_check_branch
      %236 = sbr.rel (0) target = $region73
    $region72: #{tpu_custom_call.1} parent=1 // pred_region
      %238 = vsyncadd [#allocation18], 0
      %s240 = sshll.u32 %s35, 4
      %s241 = int_to_ptr.hbm [resolvable:$true] %s240
      %s242 = sshll.u32 [#allocation19], 4
      %s243 = int_to_ptr.vmem [resolvable:$true] %s242
      %245 = dma.hbm_to_vmem [thread:$0]  %s241, 16, %s243, [#allocation18]
    $region73: #{tpu_custom_call.1} parent=1 // pred_fallthru
      _
    // Predicated region
    $region74: #{tpu_custom_call.1} parent=1 // pred_check
      _
    $region75: #{tpu_custom_call.1} parent=1 // pred_check_branch
      %247 = sbr.rel (0) target = $region77
    $region76: #{tpu_custom_call.1} parent=1 // pred_region
      %249 = vsyncadd [#allocation21], 0
      %s251 = sshll.u32 %s37, 4
      %s252 = int_to_ptr.hbm [resolvable:$true] %s251
      %s253 = sshll.u32 [#allocation20], 4
      %s254 = int_to_ptr.vmem [resolvable:$true] %s253
      %256 = dma.hbm_to_vmem [thread:$0]  %s252, 16, %s254, [#allocation21]
    $region77: #{tpu_custom_call.1} parent=1 // pred_fallthru
      _
    // Predicated region
    $region78: #{tpu_custom_call.1} parent=1 // pred_check
      _
    $region79: #{tpu_custom_call.1} parent=1 // pred_check_branch
      %258 = sbr.rel (0) target = $region81
    $region80: #{tpu_custom_call.1} parent=1 // pred_region
      %260 = vsyncadd [#allocation21], 0
      %s262 = sshll.u32 %s39, 4
      %s263 = int_to_ptr.hbm [resolvable:$true] %s262
      %s264 = sshll.u32 [#allocation22], 4
      %s265 = int_to_ptr.vmem [resolvable:$true] %s264
      %267 = dma.hbm_to_vmem [thread:$0]  %s263, 16, %s265, [#allocation21]
    $region81: #{tpu_custom_call.1} parent=1 // pred_fallthru
      _
    // Predicated region
    $region82: #{tpu_custom_call.1} parent=1 // pred_check
      _
    $region83: #{tpu_custom_call.1} parent=1 // pred_check_branch
      %269 = sbr.rel (0) target = $region85
    $region84: #{tpu_custom_call.1} parent=1 // pred_region
      _
    $region85: #{tpu_custom_call.1} parent=1 // pred_fallthru
      _
    // Predicated region
    $region86: #{tpu_custom_call.1} parent=1 // pred_check
      _
    $region87: #{tpu_custom_call.1} parent=1 // pred_check_branch
      %271 = sbr.rel (0) target = $region89
    $region88: #{tpu_custom_call.1} parent=1 // pred_region
      %273 = vsyncadd [#allocation24], 0
      %s275 = sshll.u32 %s43, 4
      %s276 = int_to_ptr.hbm [resolvable:$true] %s275
      %s277 = sshll.u32 [#allocation23], 4
      %s278 = int_to_ptr.vmem [resolvable:$true] %s277
      %280 = dma.hbm_to_vmem [thread:$0]  %s276, 16, %s278, [#allocation24]
    $region89: #{tpu_custom_call.1} parent=1 // pred_fallthru
      _
    // Predicated region
    $region90: #{tpu_custom_call.1} parent=1 // pred_check
      _
    $region91: #{tpu_custom_call.1} parent=1 // pred_check_branch
      %282 = sbr.rel (0) target = $region93
    $region92: #{tpu_custom_call.1} parent=1 // pred_region
      %284 = vsyncadd [#allocation24], 0
      %s285 = sshll.u32 %s45, 4
      %s286 = int_to_ptr.hbm [resolvable:$true] %s285
      %s287 = sshll.u32 [#allocation25], 4
      %s288 = int_to_ptr.vmem [resolvable:$true] %s287
      %293 = dma.hbm_to_vmem [thread:$0]  %s286, 256, %s288, [#allocation24], 64, 64, 4
    $region93: #{tpu_custom_call.1} parent=1 // pred_fallthru
      _
    // Predicated region
    $region94: #{tpu_custom_call.1} parent=1 // pred_check
      _
    $region95: #{tpu_custom_call.1} parent=1 // pred_check_branch
      %295 = sbr.rel (0) target = $region97
    $region96: #{tpu_custom_call.1} parent=1 // pred_region
      %297 = vsyncadd [#allocation27], 0
      %s299 = sshll.u32 %s47, 4
      %s300 = int_to_ptr.hbm [resolvable:$true] %s299
      %s301 = sshll.u32 [#allocation26], 4
      %s302 = int_to_ptr.vmem [resolvable:$true] %s301
      %304 = dma.hbm_to_vmem [thread:$0]  %s300, 16, %s302, [#allocation27]
    $region97: #{tpu_custom_call.1} parent=1 // pred_fallthru
      _
    // Predicated region
    $region98: #{tpu_custom_call.1} parent=1 // pred_check
      _
    $region99: #{tpu_custom_call.1} parent=1 // pred_check_branch
      %306 = sbr.rel (0) target = $region101
    $region100: #{tpu_custom_call.1} parent=1 // pred_region
      %308 = vsyncadd [#allocation27], 0
      %s309 = sshll.u32 %s49, 4
      %s310 = int_to_ptr.hbm [resolvable:$true] %s309
      %s311 = sshll.u32 [#allocation28], 4
      %s312 = int_to_ptr.vmem [resolvable:$true] %s311
      %317 = dma.hbm_to_vmem [thread:$0]  %s310, 256, %s312, [#allocation27], 64, 64, 4
    $region101: #{tpu_custom_call.1} parent=1 // pred_fallthru
      _
    // Predicated region
    $region102: #{tpu_custom_call.1} parent=1 // pred_check
      _
    $region103: #{tpu_custom_call.1} parent=1 // pred_check_branch
      %319 = sbr.rel (0) target = $region105
    $region104: #{tpu_custom_call.1} parent=1 // pred_region
      %321 = vsyncadd [#allocation30], 0
      %s323 = sshll.u32 %s51, 4
      %s324 = int_to_ptr.hbm [resolvable:$true] %s323
      %s325 = sshll.u32 [#allocation29], 4
      %s326 = int_to_ptr.vmem [resolvable:$true] %s325
      %328 = dma.hbm_to_vmem [thread:$0]  %s324, 16, %s326, [#allocation30]
    $region105: #{tpu_custom_call.1} parent=1 // pred_fallthru
      _
    // Predicated region
    $region106: #{tpu_custom_call.1} parent=1 // pred_check
      _
    $region107: #{tpu_custom_call.1} parent=1 // pred_check_branch
      %330 = sbr.rel (0) target = $region109
    $region108: #{tpu_custom_call.1} parent=1 // pred_region
      %332 = vsyncadd [#allocation30], 0
      %s333 = sshll.u32 %s53, 4
      %s334 = int_to_ptr.hbm [resolvable:$true] %s333
      %s335 = sshll.u32 [#allocation31], 4
      %s336 = int_to_ptr.vmem [resolvable:$true] %s335
      %341 = dma.hbm_to_vmem [thread:$0]  %s334, 256, %s336, [#allocation30], 64, 64, 4
    $region109: #{tpu_custom_call.1} parent=1 // pred_fallthru
      _
    // Predicated region
    $region110: #{tpu_custom_call.1} parent=1 // pred_check
      _
    $region111: #{tpu_custom_call.1} parent=1 // pred_check_branch
      %343 = sbr.rel (0) target = $region113
    $region112: #{tpu_custom_call.1} parent=1 // pred_region
      %345 = vsyncadd [#allocation33], 0
      %s347 = sshll.u32 %s55, 4
      %s348 = int_to_ptr.hbm [resolvable:$true] %s347
      %s349 = sshll.u32 [#allocation32], 4
      %s350 = int_to_ptr.vmem [resolvable:$true] %s349
      %352 = dma.hbm_to_vmem [thread:$0]  %s348, 16, %s350, [#allocation33]
    $region113: #{tpu_custom_call.1} parent=1 // pred_fallthru
      _
    // Predicated region
    $region114: #{tpu_custom_call.1} parent=1 // pred_check
      _
    $region115: #{tpu_custom_call.1} parent=1 // pred_check_branch
      %354 = sbr.rel (0) target = $region117
    $region116: #{tpu_custom_call.1} parent=1 // pred_region
      %356 = vsyncadd [#allocation33], 0
      %s357 = sshll.u32 %s57, 4
      %s358 = int_to_ptr.hbm [resolvable:$true] %s357
      %s359 = sshll.u32 [#allocation34], 4
      %s360 = int_to_ptr.vmem [resolvable:$true] %s359
      %365 = dma.hbm_to_vmem [thread:$0]  %s358, 256, %s360, [#allocation33], 64, 64, 4
    $region117: #{tpu_custom_call.1} parent=1 // pred_fallthru
      _
    // Predicated region
    $region118: #{tpu_custom_call.1} parent=1 // pred_check
      _
    $region119: #{tpu_custom_call.1} parent=1 // pred_check_branch
      %367 = sbr.rel (0) target = $region121
    $region120: #{tpu_custom_call.1} parent=1 // pred_region
      %369 = vsyncadd [#allocation36], 0
      %s371 = sshll.u32 %s59, 4
      %s372 = int_to_ptr.hbm [resolvable:$true] %s371
      %s373 = sshll.u32 [#allocation35], 4
      %s374 = int_to_ptr.vmem [resolvable:$true] %s373
      %376 = dma.hbm_to_vmem [thread:$0]  %s372, 16, %s374, [#allocation36]
    $region121: #{tpu_custom_call.1} parent=1 // pred_fallthru
      _
    // Predicated region
    $region122: #{tpu_custom_call.1} parent=1 // pred_check
      _
    $region123: #{tpu_custom_call.1} parent=1 // pred_check_branch
      %378 = sbr.rel (0) target = $region125
    $region124: #{tpu_custom_call.1} parent=1 // pred_region
      %380 = vsyncadd [#allocation36], 0
      %s381 = sshll.u32 %s61, 4
      %s382 = int_to_ptr.hbm [resolvable:$true] %s381
      %s383 = sshll.u32 [#allocation37], 4
      %s384 = int_to_ptr.vmem [resolvable:$true] %s383
      %389 = dma.hbm_to_vmem [thread:$0]  %s382, 256, %s384, [#allocation36], 64, 64, 4
    $region125: #{tpu_custom_call.1} parent=1 // pred_fallthru
      _
    // Predicated region
    $region126: #{tpu_custom_call.1} parent=1 // pred_check
      _
    $region127: #{tpu_custom_call.1} parent=1 // pred_check_branch
      %391 = sbr.rel (0) target = $region129
    $region128: #{tpu_custom_call.1} parent=1 // pred_region
      %393 = vsyncadd [#allocation39], 0
      %s395 = sshll.u32 %s63, 4
      %s396 = int_to_ptr.hbm [resolvable:$true] %s395
      %s397 = sshll.u32 [#allocation38], 4
      %s398 = int_to_ptr.vmem [resolvable:$true] %s397
      %400 = dma.hbm_to_vmem [thread:$0]  %s396, 16, %s398, [#allocation39]
    $region129: #{tpu_custom_call.1} parent=1 // pred_fallthru
      _
    // Predicated region
    $region130: #{tpu_custom_call.1} parent=1 // pred_check
      _
    $region131: #{tpu_custom_call.1} parent=1 // pred_check_branch
      %402 = sbr.rel (0) target = $region133
    $region132: #{tpu_custom_call.1} parent=1 // pred_region
      %404 = vsyncadd [#allocation39], 0
      %s405 = sshll.u32 %s65, 4
      %s406 = int_to_ptr.hbm [resolvable:$true] %s405
      %s407 = sshll.u32 [#allocation40], 4
      %s408 = int_to_ptr.vmem [resolvable:$true] %s407
      %413 = dma.hbm_to_vmem [thread:$0]  %s406, 256, %s408, [#allocation39], 64, 64, 4
    $region133: #{tpu_custom_call.1} parent=1 // pred_fallthru
      _
    // Predicated region
    $region134: #{tpu_custom_call.1} parent=1 // pred_check
      _
    $region135: #{tpu_custom_call.1} parent=1 // pred_check_branch
      %415 = sbr.rel (0) target = $region137
    $region136: #{tpu_custom_call.1} parent=1 // pred_region
      %417 = vsyncadd [#allocation42], 0
      %s419 = sshll.u32 %s67, 4
      %s420 = int_to_ptr.hbm [resolvable:$true] %s419
      %s421 = sshll.u32 [#allocation41], 4
      %s422 = int_to_ptr.vmem [resolvable:$true] %s421
      %424 = dma.hbm_to_vmem [thread:$0]  %s420, 16, %s422, [#allocation42]
    $region137: #{tpu_custom_call.1} parent=1 // pred_fallthru
      _
    // Predicated region
    $region138: #{tpu_custom_call.1} parent=1 // pred_check
      _
    $region139: #{tpu_custom_call.1} parent=1 // pred_check_branch
      %426 = sbr.rel (0) target = $region141
    $region140: #{tpu_custom_call.1} parent=1 // pred_region
      _
    $region141: #{tpu_custom_call.1} parent=1 // pred_fallthru
      _
    // Predicated region
    $region142: #{tpu_custom_call.1} parent=1 // pred_check
      _
    $region143: #{tpu_custom_call.1} parent=1 // pred_check_branch
      %428 = sbr.rel (0) target = $region145
    $region144: #{tpu_custom_call.1} parent=1 // pred_region
      %430 = vsyncadd [#allocation42], 0
      %s432 = sshll.u32 %s71, 4
      %s433 = int_to_ptr.hbm [resolvable:$true] %s432
      %s434 = sshll.u32 [#allocation43], 4
      %s435 = int_to_ptr.vmem [resolvable:$true] %s434
      %437 = dma.hbm_to_vmem [thread:$0]  %s433, 16, %s435, [#allocation42]
    $region145: #{tpu_custom_call.1} parent=1 // pred_fallthru
      _
    // Predicated region
    $region146: #{tpu_custom_call.1} parent=1 // pred_check
      _
    $region147: #{tpu_custom_call.1} parent=1 // pred_check_branch
      %439 = sbr.rel (0) target = $region149
    $region148: #{tpu_custom_call.1} parent=1 // pred_region
      _
    $region149: #{tpu_custom_call.1} parent=1 // pred_fallthru
      _
    // Predicated region
    $region150: #{tpu_custom_call.1} parent=1 // pred_check
      _
    $region151: #{tpu_custom_call.1} parent=1 // pred_check_branch
      %441 = sbr.rel (0) target = $region153
    $region152: #{tpu_custom_call.1} parent=1 // pred_region
      _
    $region153: #{tpu_custom_call.1} parent=1 // pred_fallthru
      _
    // Predicated region
    $region154: #{tpu_custom_call.1} parent=1 // pred_check
      _
    $region155: #{tpu_custom_call.1} parent=1 // pred_check_branch
      %443 = sbr.rel (0) target = $region157
    $region156: #{tpu_custom_call.1} parent=1 // pred_region
      _
    $region157: #{tpu_custom_call.1} parent=1 // pred_fallthru
      _
    // Predicated region
    $region158: #{tpu_custom_call.1} parent=1 // pred_check
      _
    $region159: #{tpu_custom_call.1} parent=1 // pred_check_branch
      %445 = sbr.rel (0) target = $region161
    $region160: #{tpu_custom_call.1} parent=1 // pred_region
      _
    $region161: #{tpu_custom_call.1} parent=1 // pred_fallthru
      _
    // Predicated region
    $region162: #{tpu_custom_call.1} parent=1 // pred_check
      _
    $region163: #{tpu_custom_call.1} parent=1 // pred_check_branch
      %447 = sbr.rel (0) target = $region165
    $region164: #{tpu_custom_call.1} parent=1 // pred_region
      %449 = dma.done [#allocation3], 16
    $region165: #{tpu_custom_call.1} parent=1 // pred_fallthru
      _
    // Predicated region
    $region166: #{tpu_custom_call.1} parent=1 // pred_check
      _
    $region167: #{tpu_custom_call.1} parent=1 // pred_check_branch
      %451 = sbr.rel (0) target = $region169
    $region168: #{tpu_custom_call.1} parent=1 // pred_region
      %453 = dma.done [#allocation6], 16
    $region169: #{tpu_custom_call.1} parent=1 // pred_fallthru
      _
    // Predicated region
    $region170: #{tpu_custom_call.1} parent=1 // pred_check
      _
    $region171: #{tpu_custom_call.1} parent=1 // pred_check_branch
      %455 = sbr.rel (0) target = $region173
    $region172: #{tpu_custom_call.1} parent=1 // pred_region
      %457 = dma.done [#allocation6], 16
    $region173: #{tpu_custom_call.1} parent=1 // pred_fallthru
      _
    // Predicated region
    $region174: #{tpu_custom_call.1} parent=1 // pred_check
      _
    $region175: #{tpu_custom_call.1} parent=1 // pred_check_branch
      %459 = sbr.rel (0) target = $region177
    $region176: #{tpu_custom_call.1} parent=1 // pred_region
      %461 = dma.done [#allocation9], 16
    $region177: #{tpu_custom_call.1} parent=1 // pred_fallthru
      _
    // Predicated region
    $region178: #{tpu_custom_call.1} parent=1 // pred_check
      _
    $region179: #{tpu_custom_call.1} parent=1 // pred_check_branch
      %463 = sbr.rel (0) target = $region181
    $region180: #{tpu_custom_call.1} parent=1 // pred_region
      %465 = dma.done [#allocation9], 256
    $region181: #{tpu_custom_call.1} parent=1 // pred_fallthru
      _
    // Predicated region
    $region182: #{tpu_custom_call.1} parent=1 // pred_check
      _
    $region183: #{tpu_custom_call.1} parent=1 // pred_check_branch
      %467 = sbr.rel (0) target = $region185
    $region184: #{tpu_custom_call.1} parent=1 // pred_region
      %469 = dma.done [#allocation12], 16
    $region185: #{tpu_custom_call.1} parent=1 // pred_fallthru
      _
    // Predicated region
    $region186: #{tpu_custom_call.1} parent=1 // pred_check
      _
    $region187: #{tpu_custom_call.1} parent=1 // pred_check_branch
      %471 = sbr.rel (0) target = $region189
    $region188: #{tpu_custom_call.1} parent=1 // pred_region
      %473 = dma.done [#allocation12], 256
    $region189: #{tpu_custom_call.1} parent=1 // pred_fallthru
      _
    // Predicated region
    $region190: #{tpu_custom_call.1} parent=1 // pred_check
      _
    $region191: #{tpu_custom_call.1} parent=1 // pred_check_branch
      %475 = sbr.rel (0) target = $region193
    $region192: #{tpu_custom_call.1} parent=1 // pred_region
      %477 = dma.done [#allocation15], 16
    $region193: #{tpu_custom_call.1} parent=1 // pred_fallthru
      _
    // Predicated region
    $region194: #{tpu_custom_call.1} parent=1 // pred_check
      _
    $region195: #{tpu_custom_call.1} parent=1 // pred_check_branch
      %479 = sbr.rel (0) target = $region197
    $region196: #{tpu_custom_call.1} parent=1 // pred_region
      %481 = dma.done [#allocation15], 256
    $region197: #{tpu_custom_call.1} parent=1 // pred_fallthru
      _
    // Predicated region
    $region198: #{tpu_custom_call.1} parent=1 // pred_check
      _
    $region199: #{tpu_custom_call.1} parent=1 // pred_check_branch
      %483 = sbr.rel (0) target = $region201
    $region200: #{tpu_custom_call.1} parent=1 // pred_region
      %485 = dma.done [#allocation18], 16
    $region201: #{tpu_custom_call.1} parent=1 // pred_fallthru
      _
    // Predicated region
    $region202: #{tpu_custom_call.1} parent=1 // pred_check
      _
    $region203: #{tpu_custom_call.1} parent=1 // pred_check_branch
      %487 = sbr.rel (0) target = $region205
    $region204: #{tpu_custom_call.1} parent=1 // pred_region
      %489 = dma.done [#allocation18], 16
    $region205: #{tpu_custom_call.1} parent=1 // pred_fallthru
      _
    // Predicated region
    $region206: #{tpu_custom_call.1} parent=1 // pred_check
      _
    $region207: #{tpu_custom_call.1} parent=1 // pred_check_branch
      %491 = sbr.rel (0) target = $region209
    $region208: #{tpu_custom_call.1} parent=1 // pred_region
      %493 = dma.done [#allocation21], 16
    $region209: #{tpu_custom_call.1} parent=1 // pred_fallthru
      _
    // Predicated region
    $region210: #{tpu_custom_call.1} parent=1 // pred_check
      _
    $region211: #{tpu_custom_call.1} parent=1 // pred_check_branch
      %495 = sbr.rel (0) target = $region213
    $region212: #{tpu_custom_call.1} parent=1 // pred_region
      %497 = dma.done [#allocation21], 16
    $region213: #{tpu_custom_call.1} parent=1 // pred_fallthru
      _
    // Predicated region
    $region214: #{tpu_custom_call.1} parent=1 // pred_check
      _
    $region215: #{tpu_custom_call.1} parent=1 // pred_check_branch
      %499 = sbr.rel (0) target = $region217
    $region216: #{tpu_custom_call.1} parent=1 // pred_region
      %501 = dma.done [#allocation24], 16
    $region217: #{tpu_custom_call.1} parent=1 // pred_fallthru
      _
    // Predicated region
    $region218: #{tpu_custom_call.1} parent=1 // pred_check
      _
    $region219: #{tpu_custom_call.1} parent=1 // pred_check_branch
      %503 = sbr.rel (0) target = $region221
    $region220: #{tpu_custom_call.1} parent=1 // pred_region
      %505 = dma.done [#allocation24], 256
    $region221: #{tpu_custom_call.1} parent=1 // pred_fallthru
      _
    // Predicated region
    $region222: #{tpu_custom_call.1} parent=1 // pred_check
      _
    $region223: #{tpu_custom_call.1} parent=1 // pred_check_branch
      %507 = sbr.rel (0) target = $region225
    $region224: #{tpu_custom_call.1} parent=1 // pred_region
      %509 = dma.done [#allocation27], 16
    $region225: #{tpu_custom_call.1} parent=1 // pred_fallthru
      _
    // Predicated region
    $region226: #{tpu_custom_call.1} parent=1 // pred_check
      _
    $region227: #{tpu_custom_call.1} parent=1 // pred_check_branch
      %511 = sbr.rel (0) target = $region229
    $region228: #{tpu_custom_call.1} parent=1 // pred_region
      %513 = dma.done [#allocation27], 256
    $region229: #{tpu_custom_call.1} parent=1 // pred_fallthru
      _
    // Predicated region
    $region230: #{tpu_custom_call.1} parent=1 // pred_check
      _
    $region231: #{tpu_custom_call.1} parent=1 // pred_check_branch
      %515 = sbr.rel (0) target = $region233
    $region232: #{tpu_custom_call.1} parent=1 // pred_region
      %517 = dma.done [#allocation30], 16
    $region233: #{tpu_custom_call.1} parent=1 // pred_fallthru
      _
    // Predicated region
    $region234: #{tpu_custom_call.1} parent=1 // pred_check
      _
    $region235: #{tpu_custom_call.1} parent=1 // pred_check_branch
      %519 = sbr.rel (0) target = $region237
    $region236: #{tpu_custom_call.1} parent=1 // pred_region
      %521 = dma.done [#allocation30], 256
    $region237: #{tpu_custom_call.1} parent=1 // pred_fallthru
      _
    // Predicated region
    $region238: #{tpu_custom_call.1} parent=1 // pred_check
      _
    $region239: #{tpu_custom_call.1} parent=1 // pred_check_branch
      %523 = sbr.rel (0) target = $region241
    $region240: #{tpu_custom_call.1} parent=1 // pred_region
      %525 = dma.done [#allocation33], 16
    $region241: #{tpu_custom_call.1} parent=1 // pred_fallthru
      _
    // Predicated region
    $region242: #{tpu_custom_call.1} parent=1 // pred_check
      _
    $region243: #{tpu_custom_call.1} parent=1 // pred_check_branch
      %527 = sbr.rel (0) target = $region245
    $region244: #{tpu_custom_call.1} parent=1 // pred_region
      %529 = dma.done [#allocation33], 256
    $region245: #{tpu_custom_call.1} parent=1 // pred_fallthru
      _
    // Predicated region
    $region246: #{tpu_custom_call.1} parent=1 // pred_check
      _
    $region247: #{tpu_custom_call.1} parent=1 // pred_check_branch
      %531 = sbr.rel (0) target = $region249
    $region248: #{tpu_custom_call.1} parent=1 // pred_region
      %533 = dma.done [#allocation36], 16
    $region249: #{tpu_custom_call.1} parent=1 // pred_fallthru
      _
    // Predicated region
    $region250: #{tpu_custom_call.1} parent=1 // pred_check
      _
    $region251: #{tpu_custom_call.1} parent=1 // pred_check_branch
      %535 = sbr.rel (0) target = $region253
    $region252: #{tpu_custom_call.1} parent=1 // pred_region
      %537 = dma.done [#allocation36], 256
    $region253: #{tpu_custom_call.1} parent=1 // pred_fallthru
      _
    // Predicated region
    $region254: #{tpu_custom_call.1} parent=1 // pred_check
      _
    $region255: #{tpu_custom_call.1} parent=1 // pred_check_branch
      %539 = sbr.rel (0) target = $region257
    $region256: #{tpu_custom_call.1} parent=1 // pred_region
      %541 = dma.done [#allocation39], 16
    $region257: #{tpu_custom_call.1} parent=1 // pred_fallthru
      _
    // Predicated region
    $region258: #{tpu_custom_call.1} parent=1 // pred_check
      _
    $region259: #{tpu_custom_call.1} parent=1 // pred_check_branch
      %543 = sbr.rel (0) target = $region261
    $region260: #{tpu_custom_call.1} parent=1 // pred_region
      %545 = dma.done [#allocation39], 256
    $region261: #{tpu_custom_call.1} parent=1 // pred_fallthru
      _
    // Predicated region
    $region262: #{tpu_custom_call.1} parent=1 // pred_check
      _
    $region263: #{tpu_custom_call.1} parent=1 // pred_check_branch
      %547 = sbr.rel (0) target = $region265
    $region264: #{tpu_custom_call.1} parent=1 // pred_region
      %549 = dma.done [#allocation42], 16
    $region265: #{tpu_custom_call.1} parent=1 // pred_fallthru
      _
    // Predicated region
    $region266: #{tpu_custom_call.1} parent=1 // pred_check
      _
    $region267: #{tpu_custom_call.1} parent=1 // pred_check_branch
      %551 = sbr.rel (0) target = $region269
    $region268: #{tpu_custom_call.1} parent=1 // pred_region
      %553 = dma.done [#allocation42], 16
    $region269: #{tpu_custom_call.1} parent=1 // pred_fallthru
      _
    %v555 = vld [vmem:[%s1] sm:$0xff]
    %v556 = vld [vmem:[%s1 + $0x8] sm:$0xff]
    %v557 = vld [vmem:[%s3] sm:$0xff]
    %v558 = vld [vmem:[%s3 + $0x8] sm:$0xff]
    %v559 = vld [vmem:[#allocation20] sm:$0x1]
    %v560 = vld [vmem:[#allocation22] sm:$0x1]
    %v561 = vpack.c.bf16 %v556, %v555
    %v562 = vld [vmem:[%s5] sm:$0xf]
    %v563 = vld [vmem:[%s5 + $0x4] sm:$0xf]
    %v564 = vld [vmem:[%s5 + $0x8] sm:$0xf]
    %v565 = vld [vmem:[%s5 + $0xc] sm:$0xf]
    %v566 = vld [vmem:[#allocation2] sm:$0x1]
    %v568 = vperm.slane %v566, 0
    %v574 = vunpack.c.l.b16 %v562
    %v575 = vunpack.c.l.b16 %v563
    %v576 = vunpack.c.l.b16 %v564
    %v577 = vunpack.c.l.b16 %v565
    %v578 = vpack.c.b16 %v575, %v574
    %v579 = vpack.c.b16 %v577, %v576
    %vm582 = vcmask 261120
    %v584 = vsel %vm582, %v561, 0
    %586 = vmatpush.bf16.msra.mxu0 0
    %587 = vmatpush.bf16.msra.mxu0 0
    %588 = vmatpush.bf16.msra.mxu0 0
    %589 = vmatpush.bf16.msra.mxu0 0
    %590 = vmatpush.bf16.msra.mxu0 0
    %591 = vmatpush.bf16.msra.mxu0 0
    %592 = vmatpush.bf16.msra.mxu0 %v579
    %593 = vmatpush.bf16.msra.mxu0 %v578
    %594 = vmatmul.bf16.gmra.mxu0 %v584
    %v595 = vpop.f32.mrf.mxu0
    %v596 = vadd.f32 %v568, %v595
    %v597 = vpop.f32.mrf.mxu0
    %v598 = vadd.f32 %v568, %v597
    %599 = vdwg.mxu0
    %v600 = vpack.c.bf16 %v596, %v596
    %v601 = vpack.c.bf16 %v598, %v598
    %v602 = vld [vmem:[%s9] sm:$0xf]
    %v603 = vld [vmem:[%s9 + $0x4] sm:$0xf]
    %v604 = vld [vmem:[%s9 + $0x8] sm:$0xf]
    %v605 = vld [vmem:[%s9 + $0xc] sm:$0xf]
    %v606 = vld [vmem:[#allocation5] sm:$0x1]
    %v608 = vperm.slane %v606, 0
    %v614 = vunpack.c.l.b16 %v602
    %v615 = vunpack.c.l.b16 %v603
    %v616 = vunpack.c.l.b16 %v604
    %v617 = vunpack.c.l.b16 %v605
    %v618 = vpack.c.b16 %v615, %v614
    %v619 = vpack.c.b16 %v617, %v616
    %622 = vmatpush.bf16.msra.mxu0 0
    %623 = vmatpush.bf16.msra.mxu0 0
    %624 = vmatpush.bf16.msra.mxu0 0
    %625 = vmatpush.bf16.msra.mxu0 0
    %626 = vmatpush.bf16.msra.mxu0 0
    %627 = vmatpush.bf16.msra.mxu0 0
    %628 = vmatpush.bf16.msra.mxu0 %v619
    %629 = vmatpush.bf16.msra.mxu0 %v618
    %630 = vmatmul.bf16.gmra.mxu0 %v584
    %v631 = vpop.f32.mrf.mxu0
    %v632 = vadd.f32 %v608, %v631
    %v633 = vpop.f32.mrf.mxu0
    %v634 = vadd.f32 %v608, %v633
    %635 = vdwg.mxu0
    %v636 = vpack.c.bf16 %v632, %v632
    %v637 = vpack.c.bf16 %v634, %v634
    %640 = vrot.lane.b32.xlu0 %v600, 120
    %v641 = vpop.permute.xlu0 %640
    %642 = vrot.lane.b32.xlu0 %v601, 120
    %v643 = vpop.permute.xlu0 %642
    %644 = vrot.lane.b32.xlu0 %v600, 112
    %v645 = vpop.permute.xlu0 %644
    %646 = vrot.lane.b32.xlu0 %v601, 112
    %v647 = vpop.permute.xlu0 %646
    %648 = vrot.lane.b32.xlu0 %v600, 104
    %v649 = vpop.permute.xlu0 %648
    %650 = vrot.lane.b32.xlu0 %v601, 104
    %v651 = vpop.permute.xlu0 %650
    %654 = vrot.lane.b32.xlu0 %v636, 120
    %v655 = vpop.permute.xlu0 %654
    %656 = vrot.lane.b32.xlu0 %v637, 120
    %v657 = vpop.permute.xlu0 %656
    %658 = vrot.lane.b32.xlu0 %v636, 112
    %v659 = vpop.permute.xlu0 %658
    %660 = vrot.lane.b32.xlu0 %v637, 112
    %v661 = vpop.permute.xlu0 %660
    %662 = vrot.lane.b32.xlu0 %v636, 104
    %v663 = vpop.permute.xlu0 %662
    %664 = vrot.lane.b32.xlu0 %v637, 104
    %v665 = vpop.permute.xlu0 %664
    %vm666 = vcmask 64512
    %v668 = vsel %vm666, %v600, 0
    %v671 = vsel %vm666, %v636, 0
    %673 = vmatpush.bf16.xpose.msra.mxu0 0
    %674 = vmatpush.bf16.xpose.msra.mxu0 0
    %675 = vmatpush.bf16.xpose.msra.mxu0 0
    %676 = vmatpush.bf16.xpose.msra.mxu0 0
    %677 = vmatpush.bf16.xpose.msra.mxu0 0
    %678 = vmatpush.bf16.xpose.msra.mxu0 0
    %679 = vmatpush.bf16.xpose.msra.mxu0 0
    %680 = vmatpush.bf16.xpose.msra.mxu0 %v671
    %681 = vmatmul.bf16.gmra.mxu0 %v668
    %v682 = vpop.f32.mrf.mxu0
    %v683 = vadd.f32 0.0, %v682
    %v684 = vpop.f32.mrf.mxu0
    %685 = vdwg.mxu0
    %v687 = vsel %vm666, %v601, 0
    %v690 = vsel %vm666, %v637, 0
    %692 = vmatpush.bf16.xpose.msra.mxu0 0
    %693 = vmatpush.bf16.xpose.msra.mxu0 0
    %694 = vmatpush.bf16.xpose.msra.mxu0 0
    %695 = vmatpush.bf16.xpose.msra.mxu0 0
    %696 = vmatpush.bf16.xpose.msra.mxu0 0
    %697 = vmatpush.bf16.xpose.msra.mxu0 0
    %698 = vmatpush.bf16.xpose.msra.mxu0 0
    %699 = vmatpush.bf16.xpose.msra.mxu0 %v690
    %700 = vmatmul.bf16.gmra.mxu0 %v687
    %v701 = vpop.f32.mrf.mxu0
    %v702 = vadd.f32 0.0, %v701
    %v703 = vpop.f32.mrf.mxu0
    %704 = vdwg.mxu0
    %v706 = vsel %vm666, %v641, 0
    %v709 = vsel %vm666, %v655, 0
    %711 = vmatpush.bf16.xpose.msra.mxu0 0
    %712 = vmatpush.bf16.xpose.msra.mxu0 0
    %713 = vmatpush.bf16.xpose.msra.mxu0 0
    %714 = vmatpush.bf16.xpose.msra.mxu0 0
    %715 = vmatpush.bf16.xpose.msra.mxu0 0
    %716 = vmatpush.bf16.xpose.msra.mxu0 0
    %717 = vmatpush.bf16.xpose.msra.mxu0 0
    %718 = vmatpush.bf16.xpose.msra.mxu0 %v709
    %719 = vmatmul.bf16.gmra.mxu0 %v706
    %v720 = vpop.f32.mrf.mxu0
    %v721 = vadd.f32 0.0, %v720
    %v722 = vpop.f32.mrf.mxu0
    %723 = vdwg.mxu0
    %v725 = vsel %vm666, %v643, 0
    %v728 = vsel %vm666, %v657, 0
    %730 = vmatpush.bf16.xpose.msra.mxu0 0
    %731 = vmatpush.bf16.xpose.msra.mxu0 0
    %732 = vmatpush.bf16.xpose.msra.mxu0 0
    %733 = vmatpush.bf16.xpose.msra.mxu0 0
    %734 = vmatpush.bf16.xpose.msra.mxu0 0
    %735 = vmatpush.bf16.xpose.msra.mxu0 0
    %736 = vmatpush.bf16.xpose.msra.mxu0 0
    %737 = vmatpush.bf16.xpose.msra.mxu0 %v728
    %738 = vmatmul.bf16.gmra.mxu0 %v725
    %v739 = vpop.f32.mrf.mxu0
    %v740 = vadd.f32 0.0, %v739
    %v741 = vpop.f32.mrf.mxu0
    %742 = vdwg.mxu0
    %v744 = vsel %vm666, %v645, 0
    %v747 = vsel %vm666, %v659, 0
    %749 = vmatpush.bf16.xpose.msra.mxu0 0
    %750 = vmatpush.bf16.xpose.msra.mxu0 0
    %751 = vmatpush.bf16.xpose.msra.mxu0 0
    %752 = vmatpush.bf16.xpose.msra.mxu0 0
    %753 = vmatpush.bf16.xpose.msra.mxu0 0
    %754 = vmatpush.bf16.xpose.msra.mxu0 0
    %755 = vmatpush.bf16.xpose.msra.mxu0 0
    %756 = vmatpush.bf16.xpose.msra.mxu0 %v747
    %757 = vmatmul.bf16.gmra.mxu0 %v744
    %v758 = vpop.f32.mrf.mxu0
    %v759 = vadd.f32 0.0, %v758
    %v760 = vpop.f32.mrf.mxu0
    %761 = vdwg.mxu0
    %v763 = vsel %vm666, %v647, 0
    %v766 = vsel %vm666, %v661, 0
    %768 = vmatpush.bf16.xpose.msra.mxu0 0
    %769 = vmatpush.bf16.xpose.msra.mxu0 0
    %770 = vmatpush.bf16.xpose.msra.mxu0 0
    %771 = vmatpush.bf16.xpose.msra.mxu0 0
    %772 = vmatpush.bf16.xpose.msra.mxu0 0
    %773 = vmatpush.bf16.xpose.msra.mxu0 0
    %774 = vmatpush.bf16.xpose.msra.mxu0 0
    %775 = vmatpush.bf16.xpose.msra.mxu0 %v766
    %776 = vmatmul.bf16.gmra.mxu0 %v763
    %v777 = vpop.f32.mrf.mxu0
    %v778 = vadd.f32 0.0, %v777
    %v779 = vpop.f32.mrf.mxu0
    %780 = vdwg.mxu0
    %v782 = vsel %vm666, %v649, 0
    %v785 = vsel %vm666, %v663, 0
    %787 = vmatpush.bf16.xpose.msra.mxu0 0
    %788 = vmatpush.bf16.xpose.msra.mxu0 0
    %789 = vmatpush.bf16.xpose.msra.mxu0 0
    %790 = vmatpush.bf16.xpose.msra.mxu0 0
    %791 = vmatpush.bf16.xpose.msra.mxu0 0
    %792 = vmatpush.bf16.xpose.msra.mxu0 0
    %793 = vmatpush.bf16.xpose.msra.mxu0 0
    %794 = vmatpush.bf16.xpose.msra.mxu0 %v785
    %795 = vmatmul.bf16.gmra.mxu0 %v782
    %v796 = vpop.f32.mrf.mxu0
    %v797 = vadd.f32 0.0, %v796
    %v798 = vpop.f32.mrf.mxu0
    %799 = vdwg.mxu0
    %v801 = vsel %vm666, %v651, 0
    %v804 = vsel %vm666, %v665, 0
    %806 = vmatpush.bf16.xpose.msra.mxu0 0
    %807 = vmatpush.bf16.xpose.msra.mxu0 0
    %808 = vmatpush.bf16.xpose.msra.mxu0 0
    %809 = vmatpush.bf16.xpose.msra.mxu0 0
    %810 = vmatpush.bf16.xpose.msra.mxu0 0
    %811 = vmatpush.bf16.xpose.msra.mxu0 0
    %812 = vmatpush.bf16.xpose.msra.mxu0 0
    %813 = vmatpush.bf16.xpose.msra.mxu0 %v804
    %814 = vmatmul.bf16.gmra.mxu0 %v801
    %v815 = vpop.f32.mrf.mxu0
    %v816 = vadd.f32 0.0, %v815
    %v817 = vpop.f32.mrf.mxu0
    %818 = vdwg.mxu0
    %v819 = vsel %vm666, %v683, -inf
    %820 = vmax.xlane.f32.xlu0 %v819
    %v821 = vpop.xlane.xlu0 %820
    %v822 = vsel %vm666, %v702, -inf
    %823 = vmax.xlane.f32.xlu0 %v822
    %v824 = vpop.xlane.xlu0 %823
    %v825 = vsel %vm666, %v721, -inf
    %826 = vmax.xlane.f32.xlu0 %v825
    %v827 = vpop.xlane.xlu0 %826
    %v828 = vsel %vm666, %v740, -inf
    %829 = vmax.xlane.f32.xlu0 %v828
    %v830 = vpop.xlane.xlu0 %829
    %v831 = vsel %vm666, %v759, -inf
    %832 = vmax.xlane.f32.xlu0 %v831
    %v833 = vpop.xlane.xlu0 %832
    %v834 = vsel %vm666, %v778, -inf
    %835 = vmax.xlane.f32.xlu0 %v834
    %v836 = vpop.xlane.xlu0 %835
    %v837 = vsel %vm666, %v797, -inf
    %838 = vmax.xlane.f32.xlu0 %v837
    %v839 = vpop.xlane.xlu0 %838
    %v840 = vsel %vm666, %v816, -inf
    %841 = vmax.xlane.f32.xlu0 %v840
    %v842 = vpop.xlane.xlu0 %841
    %v843 = vsub.f32 %v683, %v821
    %v844 = vsub.f32 %v702, %v824
    %v845 = vsub.f32 %v721, %v827
    %v846 = vsub.f32 %v740, %v830
    %v847 = vsub.f32 %v759, %v833
    %v848 = vsub.f32 %v778, %v836
    %v849 = vsub.f32 %v797, %v839
    %v850 = vsub.f32 %v816, %v842
    %v851 = vmul.f32 %v843, 1.442695
    %v852 = vpow.pop %v851
    %v853 = vmul.f32 %v844, 1.442695
    %v854 = vpow.pop %v853
    %v855 = vmul.f32 %v845, 1.442695
    %v856 = vpow.pop %v855
    %v857 = vmul.f32 %v846, 1.442695
    %v858 = vpow.pop %v857
    %v859 = vmul.f32 %v847, 1.442695
    %v860 = vpow.pop %v859
    %v861 = vmul.f32 %v848, 1.442695
    %v862 = vpow.pop %v861
    %v863 = vmul.f32 %v849, 1.442695
    %v864 = vpow.pop %v863
    %v865 = vmul.f32 %v850, 1.442695
    %v866 = vpow.pop %v865
    %v867 = vsel %vm666, %v852, 0.0
    %868 = vadd.xlane.f32.xlu0 %v867
    %v869 = vpop.xlane.xlu0 %868
    %v870 = vsel %vm666, %v854, 0.0
    %871 = vadd.xlane.f32.xlu0 %v870
    %v872 = vpop.xlane.xlu0 %871
    %v873 = vsel %vm666, %v856, 0.0
    %874 = vadd.xlane.f32.xlu0 %v873
    %v875 = vpop.xlane.xlu0 %874
    %v876 = vsel %vm666, %v858, 0.0
    %877 = vadd.xlane.f32.xlu0 %v876
    %v878 = vpop.xlane.xlu0 %877
    %v879 = vsel %vm666, %v860, 0.0
    %880 = vadd.xlane.f32.xlu0 %v879
    %v881 = vpop.xlane.xlu0 %880
    %v882 = vsel %vm666, %v862, 0.0
    %883 = vadd.xlane.f32.xlu0 %v882
    %v884 = vpop.xlane.xlu0 %883
    %v885 = vsel %vm666, %v864, 0.0
    %886 = vadd.xlane.f32.xlu0 %v885
    %v887 = vpop.xlane.xlu0 %886
    %v888 = vsel %vm666, %v866, 0.0
    %889 = vadd.xlane.f32.xlu0 %v888
    %v890 = vpop.xlane.xlu0 %889
    %v891 = vrcp.pop %v869
    %v892 = vrcp.pop %v872
    %v893 = vrcp.pop %v875
    %v894 = vrcp.pop %v878
    %v895 = vrcp.pop %v881
    %v896 = vrcp.pop %v884
    %v897 = vrcp.pop %v887
    %v898 = vrcp.pop %v890
    %v899 = vmul.f32 %v852, %v891
    %v900 = vmul.f32 %v854, %v892
    %v901 = vmul.f32 %v856, %v893
    %v902 = vmul.f32 %v858, %v894
    %v903 = vmul.f32 %v860, %v895
    %v904 = vmul.f32 %v862, %v896
    %v905 = vmul.f32 %v864, %v897
    %v906 = vmul.f32 %v866, %v898
    %v907 = vpack.c.bf16 %v899, %v899
    %v908 = vpack.c.bf16 %v900, %v900
    %v909 = vpack.c.bf16 %v901, %v901
    %v910 = vpack.c.bf16 %v902, %v902
    %v911 = vpack.c.bf16 %v903, %v903
    %v912 = vpack.c.bf16 %v904, %v904
    %v913 = vpack.c.bf16 %v905, %v905
    %v914 = vpack.c.bf16 %v906, %v906
    %v915 = vunpack.c.l.b16 %v636
    %v916 = vpack.c.b16 %v915, %v915
    %917 = vrot.lane.b32.xlu0 %v916, 96
    %v918 = vpop.permute.xlu0 %917
    %v920 = vsel %vm666, %v907, 0
    %vm922 = vcmask 1043456
    %v924 = vsel %vm922, %v918, 0
    %926 = vmatpush.bf16.msra.mxu0 0
    %927 = vmatpush.bf16.msra.mxu0 0
    %928 = vmatpush.bf16.msra.mxu0 0
    %929 = vmatpush.bf16.msra.mxu0 0
    %930 = vmatpush.bf16.msra.mxu0 0
    %931 = vmatpush.bf16.msra.mxu0 0
    %932 = vmatpush.bf16.msra.mxu0 0
    %933 = vmatpush.bf16.msra.mxu0 %v924
    %934 = vmatmul.bf16.gmra.mxu0 %v920
    %v935 = vpop.f32.mrf.mxu0
    %v936 = vadd.f32 0.0, %v935
    %v937 = vpop.f32.mrf.mxu0
    %938 = vdwg.mxu0
    %v939 = vunpack.c.l.b16 %v637
    %v940 = vpack.c.b16 %v939, %v939
    %941 = vrot.lane.b32.xlu0 %v940, 96
    %v942 = vpop.permute.xlu0 %941
    %v944 = vsel %vm666, %v908, 0
    %v947 = vsel %vm922, %v942, 0
    %949 = vmatpush.bf16.msra.mxu0 0
    %950 = vmatpush.bf16.msra.mxu0 0
    %951 = vmatpush.bf16.msra.mxu0 0
    %952 = vmatpush.bf16.msra.mxu0 0
    %953 = vmatpush.bf16.msra.mxu0 0
    %954 = vmatpush.bf16.msra.mxu0 0
    %955 = vmatpush.bf16.msra.mxu0 0
    %956 = vmatpush.bf16.msra.mxu0 %v947
    %957 = vmatmul.bf16.gmra.mxu0 %v944
    %v958 = vpop.f32.mrf.mxu0
    %v959 = vadd.f32 0.0, %v958
    %v960 = vpop.f32.mrf.mxu0
    %961 = vdwg.mxu0
    %v962 = vunpack.c.l.b16 %v655
    %v963 = vpack.c.b16 %v962, %v962
    %964 = vrot.lane.b32.xlu0 %v963, 96
    %v965 = vpop.permute.xlu0 %964
    %v967 = vsel %vm666, %v909, 0
    %v970 = vsel %vm922, %v965, 0
    %972 = vmatpush.bf16.msra.mxu0 0
    %973 = vmatpush.bf16.msra.mxu0 0
    %974 = vmatpush.bf16.msra.mxu0 0
    %975 = vmatpush.bf16.msra.mxu0 0
    %976 = vmatpush.bf16.msra.mxu0 0
    %977 = vmatpush.bf16.msra.mxu0 0
    %978 = vmatpush.bf16.msra.mxu0 0
    %979 = vmatpush.bf16.msra.mxu0 %v970
    %980 = vmatmul.bf16.gmra.mxu0 %v967
    %v981 = vpop.f32.mrf.mxu0
    %v982 = vadd.f32 0.0, %v981
    %v983 = vpop.f32.mrf.mxu0
    %984 = vdwg.mxu0
    %v985 = vunpack.c.l.b16 %v657
    %v986 = vpack.c.b16 %v985, %v985
    %987 = vrot.lane.b32.xlu0 %v986, 96
    %v988 = vpop.permute.xlu0 %987
    %v990 = vsel %vm666, %v910, 0
    %v993 = vsel %vm922, %v988, 0
    %995 = vmatpush.bf16.msra.mxu0 0
    %996 = vmatpush.bf16.msra.mxu0 0
    %997 = vmatpush.bf16.msra.mxu0 0
    %998 = vmatpush.bf16.msra.mxu0 0
    %999 = vmatpush.bf16.msra.mxu0 0
    %1000 = vmatpush.bf16.msra.mxu0 0
    %1001 = vmatpush.bf16.msra.mxu0 0
    %1002 = vmatpush.bf16.msra.mxu0 %v993
    %1003 = vmatmul.bf16.gmra.mxu0 %v990
    %v1004 = vpop.f32.mrf.mxu0
    %v1005 = vadd.f32 0.0, %v1004
    %v1006 = vpop.f32.mrf.mxu0
    %1007 = vdwg.mxu0
    %v1008 = vunpack.c.l.b16 %v659
    %v1009 = vpack.c.b16 %v1008, %v1008
    %1010 = vrot.lane.b32.xlu0 %v1009, 96
    %v1011 = vpop.permute.xlu0 %1010
    %v1013 = vsel %vm666, %v911, 0
    %v1016 = vsel %vm922, %v1011, 0
    %1018 = vmatpush.bf16.msra.mxu0 0
    %1019 = vmatpush.bf16.msra.mxu0 0
    %1020 = vmatpush.bf16.msra.mxu0 0
    %1021 = vmatpush.bf16.msra.mxu0 0
    %1022 = vmatpush.bf16.msra.mxu0 0
    %1023 = vmatpush.bf16.msra.mxu0 0
    %1024 = vmatpush.bf16.msra.mxu0 0
    %1025 = vmatpush.bf16.msra.mxu0 %v1016
    %1026 = vmatmul.bf16.gmra.mxu0 %v1013
    %v1027 = vpop.f32.mrf.mxu0
    %v1028 = vadd.f32 0.0, %v1027
    %v1029 = vpop.f32.mrf.mxu0
    %1030 = vdwg.mxu0
    %v1031 = vunpack.c.l.b16 %v661
    %v1032 = vpack.c.b16 %v1031, %v1031
    %1033 = vrot.lane.b32.xlu0 %v1032, 96
    %v1034 = vpop.permute.xlu0 %1033
    %v1036 = vsel %vm666, %v912, 0
    %v1039 = vsel %vm922, %v1034, 0
    %1041 = vmatpush.bf16.msra.mxu0 0
    %1042 = vmatpush.bf16.msra.mxu0 0
    %1043 = vmatpush.bf16.msra.mxu0 0
    %1044 = vmatpush.bf16.msra.mxu0 0
    %1045 = vmatpush.bf16.msra.mxu0 0
    %1046 = vmatpush.bf16.msra.mxu0 0
    %1047 = vmatpush.bf16.msra.mxu0 0
    %1048 = vmatpush.bf16.msra.mxu0 %v1039
    %1049 = vmatmul.bf16.gmra.mxu0 %v1036
    %v1050 = vpop.f32.mrf.mxu0
    %v1051 = vadd.f32 0.0, %v1050
    %v1052 = vpop.f32.mrf.mxu0
    %1053 = vdwg.mxu0
    %v1054 = vunpack.c.l.b16 %v663
    %v1055 = vpack.c.b16 %v1054, %v1054
    %1056 = vrot.lane.b32.xlu0 %v1055, 96
    %v1057 = vpop.permute.xlu0 %1056
    %v1059 = vsel %vm666, %v913, 0
    %v1062 = vsel %vm922, %v1057, 0
    %1064 = vmatpush.bf16.msra.mxu0 0
    %1065 = vmatpush.bf16.msra.mxu0 0
    %1066 = vmatpush.bf16.msra.mxu0 0
    %1067 = vmatpush.bf16.msra.mxu0 0
    %1068 = vmatpush.bf16.msra.mxu0 0
    %1069 = vmatpush.bf16.msra.mxu0 0
    %1070 = vmatpush.bf16.msra.mxu0 0
    %1071 = vmatpush.bf16.msra.mxu0 %v1062
    %1072 = vmatmul.bf16.gmra.mxu0 %v1059
    %v1073 = vpop.f32.mrf.mxu0
    %v1074 = vadd.f32 0.0, %v1073
    %v1075 = vpop.f32.mrf.mxu0
    %1076 = vdwg.mxu0
    %v1077 = vunpack.c.l.b16 %v665
    %v1078 = vpack.c.b16 %v1077, %v1077
    %1079 = vrot.lane.b32.xlu0 %v1078, 96
    %v1080 = vpop.permute.xlu0 %1079
    %v1082 = vsel %vm666, %v914, 0
    %v1085 = vsel %vm922, %v1080, 0
    %1087 = vmatpush.bf16.msra.mxu0 0
    %1088 = vmatpush.bf16.msra.mxu0 0
    %1089 = vmatpush.bf16.msra.mxu0 0
    %1090 = vmatpush.bf16.msra.mxu0 0
    %1091 = vmatpush.bf16.msra.mxu0 0
    %1092 = vmatpush.bf16.msra.mxu0 0
    %1093 = vmatpush.bf16.msra.mxu0 0
    %1094 = vmatpush.bf16.msra.mxu0 %v1085
    %1095 = vmatmul.bf16.gmra.mxu0 %v1082
    %v1096 = vpop.f32.mrf.mxu0
    %v1097 = vadd.f32 0.0, %v1096
    %v1098 = vpop.f32.mrf.mxu0
    %1099 = vdwg.mxu0
    %v1100 = vld [vmem:[%s13] sm:$0xf]
    %v1101 = vld [vmem:[%s13 + $0x4] sm:$0xf]
    %v1102 = vld [vmem:[%s13 + $0x8] sm:$0xf]
    %v1103 = vld [vmem:[%s13 + $0xc] sm:$0xf]
    %v1104 = vpack.c.bf16 %v959, %v936
    %v1105 = vpack.c.bf16 %v1005, %v982
    %v1107 = vsel %vm666, %v1105, 0
    %v1110 = vsel %vm922, %v1101, 0
    %1112 = vmatpush.bf16.msra.mxu0 0
    %1113 = vmatpush.bf16.msra.mxu0 0
    %1114 = vmatpush.bf16.msra.mxu0 0
    %1115 = vmatpush.bf16.msra.mxu0 0
    %1116 = vmatpush.bf16.msra.mxu0 0
    %1117 = vmatpush.bf16.msra.mxu0 0
    %1118 = vmatpush.bf16.msra.mxu0 0
    %1119 = vmatpush.bf16.msra.mxu0 %v1110
    %1120 = vmatmul.bf16.gmra.mxu0 %v1107
    %v1121 = vpop.f32.mrf.mxu0
    %v1122 = vadd.f32 0.0, %v1121
    %v1123 = vpop.f32.mrf.mxu0
    %v1124 = vadd.f32 0.0, %v1123
    %1125 = vdwg.mxu0
    %v1127 = vsel %vm666, %v1104, 0
    %v1130 = vsel %vm922, %v1100, 0
    %1132 = vmatpush.bf16.msra.mxu0 0
    %1133 = vmatpush.bf16.msra.mxu0 0
    %1134 = vmatpush.bf16.msra.mxu0 0
    %1135 = vmatpush.bf16.msra.mxu0 0
    %1136 = vmatpush.bf16.msra.mxu0 0
    %1137 = vmatpush.bf16.msra.mxu0 0
    %1138 = vmatpush.bf16.msra.mxu0 0
    %1139 = vmatpush.bf16.msra.mxu0 %v1130
    %1140 = vmatmul.bf16.gmra.mxu0 %v1127
    %v1141 = vpop.f32.mrf.mxu0
    %v1142 = vadd.f32 %v1122, %v1141
    %v1143 = vpop.f32.mrf.mxu0
    %v1144 = vadd.f32 %v1124, %v1143
    %1145 = vdwg.mxu0
    %v1146 = vpack.c.bf16 %v1051, %v1028
    %v1148 = vsel %vm666, %v1146, 0
    %v1151 = vsel %vm922, %v1102, 0
    %1153 = vmatpush.bf16.msra.mxu0 0
    %1154 = vmatpush.bf16.msra.mxu0 0
    %1155 = vmatpush.bf16.msra.mxu0 0
    %1156 = vmatpush.bf16.msra.mxu0 0
    %1157 = vmatpush.bf16.msra.mxu0 0
    %1158 = vmatpush.bf16.msra.mxu0 0
    %1159 = vmatpush.bf16.msra.mxu0 0
    %1160 = vmatpush.bf16.msra.mxu0 %v1151
    %1161 = vmatmul.bf16.gmra.mxu0 %v1148
    %v1162 = vpop.f32.mrf.mxu0
    %v1163 = vadd.f32 0.0, %v1162
    %v1164 = vpop.f32.mrf.mxu0
    %v1165 = vadd.f32 0.0, %v1164
    %1166 = vdwg.mxu0
    %v1167 = vadd.f32 %v1142, %v1163
    %v1168 = vadd.f32 %v1144, %v1165
    %v1169 = vpack.c.bf16 %v1097, %v1074
    %v1171 = vsel %vm666, %v1169, 0
    %v1174 = vsel %vm922, %v1103, 0
    %1176 = vmatpush.bf16.msra.mxu0 0
    %1177 = vmatpush.bf16.msra.mxu0 0
    %1178 = vmatpush.bf16.msra.mxu0 0
    %1179 = vmatpush.bf16.msra.mxu0 0
    %1180 = vmatpush.bf16.msra.mxu0 0
    %1181 = vmatpush.bf16.msra.mxu0 0
    %1182 = vmatpush.bf16.msra.mxu0 0
    %1183 = vmatpush.bf16.msra.mxu0 %v1174
    %1184 = vmatmul.bf16.gmra.mxu0 %v1171
    %v1185 = vpop.f32.mrf.mxu0
    %v1186 = vadd.f32 0.0, %v1185
    %v1187 = vpop.f32.mrf.mxu0
    %v1188 = vadd.f32 0.0, %v1187
    %1189 = vdwg.mxu0
    %v1190 = vadd.f32 %v1167, %v1186
    %v1191 = vadd.f32 %v1168, %v1188
    %v1192 = vld [vmem:[#allocation7] sm:$0x1]
    %v1194 = vperm.slane %v1192, 0
    %v1196 = vadd.f32 %v1190, %v1194
    %v1197 = vadd.f32 %v1191, %v1194
    %v1198 = vadd.f32 %v1196, %v555
    %v1199 = vadd.f32 %v1197, %v556
    %v1200 = vsel %vm582, %v1198, 0.0
    %1201 = vadd.xlane.f32.xlu0 %v1200
    %v1202 = vpop.xlane.xlu0 %1201
    %v1203 = vsel %vm582, %v1199, 0.0
    %1204 = vadd.xlane.f32.xlu0 %v1203
    %v1205 = vpop.xlane.xlu0 %1204
    %v1206 = vrcp.pop 32.0
    %v1207 = vmul.f32 32.0, %v1206
    %v1208 = vsub.f32 1.0, %v1207
    %v1209 = vmul.f32 %v1206, %v1208
    %v1210 = vadd.f32 %v1206, %v1209
    %vm1211 = vweird.f32 %v1206
    %v1212 = vsel %vm1211, %v1206, %v1210
    %v1213 = vmul.f32 %v1202, %v1212
    %v1214 = vmul.f32 %v1205, %v1212
    %v1215 = vmul.f32 %v1198, %v1198
    %v1216 = vmul.f32 %v1199, %v1199
    %v1217 = vsel %vm582, %v1215, 0.0
    %1218 = vadd.xlane.f32.xlu0 %v1217
    %v1219 = vpop.xlane.xlu0 %1218
    %v1220 = vsel %vm582, %v1216, 0.0
    %1221 = vadd.xlane.f32.xlu0 %v1220
    %v1222 = vpop.xlane.xlu0 %1221
    %v1223 = vmul.f32 %v1219, %v1212
    %v1224 = vmul.f32 %v1222, %v1212
    %v1225 = vmul.f32 %v1213, %v1213
    %v1226 = vmul.f32 %v1214, %v1214
    %v1227 = vsub.f32 %v1223, %v1225
    %v1228 = vsub.f32 %v1224, %v1226
    %v1229 = vsub.f32 %v1198, %v1213
    %v1230 = vsub.f32 %v1199, %v1214
    %v1231 = vadd.f32 %v1227, 1e-05
    %v1232 = vadd.f32 %v1228, 1e-05
    %v1233 = vrsqrt.pop %v1231
    %v1234 = vmul.f32 %v1233, %v1231
    %v1235 = vmul.f32 %v1234, %v1233
    %v1236 = vmul.f32 0.5, %v1235
    %v1237 = vsub.f32 1.5, %v1236
    %v1238 = vmul.f32 %v1233, %v1237
    %vm1239 = vweird.f32 %v1231
    %vm1240 = vweird.f32 %v1233
    %vm1241 = vmor %vm1239, %vm1240
    %v1242 = vsel %vm1241, %v1233, %v1238
    %v1243 = vrsqrt.pop %v1232
    %v1244 = vmul.f32 %v1243, %v1232
    %v1245 = vmul.f32 %v1244, %v1243
    %v1246 = vmul.f32 0.5, %v1245
    %v1247 = vsub.f32 1.5, %v1246
    %v1248 = vmul.f32 %v1243, %v1247
    %vm1249 = vweird.f32 %v1232
    %vm1250 = vweird.f32 %v1243
    %vm1251 = vmor %vm1249, %vm1250
    %v1252 = vsel %vm1251, %v1243, %v1248
    %v1253 = vmul.f32 %v1229, %v1242
    %v1254 = vmul.f32 %v1230, %v1252
    %v1256 = vperm.slane %v559, 0
    %v1258 = vmul.f32 %v1253, %v1256
    %v1259 = vmul.f32 %v1254, %v1256
    %v1261 = vperm.slane %v560, 0
    %v1263 = vadd.f32 %v1258, %v1261
    %v1264 = vadd.f32 %v1259, %v1261
    %v1265 = vpack.c.bf16 %v1264, %v1263
    %v1266 = vld [vmem:[%s17] sm:$0xf]
    %v1267 = vld [vmem:[%s17 + $0x4] sm:$0xf]
    %v1268 = vld [vmem:[%s17 + $0x8] sm:$0xf]
    %v1269 = vld [vmem:[%s17 + $0xc] sm:$0xf]
    %v1270 = vld [vmem:[#allocation8] sm:$0x1]
    %v1272 = vperm.slane %v1270, 0
    %v1278 = vunpack.c.l.b16 %v1266
    %v1279 = vunpack.c.l.b16 %v1267
    %v1280 = vunpack.c.l.b16 %v1268
    %v1281 = vunpack.c.l.b16 %v1269
    %v1282 = vpack.c.b16 %v1279, %v1278
    %v1283 = vpack.c.b16 %v1281, %v1280
    %v1287 = vsel %vm582, %v1265, 0
    %1289 = vmatpush.bf16.msra.mxu0 0
    %1290 = vmatpush.bf16.msra.mxu0 0
    %1291 = vmatpush.bf16.msra.mxu0 0
    %1292 = vmatpush.bf16.msra.mxu0 0
    %1293 = vmatpush.bf16.msra.mxu0 0
    %1294 = vmatpush.bf16.msra.mxu0 0
    %1295 = vmatpush.bf16.msra.mxu0 %v1283
    %1296 = vmatpush.bf16.msra.mxu0 %v1282
    %1297 = vmatmul.bf16.gmra.mxu0 %v1287
    %v1298 = vpop.f32.mrf.mxu0
    %v1299 = vadd.f32 %v1272, %v1298
    %v1300 = vpop.f32.mrf.mxu0
    %v1301 = vadd.f32 %v1272, %v1300
    %1302 = vdwg.mxu0
    %v1303 = vpack.c.bf16 %v1299, %v1299
    %v1304 = vpack.c.bf16 %v1301, %v1301
    %v1305 = vpack.c.bf16 %v558, %v557
    %v1306 = vld [vmem:[#allocation10] sm:$0xf]
    %v1307 = vld [vmem:[#allocation10 + $0x4] sm:$0xf]
    %v1308 = vld [vmem:[#allocation10 + $0x8] sm:$0xf]
    %v1309 = vld [vmem:[#allocation10 + $0xc] sm:$0xf]
    %v1310 = vld [vmem:[#allocation11] sm:$0x1]
    %v1312 = vperm.slane %v1310, 0
    %v1318 = vunpack.c.l.b16 %v1306
    %v1319 = vunpack.c.l.b16 %v1307
    %v1320 = vunpack.c.l.b16 %v1308
    %v1321 = vunpack.c.l.b16 %v1309
    %v1322 = vpack.c.b16 %v1319, %v1318
    %v1323 = vpack.c.b16 %v1321, %v1320
    %v1327 = vsel %vm582, %v1305, 0
    %1329 = vmatpush.bf16.msra.mxu0 0
    %1330 = vmatpush.bf16.msra.mxu0 0
    %1331 = vmatpush.bf16.msra.mxu0 0
    %1332 = vmatpush.bf16.msra.mxu0 0
    %1333 = vmatpush.bf16.msra.mxu0 0
    %1334 = vmatpush.bf16.msra.mxu0 0
    %1335 = vmatpush.bf16.msra.mxu0 %v1323
    %1336 = vmatpush.bf16.msra.mxu0 %v1322
    %1337 = vmatmul.bf16.gmra.mxu0 %v1327
    %v1338 = vpop.f32.mrf.mxu0
    %v1339 = vadd.f32 %v1312, %v1338
    %v1340 = vpop.f32.mrf.mxu0
    %v1341 = vadd.f32 %v1312, %v1340
    %1342 = vdwg.mxu0
    %v1343 = vpack.c.bf16 %v1339, %v1339
    %v1344 = vpack.c.bf16 %v1341, %v1341
    %1347 = vrot.lane.b32.xlu0 %v1303, 120
    %v1348 = vpop.permute.xlu0 %1347
    %1349 = vrot.lane.b32.xlu0 %v1304, 120
    %v1350 = vpop.permute.xlu0 %1349
    %1351 = vrot.lane.b32.xlu0 %v1303, 112
    %v1352 = vpop.permute.xlu0 %1351
    %1353 = vrot.lane.b32.xlu0 %v1304, 112
    %v1354 = vpop.permute.xlu0 %1353
    %1355 = vrot.lane.b32.xlu0 %v1303, 104
    %v1356 = vpop.permute.xlu0 %1355
    %1357 = vrot.lane.b32.xlu0 %v1304, 104
    %v1358 = vpop.permute.xlu0 %1357
    %1361 = vrot.lane.b32.xlu0 %v1343, 120
    %v1362 = vpop.permute.xlu0 %1361
    %1363 = vrot.lane.b32.xlu0 %v1344, 120
    %v1364 = vpop.permute.xlu0 %1363
    %1365 = vrot.lane.b32.xlu0 %v1343, 112
    %v1366 = vpop.permute.xlu0 %1365
    %1367 = vrot.lane.b32.xlu0 %v1344, 112
    %v1368 = vpop.permute.xlu0 %1367
    %1369 = vrot.lane.b32.xlu0 %v1343, 104
    %v1370 = vpop.permute.xlu0 %1369
    %1371 = vrot.lane.b32.xlu0 %v1344, 104
    %v1372 = vpop.permute.xlu0 %1371
    %v1374 = vsel %vm666, %v1303, 0
    %v1377 = vsel %vm666, %v1343, 0
    %1379 = vmatpush.bf16.xpose.msra.mxu0 0
    %1380 = vmatpush.bf16.xpose.msra.mxu0 0
    %1381 = vmatpush.bf16.xpose.msra.mxu0 0
    %1382 = vmatpush.bf16.xpose.msra.mxu0 0
    %1383 = vmatpush.bf16.xpose.msra.mxu0 0
    %1384 = vmatpush.bf16.xpose.msra.mxu0 0
    %1385 = vmatpush.bf16.xpose.msra.mxu0 0
    %1386 = vmatpush.bf16.xpose.msra.mxu0 %v1377
    %1387 = vmatmul.bf16.gmra.mxu0 %v1374
    %v1388 = vpop.f32.mrf.mxu0
    %v1389 = vadd.f32 0.0, %v1388
    %v1390 = vpop.f32.mrf.mxu0
    %1391 = vdwg.mxu0
    %v1393 = vsel %vm666, %v1304, 0
    %v1396 = vsel %vm666, %v1344, 0
    %1398 = vmatpush.bf16.xpose.msra.mxu0 0
    %1399 = vmatpush.bf16.xpose.msra.mxu0 0
    %1400 = vmatpush.bf16.xpose.msra.mxu0 0
    %1401 = vmatpush.bf16.xpose.msra.mxu0 0
    %1402 = vmatpush.bf16.xpose.msra.mxu0 0
    %1403 = vmatpush.bf16.xpose.msra.mxu0 0
    %1404 = vmatpush.bf16.xpose.msra.mxu0 0
    %1405 = vmatpush.bf16.xpose.msra.mxu0 %v1396
    %1406 = vmatmul.bf16.gmra.mxu0 %v1393
    %v1407 = vpop.f32.mrf.mxu0
    %v1408 = vadd.f32 0.0, %v1407
    %v1409 = vpop.f32.mrf.mxu0
    %1410 = vdwg.mxu0
    %v1412 = vsel %vm666, %v1348, 0
    %v1415 = vsel %vm666, %v1362, 0
    %1417 = vmatpush.bf16.xpose.msra.mxu0 0
    %1418 = vmatpush.bf16.xpose.msra.mxu0 0
    %1419 = vmatpush.bf16.xpose.msra.mxu0 0
    %1420 = vmatpush.bf16.xpose.msra.mxu0 0
    %1421 = vmatpush.bf16.xpose.msra.mxu0 0
    %1422 = vmatpush.bf16.xpose.msra.mxu0 0
    %1423 = vmatpush.bf16.xpose.msra.mxu0 0
    %1424 = vmatpush.bf16.xpose.msra.mxu0 %v1415
    %1425 = vmatmul.bf16.gmra.mxu0 %v1412
    %v1426 = vpop.f32.mrf.mxu0
    %v1427 = vadd.f32 0.0, %v1426
    %v1428 = vpop.f32.mrf.mxu0
    %1429 = vdwg.mxu0
    %v1431 = vsel %vm666, %v1350, 0
    %v1434 = vsel %vm666, %v1364, 0
    %1436 = vmatpush.bf16.xpose.msra.mxu0 0
    %1437 = vmatpush.bf16.xpose.msra.mxu0 0
    %1438 = vmatpush.bf16.xpose.msra.mxu0 0
    %1439 = vmatpush.bf16.xpose.msra.mxu0 0
    %1440 = vmatpush.bf16.xpose.msra.mxu0 0
    %1441 = vmatpush.bf16.xpose.msra.mxu0 0
    %1442 = vmatpush.bf16.xpose.msra.mxu0 0
    %1443 = vmatpush.bf16.xpose.msra.mxu0 %v1434
    %1444 = vmatmul.bf16.gmra.mxu0 %v1431
    %v1445 = vpop.f32.mrf.mxu0
    %v1446 = vadd.f32 0.0, %v1445
    %v1447 = vpop.f32.mrf.mxu0
    %1448 = vdwg.mxu0
    %v1450 = vsel %vm666, %v1352, 0
    %v1453 = vsel %vm666, %v1366, 0
    %1455 = vmatpush.bf16.xpose.msra.mxu0 0
    %1456 = vmatpush.bf16.xpose.msra.mxu0 0
    %1457 = vmatpush.bf16.xpose.msra.mxu0 0
    %1458 = vmatpush.bf16.xpose.msra.mxu0 0
    %1459 = vmatpush.bf16.xpose.msra.mxu0 0
    %1460 = vmatpush.bf16.xpose.msra.mxu0 0
    %1461 = vmatpush.bf16.xpose.msra.mxu0 0
    %1462 = vmatpush.bf16.xpose.msra.mxu0 %v1453
    %1463 = vmatmul.bf16.gmra.mxu0 %v1450
    %v1464 = vpop.f32.mrf.mxu0
    %v1465 = vadd.f32 0.0, %v1464
    %v1466 = vpop.f32.mrf.mxu0
    %1467 = vdwg.mxu0
    %v1469 = vsel %vm666, %v1354, 0
    %v1472 = vsel %vm666, %v1368, 0
    %1474 = vmatpush.bf16.xpose.msra.mxu0 0
    %1475 = vmatpush.bf16.xpose.msra.mxu0 0
    %1476 = vmatpush.bf16.xpose.msra.mxu0 0
    %1477 = vmatpush.bf16.xpose.msra.mxu0 0
    %1478 = vmatpush.bf16.xpose.msra.mxu0 0
    %1479 = vmatpush.bf16.xpose.msra.mxu0 0
    %1480 = vmatpush.bf16.xpose.msra.mxu0 0
    %1481 = vmatpush.bf16.xpose.msra.mxu0 %v1472
    %1482 = vmatmul.bf16.gmra.mxu0 %v1469
    %v1483 = vpop.f32.mrf.mxu0
    %v1484 = vadd.f32 0.0, %v1483
    %v1485 = vpop.f32.mrf.mxu0
    %1486 = vdwg.mxu0
    %v1488 = vsel %vm666, %v1356, 0
    %v1491 = vsel %vm666, %v1370, 0
    %1493 = vmatpush.bf16.xpose.msra.mxu0 0
    %1494 = vmatpush.bf16.xpose.msra.mxu0 0
    %1495 = vmatpush.bf16.xpose.msra.mxu0 0
    %1496 = vmatpush.bf16.xpose.msra.mxu0 0
    %1497 = vmatpush.bf16.xpose.msra.mxu0 0
    %1498 = vmatpush.bf16.xpose.msra.mxu0 0
    %1499 = vmatpush.bf16.xpose.msra.mxu0 0
    %1500 = vmatpush.bf16.xpose.msra.mxu0 %v1491
    %1501 = vmatmul.bf16.gmra.mxu0 %v1488
    %v1502 = vpop.f32.mrf.mxu0
    %v1503 = vadd.f32 0.0, %v1502
    %v1504 = vpop.f32.mrf.mxu0
    %1505 = vdwg.mxu0
    %v1507 = vsel %vm666, %v1358, 0
    %v1510 = vsel %vm666, %v1372, 0
    %1512 = vmatpush.bf16.xpose.msra.mxu0 0
    %1513 = vmatpush.bf16.xpose.msra.mxu0 0
    %1514 = vmatpush.bf16.xpose.msra.mxu0 0
    %1515 = vmatpush.bf16.xpose.msra.mxu0 0
    %1516 = vmatpush.bf16.xpose.msra.mxu0 0
    %1517 = vmatpush.bf16.xpose.msra.mxu0 0
    %1518 = vmatpush.bf16.xpose.msra.mxu0 0
    %1519 = vmatpush.bf16.xpose.msra.mxu0 %v1510
    %1520 = vmatmul.bf16.gmra.mxu0 %v1507
    %v1521 = vpop.f32.mrf.mxu0
    %v1522 = vadd.f32 0.0, %v1521
    %v1523 = vpop.f32.mrf.mxu0
    %1524 = vdwg.mxu0
    %v1525 = vsel %vm666, %v1389, -inf
    %1526 = vmax.xlane.f32.xlu0 %v1525
    %v1527 = vpop.xlane.xlu0 %1526
    %v1528 = vsel %vm666, %v1408, -inf
    %1529 = vmax.xlane.f32.xlu0 %v1528
    %v1530 = vpop.xlane.xlu0 %1529
    %v1531 = vsel %vm666, %v1427, -inf
    %1532 = vmax.xlane.f32.xlu0 %v1531
    %v1533 = vpop.xlane.xlu0 %1532
    %v1534 = vsel %vm666, %v1446, -inf
    %1535 = vmax.xlane.f32.xlu0 %v1534
    %v1536 = vpop.xlane.xlu0 %1535
    %v1537 = vsel %vm666, %v1465, -inf
    %1538 = vmax.xlane.f32.xlu0 %v1537
    %v1539 = vpop.xlane.xlu0 %1538
    %v1540 = vsel %vm666, %v1484, -inf
    %1541 = vmax.xlane.f32.xlu0 %v1540
    %v1542 = vpop.xlane.xlu0 %1541
    %v1543 = vsel %vm666, %v1503, -inf
    %1544 = vmax.xlane.f32.xlu0 %v1543
    %v1545 = vpop.xlane.xlu0 %1544
    %v1546 = vsel %vm666, %v1522, -inf
    %1547 = vmax.xlane.f32.xlu0 %v1546
    %v1548 = vpop.xlane.xlu0 %1547
    %v1549 = vsub.f32 %v1389, %v1527
    %v1550 = vsub.f32 %v1408, %v1530
    %v1551 = vsub.f32 %v1427, %v1533
    %v1552 = vsub.f32 %v1446, %v1536
    %v1553 = vsub.f32 %v1465, %v1539
    %v1554 = vsub.f32 %v1484, %v1542
    %v1555 = vsub.f32 %v1503, %v1545
    %v1556 = vsub.f32 %v1522, %v1548
    %v1557 = vmul.f32 %v1549, 1.442695
    %v1558 = vpow.pop %v1557
    %v1559 = vmul.f32 %v1550, 1.442695
    %v1560 = vpow.pop %v1559
    %v1561 = vmul.f32 %v1551, 1.442695
    %v1562 = vpow.pop %v1561
    %v1563 = vmul.f32 %v1552, 1.442695
    %v1564 = vpow.pop %v1563
    %v1565 = vmul.f32 %v1553, 1.442695
    %v1566 = vpow.pop %v1565
    %v1567 = vmul.f32 %v1554, 1.442695
    %v1568 = vpow.pop %v1567
    %v1569 = vmul.f32 %v1555, 1.442695
    %v1570 = vpow.pop %v1569
    %v1571 = vmul.f32 %v1556, 1.442695
    %v1572 = vpow.pop %v1571
    %v1573 = vsel %vm666, %v1558, 0.0
    %1574 = vadd.xlane.f32.xlu0 %v1573
    %v1575 = vpop.xlane.xlu0 %1574
    %v1576 = vsel %vm666, %v1560, 0.0
    %1577 = vadd.xlane.f32.xlu0 %v1576
    %v1578 = vpop.xlane.xlu0 %1577
    %v1579 = vsel %vm666, %v1562, 0.0
    %1580 = vadd.xlane.f32.xlu0 %v1579
    %v1581 = vpop.xlane.xlu0 %1580
    %v1582 = vsel %vm666, %v1564, 0.0
    %1583 = vadd.xlane.f32.xlu0 %v1582
    %v1584 = vpop.xlane.xlu0 %1583
    %v1585 = vsel %vm666, %v1566, 0.0
    %1586 = vadd.xlane.f32.xlu0 %v1585
    %v1587 = vpop.xlane.xlu0 %1586
    %v1588 = vsel %vm666, %v1568, 0.0
    %1589 = vadd.xlane.f32.xlu0 %v1588
    %v1590 = vpop.xlane.xlu0 %1589
    %v1591 = vsel %vm666, %v1570, 0.0
    %1592 = vadd.xlane.f32.xlu0 %v1591
    %v1593 = vpop.xlane.xlu0 %1592
    %v1594 = vsel %vm666, %v1572, 0.0
    %1595 = vadd.xlane.f32.xlu0 %v1594
    %v1596 = vpop.xlane.xlu0 %1595
    %v1597 = vrcp.pop %v1575
    %v1598 = vrcp.pop %v1578
    %v1599 = vrcp.pop %v1581
    %v1600 = vrcp.pop %v1584
    %v1601 = vrcp.pop %v1587
    %v1602 = vrcp.pop %v1590
    %v1603 = vrcp.pop %v1593
    %v1604 = vrcp.pop %v1596
    %v1605 = vmul.f32 %v1558, %v1597
    %v1606 = vmul.f32 %v1560, %v1598
    %v1607 = vmul.f32 %v1562, %v1599
    %v1608 = vmul.f32 %v1564, %v1600
    %v1609 = vmul.f32 %v1566, %v1601
    %v1610 = vmul.f32 %v1568, %v1602
    %v1611 = vmul.f32 %v1570, %v1603
    %v1612 = vmul.f32 %v1572, %v1604
    %v1613 = vpack.c.bf16 %v1605, %v1605
    %v1614 = vpack.c.bf16 %v1606, %v1606
    %v1615 = vpack.c.bf16 %v1607, %v1607
    %v1616 = vpack.c.bf16 %v1608, %v1608
    %v1617 = vpack.c.bf16 %v1609, %v1609
    %v1618 = vpack.c.bf16 %v1610, %v1610
    %v1619 = vpack.c.bf16 %v1611, %v1611
    %v1620 = vpack.c.bf16 %v1612, %v1612
    %v1621 = vunpack.c.l.b16 %v1343
    %v1622 = vpack.c.b16 %v1621, %v1621
    %1623 = vrot.lane.b32.xlu0 %v1622, 96
    %v1624 = vpop.permute.xlu0 %1623
    %v1626 = vsel %vm666, %v1613, 0
    %v1629 = vsel %vm922, %v1624, 0
    %1631 = vmatpush.bf16.msra.mxu0 0
    %1632 = vmatpush.bf16.msra.mxu0 0
    %1633 = vmatpush.bf16.msra.mxu0 0
    %1634 = vmatpush.bf16.msra.mxu0 0
    %1635 = vmatpush.bf16.msra.mxu0 0
    %1636 = vmatpush.bf16.msra.mxu0 0
    %1637 = vmatpush.bf16.msra.mxu0 0
    %1638 = vmatpush.bf16.msra.mxu0 %v1629
    %1639 = vmatmul.bf16.gmra.mxu0 %v1626
    %v1640 = vpop.f32.mrf.mxu0
    %v1641 = vadd.f32 0.0, %v1640
    %v1642 = vpop.f32.mrf.mxu0
    %1643 = vdwg.mxu0
    %v1644 = vunpack.c.l.b16 %v1344
    %v1645 = vpack.c.b16 %v1644, %v1644
    %1646 = vrot.lane.b32.xlu0 %v1645, 96
    %v1647 = vpop.permute.xlu0 %1646
    %v1649 = vsel %vm666, %v1614, 0
    %v1652 = vsel %vm922, %v1647, 0
    %1654 = vmatpush.bf16.msra.mxu0 0
    %1655 = vmatpush.bf16.msra.mxu0 0
    %1656 = vmatpush.bf16.msra.mxu0 0
    %1657 = vmatpush.bf16.msra.mxu0 0
    %1658 = vmatpush.bf16.msra.mxu0 0
    %1659 = vmatpush.bf16.msra.mxu0 0
    %1660 = vmatpush.bf16.msra.mxu0 0
    %1661 = vmatpush.bf16.msra.mxu0 %v1652
    %1662 = vmatmul.bf16.gmra.mxu0 %v1649
    %v1663 = vpop.f32.mrf.mxu0
    %v1664 = vadd.f32 0.0, %v1663
    %v1665 = vpop.f32.mrf.mxu0
    %1666 = vdwg.mxu0
    %v1667 = vunpack.c.l.b16 %v1362
    %v1668 = vpack.c.b16 %v1667, %v1667
    %1669 = vrot.lane.b32.xlu0 %v1668, 96
    %v1670 = vpop.permute.xlu0 %1669
    %v1672 = vsel %vm666, %v1615, 0
    %v1675 = vsel %vm922, %v1670, 0
    %1677 = vmatpush.bf16.msra.mxu0 0
    %1678 = vmatpush.bf16.msra.mxu0 0
    %1679 = vmatpush.bf16.msra.mxu0 0
    %1680 = vmatpush.bf16.msra.mxu0 0
    %1681 = vmatpush.bf16.msra.mxu0 0
    %1682 = vmatpush.bf16.msra.mxu0 0
    %1683 = vmatpush.bf16.msra.mxu0 0
    %1684 = vmatpush.bf16.msra.mxu0 %v1675
    %1685 = vmatmul.bf16.gmra.mxu0 %v1672
    %v1686 = vpop.f32.mrf.mxu0
    %v1687 = vadd.f32 0.0, %v1686
    %v1688 = vpop.f32.mrf.mxu0
    %1689 = vdwg.mxu0
    %v1690 = vunpack.c.l.b16 %v1364
    %v1691 = vpack.c.b16 %v1690, %v1690
    %1692 = vrot.lane.b32.xlu0 %v1691, 96
    %v1693 = vpop.permute.xlu0 %1692
    %v1695 = vsel %vm666, %v1616, 0
    %v1698 = vsel %vm922, %v1693, 0
    %1700 = vmatpush.bf16.msra.mxu0 0
    %1701 = vmatpush.bf16.msra.mxu0 0
    %1702 = vmatpush.bf16.msra.mxu0 0
    %1703 = vmatpush.bf16.msra.mxu0 0
    %1704 = vmatpush.bf16.msra.mxu0 0
    %1705 = vmatpush.bf16.msra.mxu0 0
    %1706 = vmatpush.bf16.msra.mxu0 0
    %1707 = vmatpush.bf16.msra.mxu0 %v1698
    %1708 = vmatmul.bf16.gmra.mxu0 %v1695
    %v1709 = vpop.f32.mrf.mxu0
    %v1710 = vadd.f32 0.0, %v1709
    %v1711 = vpop.f32.mrf.mxu0
    %1712 = vdwg.mxu0
    %v1713 = vunpack.c.l.b16 %v1366
    %v1714 = vpack.c.b16 %v1713, %v1713
    %1715 = vrot.lane.b32.xlu0 %v1714, 96
    %v1716 = vpop.permute.xlu0 %1715
    %v1718 = vsel %vm666, %v1617, 0
    %v1721 = vsel %vm922, %v1716, 0
    %1723 = vmatpush.bf16.msra.mxu0 0
    %1724 = vmatpush.bf16.msra.mxu0 0
    %1725 = vmatpush.bf16.msra.mxu0 0
    %1726 = vmatpush.bf16.msra.mxu0 0
    %1727 = vmatpush.bf16.msra.mxu0 0
    %1728 = vmatpush.bf16.msra.mxu0 0
    %1729 = vmatpush.bf16.msra.mxu0 0
    %1730 = vmatpush.bf16.msra.mxu0 %v1721
    %1731 = vmatmul.bf16.gmra.mxu0 %v1718
    %v1732 = vpop.f32.mrf.mxu0
    %v1733 = vadd.f32 0.0, %v1732
    %v1734 = vpop.f32.mrf.mxu0
    %1735 = vdwg.mxu0
    %v1736 = vunpack.c.l.b16 %v1368
    %v1737 = vpack.c.b16 %v1736, %v1736
    %1738 = vrot.lane.b32.xlu0 %v1737, 96
    %v1739 = vpop.permute.xlu0 %1738
    %v1741 = vsel %vm666, %v1618, 0
    %v1744 = vsel %vm922, %v1739, 0
    %1746 = vmatpush.bf16.msra.mxu0 0
    %1747 = vmatpush.bf16.msra.mxu0 0
    %1748 = vmatpush.bf16.msra.mxu0 0
    %1749 = vmatpush.bf16.msra.mxu0 0
    %1750 = vmatpush.bf16.msra.mxu0 0
    %1751 = vmatpush.bf16.msra.mxu0 0
    %1752 = vmatpush.bf16.msra.mxu0 0
    %1753 = vmatpush.bf16.msra.mxu0 %v1744
    %1754 = vmatmul.bf16.gmra.mxu0 %v1741
    %v1755 = vpop.f32.mrf.mxu0
    %v1756 = vadd.f32 0.0, %v1755
    %v1757 = vpop.f32.mrf.mxu0
    %1758 = vdwg.mxu0
    %v1759 = vunpack.c.l.b16 %v1370
    %v1760 = vpack.c.b16 %v1759, %v1759
    %1761 = vrot.lane.b32.xlu0 %v1760, 96
    %v1762 = vpop.permute.xlu0 %1761
    %v1764 = vsel %vm666, %v1619, 0
    %v1767 = vsel %vm922, %v1762, 0
    %1769 = vmatpush.bf16.msra.mxu0 0
    %1770 = vmatpush.bf16.msra.mxu0 0
    %1771 = vmatpush.bf16.msra.mxu0 0
    %1772 = vmatpush.bf16.msra.mxu0 0
    %1773 = vmatpush.bf16.msra.mxu0 0
    %1774 = vmatpush.bf16.msra.mxu0 0
    %1775 = vmatpush.bf16.msra.mxu0 0
    %1776 = vmatpush.bf16.msra.mxu0 %v1767
    %1777 = vmatmul.bf16.gmra.mxu0 %v1764
    %v1778 = vpop.f32.mrf.mxu0
    %v1779 = vadd.f32 0.0, %v1778
    %v1780 = vpop.f32.mrf.mxu0
    %1781 = vdwg.mxu0
    %v1782 = vunpack.c.l.b16 %v1372
    %v1783 = vpack.c.b16 %v1782, %v1782
    %1784 = vrot.lane.b32.xlu0 %v1783, 96
    %v1785 = vpop.permute.xlu0 %1784
    %v1787 = vsel %vm666, %v1620, 0
    %v1790 = vsel %vm922, %v1785, 0
    %1792 = vmatpush.bf16.msra.mxu0 0
    %1793 = vmatpush.bf16.msra.mxu0 0
    %1794 = vmatpush.bf16.msra.mxu0 0
    %1795 = vmatpush.bf16.msra.mxu0 0
    %1796 = vmatpush.bf16.msra.mxu0 0
    %1797 = vmatpush.bf16.msra.mxu0 0
    %1798 = vmatpush.bf16.msra.mxu0 0
    %1799 = vmatpush.bf16.msra.mxu0 %v1790
    %1800 = vmatmul.bf16.gmra.mxu0 %v1787
    %v1801 = vpop.f32.mrf.mxu0
    %v1802 = vadd.f32 0.0, %v1801
    %v1803 = vpop.f32.mrf.mxu0
    %1804 = vdwg.mxu0
    %v1805 = vld [vmem:[#allocation13] sm:$0xf]
    %v1806 = vld [vmem:[#allocation13 + $0x4] sm:$0xf]
    %v1807 = vld [vmem:[#allocation13 + $0x8] sm:$0xf]
    %v1808 = vld [vmem:[#allocation13 + $0xc] sm:$0xf]
    %v1809 = vpack.c.bf16 %v1664, %v1641
    %v1810 = vpack.c.bf16 %v1710, %v1687
    %v1812 = vsel %vm666, %v1810, 0
    %v1815 = vsel %vm922, %v1806, 0
    %1817 = vmatpush.bf16.msra.mxu0 0
    %1818 = vmatpush.bf16.msra.mxu0 0
    %1819 = vmatpush.bf16.msra.mxu0 0
    %1820 = vmatpush.bf16.msra.mxu0 0
    %1821 = vmatpush.bf16.msra.mxu0 0
    %1822 = vmatpush.bf16.msra.mxu0 0
    %1823 = vmatpush.bf16.msra.mxu0 0
    %1824 = vmatpush.bf16.msra.mxu0 %v1815
    %1825 = vmatmul.bf16.gmra.mxu0 %v1812
    %v1826 = vpop.f32.mrf.mxu0
    %v1827 = vadd.f32 0.0, %v1826
    %v1828 = vpop.f32.mrf.mxu0
    %v1829 = vadd.f32 0.0, %v1828
    %1830 = vdwg.mxu0
    %v1832 = vsel %vm666, %v1809, 0
    %v1835 = vsel %vm922, %v1805, 0
    %1837 = vmatpush.bf16.msra.mxu0 0
    %1838 = vmatpush.bf16.msra.mxu0 0
    %1839 = vmatpush.bf16.msra.mxu0 0
    %1840 = vmatpush.bf16.msra.mxu0 0
    %1841 = vmatpush.bf16.msra.mxu0 0
    %1842 = vmatpush.bf16.msra.mxu0 0
    %1843 = vmatpush.bf16.msra.mxu0 0
    %1844 = vmatpush.bf16.msra.mxu0 %v1835
    %1845 = vmatmul.bf16.gmra.mxu0 %v1832
    %v1846 = vpop.f32.mrf.mxu0
    %v1847 = vadd.f32 %v1827, %v1846
    %v1848 = vpop.f32.mrf.mxu0
    %v1849 = vadd.f32 %v1829, %v1848
    %1850 = vdwg.mxu0
    %v1851 = vpack.c.bf16 %v1756, %v1733
    %v1853 = vsel %vm666, %v1851, 0
    %v1856 = vsel %vm922, %v1807, 0
    %1858 = vmatpush.bf16.msra.mxu0 0
    %1859 = vmatpush.bf16.msra.mxu0 0
    %1860 = vmatpush.bf16.msra.mxu0 0
    %1861 = vmatpush.bf16.msra.mxu0 0
    %1862 = vmatpush.bf16.msra.mxu0 0
    %1863 = vmatpush.bf16.msra.mxu0 0
    %1864 = vmatpush.bf16.msra.mxu0 0
    %1865 = vmatpush.bf16.msra.mxu0 %v1856
    %1866 = vmatmul.bf16.gmra.mxu0 %v1853
    %v1867 = vpop.f32.mrf.mxu0
    %v1868 = vadd.f32 0.0, %v1867
    %v1869 = vpop.f32.mrf.mxu0
    %v1870 = vadd.f32 0.0, %v1869
    %1871 = vdwg.mxu0
    %v1872 = vadd.f32 %v1847, %v1868
    %v1873 = vadd.f32 %v1849, %v1870
    %v1874 = vpack.c.bf16 %v1802, %v1779
    %v1876 = vsel %vm666, %v1874, 0
    %v1879 = vsel %vm922, %v1808, 0
    %1881 = vmatpush.bf16.msra.mxu0 0
    %1882 = vmatpush.bf16.msra.mxu0 0
    %1883 = vmatpush.bf16.msra.mxu0 0
    %1884 = vmatpush.bf16.msra.mxu0 0
    %1885 = vmatpush.bf16.msra.mxu0 0
    %1886 = vmatpush.bf16.msra.mxu0 0
    %1887 = vmatpush.bf16.msra.mxu0 0
    %1888 = vmatpush.bf16.msra.mxu0 %v1879
    %1889 = vmatmul.bf16.gmra.mxu0 %v1876
    %v1890 = vpop.f32.mrf.mxu0
    %v1891 = vadd.f32 0.0, %v1890
    %v1892 = vpop.f32.mrf.mxu0
    %v1893 = vadd.f32 0.0, %v1892
    %1894 = vdwg.mxu0
    %v1895 = vadd.f32 %v1872, %v1891
    %v1896 = vadd.f32 %v1873, %v1893
    %v1897 = vld [vmem:[#allocation14] sm:$0x1]
    %v1899 = vperm.slane %v1897, 0
    %v1901 = vadd.f32 %v1895, %v1899
    %v1902 = vadd.f32 %v1896, %v1899
    %v1903 = vadd.f32 %v1901, %v1263
    %v1904 = vadd.f32 %v1902, %v1264
    %v1905 = vsel %vm582, %v1903, 0.0
    %1906 = vadd.xlane.f32.xlu0 %v1905
    %v1907 = vpop.xlane.xlu0 %1906
    %v1908 = vsel %vm582, %v1904, 0.0
    %1909 = vadd.xlane.f32.xlu0 %v1908
    %v1910 = vpop.xlane.xlu0 %1909
    %v1911 = vmul.f32 %v1907, %v1212
    %v1912 = vmul.f32 %v1910, %v1212
    %v1913 = vmul.f32 %v1903, %v1903
    %v1914 = vmul.f32 %v1904, %v1904
    %v1915 = vsel %vm582, %v1913, 0.0
    %1916 = vadd.xlane.f32.xlu0 %v1915
    %v1917 = vpop.xlane.xlu0 %1916
    %v1918 = vsel %vm582, %v1914, 0.0
    %1919 = vadd.xlane.f32.xlu0 %v1918
    %v1920 = vpop.xlane.xlu0 %1919
    %v1921 = vmul.f32 %v1917, %v1212
    %v1922 = vmul.f32 %v1920, %v1212
    %v1923 = vmul.f32 %v1911, %v1911
    %v1924 = vmul.f32 %v1912, %v1912
    %v1925 = vsub.f32 %v1921, %v1923
    %v1926 = vsub.f32 %v1922, %v1924
    %v1927 = vsub.f32 %v1903, %v1911
    %v1928 = vsub.f32 %v1904, %v1912
    %v1929 = vadd.f32 %v1925, 1e-05
    %v1930 = vadd.f32 %v1926, 1e-05
    %v1931 = vrsqrt.pop %v1929
    %v1932 = vmul.f32 %v1931, %v1929
    %v1933 = vmul.f32 %v1932, %v1931
    %v1934 = vmul.f32 0.5, %v1933
    %v1935 = vsub.f32 1.5, %v1934
    %v1936 = vmul.f32 %v1931, %v1935
    %vm1937 = vweird.f32 %v1929
    %vm1938 = vweird.f32 %v1931
    %vm1939 = vmor %vm1937, %vm1938
    %v1940 = vsel %vm1939, %v1931, %v1936
    %v1941 = vrsqrt.pop %v1930
    %v1942 = vmul.f32 %v1941, %v1930
    %v1943 = vmul.f32 %v1942, %v1941
    %v1944 = vmul.f32 0.5, %v1943
    %v1945 = vsub.f32 1.5, %v1944
    %v1946 = vmul.f32 %v1941, %v1945
    %vm1947 = vweird.f32 %v1930
    %vm1948 = vweird.f32 %v1941
    %vm1949 = vmor %vm1947, %vm1948
    %v1950 = vsel %vm1949, %v1941, %v1946
    %v1951 = vmul.f32 %v1927, %v1940
    %v1952 = vmul.f32 %v1928, %v1950
    %v1953 = vmul.f32 %v1951, %v1256
    %v1954 = vmul.f32 %v1952, %v1256
    %v1955 = vadd.f32 %v1953, %v1261
    %v1956 = vadd.f32 %v1954, %v1261
    %v1957 = vpack.c.bf16 %v1956, %v1955
    %v1958 = vld [vmem:[#allocation16] sm:$0xf]
    %v1959 = vld [vmem:[#allocation16 + $0x4] sm:$0xf]
    %v1960 = vld [vmem:[#allocation16 + $0x8] sm:$0xf]
    %v1961 = vld [vmem:[#allocation16 + $0xc] sm:$0xf]
    %v1962 = vld [vmem:[#allocation17] sm:$0x1]
    %v1964 = vperm.slane %v1962, 0
    %v1970 = vunpack.c.l.b16 %v1958
    %v1971 = vunpack.c.l.b16 %v1959
    %v1972 = vunpack.c.l.b16 %v1960
    %v1973 = vunpack.c.l.b16 %v1961
    %v1974 = vpack.c.b16 %v1971, %v1970
    %v1975 = vpack.c.b16 %v1973, %v1972
    %v1979 = vsel %vm582, %v1957, 0
    %1981 = vmatpush.bf16.msra.mxu0 0
    %1982 = vmatpush.bf16.msra.mxu0 0
    %1983 = vmatpush.bf16.msra.mxu0 0
    %1984 = vmatpush.bf16.msra.mxu0 0
    %1985 = vmatpush.bf16.msra.mxu0 0
    %1986 = vmatpush.bf16.msra.mxu0 0
    %1987 = vmatpush.bf16.msra.mxu0 %v1975
    %1988 = vmatpush.bf16.msra.mxu0 %v1974
    %1989 = vmatmul.bf16.gmra.mxu0 %v1979
    %v1990 = vpop.f32.mrf.mxu0
    %v1991 = vadd.f32 %v1964, %v1990
    %v1992 = vpop.f32.mrf.mxu0
    %v1993 = vadd.f32 %v1964, %v1992
    %1994 = vdwg.mxu0
    %v1995 = vmax.f32 %v1991, 0.0
    %v1996 = vmax.f32 %v1993, 0.0
    %v1997 = vpack.c.bf16 %v1996, %v1995
    %v1998 = vld [vmem:[%s33] sm:$0xf]
    %v1999 = vld [vmem:[%s33 + $0x4] sm:$0xf]
    %v2000 = vld [vmem:[%s33 + $0x8] sm:$0xf]
    %v2001 = vld [vmem:[%s33 + $0xc] sm:$0xf]
    %v2002 = vld [vmem:[%s33 + $0x10] sm:$0xf]
    %v2003 = vld [vmem:[%s33 + $0x14] sm:$0xf]
    %v2004 = vld [vmem:[%s33 + $0x18] sm:$0xf]
    %v2005 = vld [vmem:[%s33 + $0x1c] sm:$0xf]
    %v2006 = vld [vmem:[#allocation19] sm:$0x1]
    %v2008 = vperm.slane %v2006, 0
    %v2018 = vunpack.c.l.b16 %v1998
    %v2019 = vunpack.c.l.b16 %v1999
    %v2020 = vunpack.c.l.b16 %v2000
    %v2021 = vunpack.c.l.b16 %v2001
    %v2022 = vunpack.c.l.b16 %v2002
    %v2023 = vunpack.c.l.b16 %v2003
    %v2024 = vunpack.c.l.b16 %v2004
    %v2025 = vunpack.c.l.b16 %v2005
    %v2026 = vpack.c.b16 %v2019, %v2018
    %v2027 = vpack.c.b16 %v2021, %v2020
    %v2028 = vpack.c.b16 %v2023, %v2022
    %v2029 = vpack.c.b16 %v2025, %v2024
    %vm2034 = vcmask 523264
    %v2036 = vsel %vm2034, %v1997, 0
    %2038 = vmatpush.bf16.msra.mxu0 0
    %2039 = vmatpush.bf16.msra.mxu0 0
    %2040 = vmatpush.bf16.msra.mxu0 0
    %2041 = vmatpush.bf16.msra.mxu0 0
    %2042 = vmatpush.bf16.msra.mxu0 %v2029
    %2043 = vmatpush.bf16.msra.mxu0 %v2028
    %2044 = vmatpush.bf16.msra.mxu0 %v2027
    %2045 = vmatpush.bf16.msra.mxu0 %v2026
    %2046 = vmatmul.bf16.gmra.mxu0 %v2036
    %v2047 = vpop.f32.mrf.mxu0
    %v2048 = vadd.f32 %v2008, %v2047
    %v2049 = vpop.f32.mrf.mxu0
    %v2050 = vadd.f32 %v2008, %v2049
    %2051 = vdwg.mxu0
    %v2052 = vadd.f32 %v2048, %v1955
    %v2053 = vadd.f32 %v2050, %v1956
    %v2054 = vsel %vm582, %v2052, 0.0
    %2055 = vadd.xlane.f32.xlu0 %v2054
    %v2056 = vpop.xlane.xlu0 %2055
    %v2057 = vsel %vm582, %v2053, 0.0
    %2058 = vadd.xlane.f32.xlu0 %v2057
    %v2059 = vpop.xlane.xlu0 %2058
    %v2060 = vmul.f32 %v2056, %v1212
    %v2061 = vmul.f32 %v2059, %v1212
    %v2062 = vmul.f32 %v2052, %v2052
    %v2063 = vmul.f32 %v2053, %v2053
    %v2064 = vsel %vm582, %v2062, 0.0
    %2065 = vadd.xlane.f32.xlu0 %v2064
    %v2066 = vpop.xlane.xlu0 %2065
    %v2067 = vsel %vm582, %v2063, 0.0
    %2068 = vadd.xlane.f32.xlu0 %v2067
    %v2069 = vpop.xlane.xlu0 %2068
    %v2070 = vmul.f32 %v2066, %v1212
    %v2071 = vmul.f32 %v2069, %v1212
    %v2072 = vmul.f32 %v2060, %v2060
    %v2073 = vmul.f32 %v2061, %v2061
    %v2074 = vsub.f32 %v2070, %v2072
    %v2075 = vsub.f32 %v2071, %v2073
    %v2076 = vsub.f32 %v2052, %v2060
    %v2077 = vsub.f32 %v2053, %v2061
    %v2078 = vadd.f32 %v2074, 1e-05
    %v2079 = vadd.f32 %v2075, 1e-05
    %v2080 = vrsqrt.pop %v2078
    %v2081 = vmul.f32 %v2080, %v2078
    %v2082 = vmul.f32 %v2081, %v2080
    %v2083 = vmul.f32 0.5, %v2082
    %v2084 = vsub.f32 1.5, %v2083
    %v2085 = vmul.f32 %v2080, %v2084
    %vm2086 = vweird.f32 %v2078
    %vm2087 = vweird.f32 %v2080
    %vm2088 = vmor %vm2086, %vm2087
    %v2089 = vsel %vm2088, %v2080, %v2085
    %v2090 = vrsqrt.pop %v2079
    %v2091 = vmul.f32 %v2090, %v2079
    %v2092 = vmul.f32 %v2091, %v2090
    %v2093 = vmul.f32 0.5, %v2092
    %v2094 = vsub.f32 1.5, %v2093
    %v2095 = vmul.f32 %v2090, %v2094
    %vm2096 = vweird.f32 %v2079
    %vm2097 = vweird.f32 %v2090
    %vm2098 = vmor %vm2096, %vm2097
    %v2099 = vsel %vm2098, %v2090, %v2095
    %v2100 = vmul.f32 %v2076, %v2089
    %v2101 = vmul.f32 %v2077, %v2099
    %v2102 = vmul.f32 %v2100, %v1256
    %v2103 = vmul.f32 %v2101, %v1256
    %v2104 = vadd.f32 %v2102, %v1261
    %v2105 = vadd.f32 %v2103, %v1261
    %2106 = vst.msk [vmem:[#allocation45] sm:$0xff] %vm582, %v2104
    %2107 = vst.msk [vmem:[#allocation45 + $0x8] sm:$0xff] %vm582, %v2105
    %v2108 = vld [vmem:[%s73] sm:$0x1]
    %v2109 = vld [vmem:[%s75] sm:$0x1]
    %v2110 = vpack.c.bf16 %v2105, %v2104
    %v2111 = vld [vmem:[%s41] sm:$0xf]
    %v2112 = vld [vmem:[%s41 + $0x4] sm:$0xf]
    %v2113 = vld [vmem:[%s41 + $0x8] sm:$0xf]
    %v2114 = vld [vmem:[%s41 + $0xc] sm:$0xf]
    %v2115 = vld [vmem:[#allocation23] sm:$0x1]
    %v2117 = vperm.slane %v2115, 0
    %v2123 = vunpack.c.l.b16 %v2111
    %v2124 = vunpack.c.l.b16 %v2112
    %v2125 = vunpack.c.l.b16 %v2113
    %v2126 = vunpack.c.l.b16 %v2114
    %v2127 = vpack.c.b16 %v2124, %v2123
    %v2128 = vpack.c.b16 %v2126, %v2125
    %v2132 = vsel %vm582, %v2110, 0
    %2134 = vmatpush.bf16.msra.mxu0 0
    %2135 = vmatpush.bf16.msra.mxu0 0
    %2136 = vmatpush.bf16.msra.mxu0 0
    %2137 = vmatpush.bf16.msra.mxu0 0
    %2138 = vmatpush.bf16.msra.mxu0 0
    %2139 = vmatpush.bf16.msra.mxu0 0
    %2140 = vmatpush.bf16.msra.mxu0 %v2128
    %2141 = vmatpush.bf16.msra.mxu0 %v2127
    %2142 = vmatmul.bf16.gmra.mxu0 %v2132
    %v2143 = vpop.f32.mrf.mxu0
    %v2144 = vadd.f32 %v2117, %v2143
    %v2145 = vpop.f32.mrf.mxu0
    %v2146 = vadd.f32 %v2117, %v2145
    %2147 = vdwg.mxu0
    %v2148 = vpack.c.bf16 %v2144, %v2144
    %v2149 = vpack.c.bf16 %v2146, %v2146
    %v2150 = vld [vmem:[#allocation25] sm:$0xf]
    %v2151 = vld [vmem:[#allocation25 + $0x4] sm:$0xf]
    %v2152 = vld [vmem:[#allocation25 + $0x8] sm:$0xf]
    %v2153 = vld [vmem:[#allocation25 + $0xc] sm:$0xf]
    %v2154 = vld [vmem:[#allocation26] sm:$0x1]
    %v2156 = vperm.slane %v2154, 0
    %v2162 = vunpack.c.l.b16 %v2150
    %v2163 = vunpack.c.l.b16 %v2151
    %v2164 = vunpack.c.l.b16 %v2152
    %v2165 = vunpack.c.l.b16 %v2153
    %v2166 = vpack.c.b16 %v2163, %v2162
    %v2167 = vpack.c.b16 %v2165, %v2164
    %2170 = vmatpush.bf16.msra.mxu0 0
    %2171 = vmatpush.bf16.msra.mxu0 0
    %2172 = vmatpush.bf16.msra.mxu0 0
    %2173 = vmatpush.bf16.msra.mxu0 0
    %2174 = vmatpush.bf16.msra.mxu0 0
    %2175 = vmatpush.bf16.msra.mxu0 0
    %2176 = vmatpush.bf16.msra.mxu0 %v2167
    %2177 = vmatpush.bf16.msra.mxu0 %v2166
    %2178 = vmatmul.bf16.gmra.mxu0 %v2132
    %v2179 = vpop.f32.mrf.mxu0
    %v2180 = vadd.f32 %v2156, %v2179
    %v2181 = vpop.f32.mrf.mxu0
    %v2182 = vadd.f32 %v2156, %v2181
    %2183 = vdwg.mxu0
    %v2184 = vpack.c.bf16 %v2180, %v2180
    %v2185 = vpack.c.bf16 %v2182, %v2182
    %2188 = vrot.lane.b32.xlu0 %v2148, 120
    %v2189 = vpop.permute.xlu0 %2188
    %2190 = vrot.lane.b32.xlu0 %v2149, 120
    %v2191 = vpop.permute.xlu0 %2190
    %2192 = vrot.lane.b32.xlu0 %v2148, 112
    %v2193 = vpop.permute.xlu0 %2192
    %2194 = vrot.lane.b32.xlu0 %v2149, 112
    %v2195 = vpop.permute.xlu0 %2194
    %2196 = vrot.lane.b32.xlu0 %v2148, 104
    %v2197 = vpop.permute.xlu0 %2196
    %2198 = vrot.lane.b32.xlu0 %v2149, 104
    %v2199 = vpop.permute.xlu0 %2198
    %2202 = vrot.lane.b32.xlu0 %v2184, 120
    %v2203 = vpop.permute.xlu0 %2202
    %2204 = vrot.lane.b32.xlu0 %v2185, 120
    %v2205 = vpop.permute.xlu0 %2204
    %2206 = vrot.lane.b32.xlu0 %v2184, 112
    %v2207 = vpop.permute.xlu0 %2206
    %2208 = vrot.lane.b32.xlu0 %v2185, 112
    %v2209 = vpop.permute.xlu0 %2208
    %2210 = vrot.lane.b32.xlu0 %v2184, 104
    %v2211 = vpop.permute.xlu0 %2210
    %2212 = vrot.lane.b32.xlu0 %v2185, 104
    %v2213 = vpop.permute.xlu0 %2212
    %v2215 = vsel %vm666, %v2148, 0
    %v2218 = vsel %vm666, %v2184, 0
    %2220 = vmatpush.bf16.xpose.msra.mxu0 0
    %2221 = vmatpush.bf16.xpose.msra.mxu0 0
    %2222 = vmatpush.bf16.xpose.msra.mxu0 0
    %2223 = vmatpush.bf16.xpose.msra.mxu0 0
    %2224 = vmatpush.bf16.xpose.msra.mxu0 0
    %2225 = vmatpush.bf16.xpose.msra.mxu0 0
    %2226 = vmatpush.bf16.xpose.msra.mxu0 0
    %2227 = vmatpush.bf16.xpose.msra.mxu0 %v2218
    %2228 = vmatmul.bf16.gmra.mxu0 %v2215
    %v2229 = vpop.f32.mrf.mxu0
    %v2230 = vadd.f32 0.0, %v2229
    %v2231 = vpop.f32.mrf.mxu0
    %2232 = vdwg.mxu0
    %v2234 = vsel %vm666, %v2149, 0
    %v2237 = vsel %vm666, %v2185, 0
    %2239 = vmatpush.bf16.xpose.msra.mxu0 0
    %2240 = vmatpush.bf16.xpose.msra.mxu0 0
    %2241 = vmatpush.bf16.xpose.msra.mxu0 0
    %2242 = vmatpush.bf16.xpose.msra.mxu0 0
    %2243 = vmatpush.bf16.xpose.msra.mxu0 0
    %2244 = vmatpush.bf16.xpose.msra.mxu0 0
    %2245 = vmatpush.bf16.xpose.msra.mxu0 0
    %2246 = vmatpush.bf16.xpose.msra.mxu0 %v2237
    %2247 = vmatmul.bf16.gmra.mxu0 %v2234
    %v2248 = vpop.f32.mrf.mxu0
    %v2249 = vadd.f32 0.0, %v2248
    %v2250 = vpop.f32.mrf.mxu0
    %2251 = vdwg.mxu0
    %v2253 = vsel %vm666, %v2189, 0
    %v2256 = vsel %vm666, %v2203, 0
    %2258 = vmatpush.bf16.xpose.msra.mxu0 0
    %2259 = vmatpush.bf16.xpose.msra.mxu0 0
    %2260 = vmatpush.bf16.xpose.msra.mxu0 0
    %2261 = vmatpush.bf16.xpose.msra.mxu0 0
    %2262 = vmatpush.bf16.xpose.msra.mxu0 0
    %2263 = vmatpush.bf16.xpose.msra.mxu0 0
    %2264 = vmatpush.bf16.xpose.msra.mxu0 0
    %2265 = vmatpush.bf16.xpose.msra.mxu0 %v2256
    %2266 = vmatmul.bf16.gmra.mxu0 %v2253
    %v2267 = vpop.f32.mrf.mxu0
    %v2268 = vadd.f32 0.0, %v2267
    %v2269 = vpop.f32.mrf.mxu0
    %2270 = vdwg.mxu0
    %v2272 = vsel %vm666, %v2191, 0
    %v2275 = vsel %vm666, %v2205, 0
    %2277 = vmatpush.bf16.xpose.msra.mxu0 0
    %2278 = vmatpush.bf16.xpose.msra.mxu0 0
    %2279 = vmatpush.bf16.xpose.msra.mxu0 0
    %2280 = vmatpush.bf16.xpose.msra.mxu0 0
    %2281 = vmatpush.bf16.xpose.msra.mxu0 0
    %2282 = vmatpush.bf16.xpose.msra.mxu0 0
    %2283 = vmatpush.bf16.xpose.msra.mxu0 0
    %2284 = vmatpush.bf16.xpose.msra.mxu0 %v2275
    %2285 = vmatmul.bf16.gmra.mxu0 %v2272
    %v2286 = vpop.f32.mrf.mxu0
    %v2287 = vadd.f32 0.0, %v2286
    %v2288 = vpop.f32.mrf.mxu0
    %2289 = vdwg.mxu0
    %v2291 = vsel %vm666, %v2193, 0
    %v2294 = vsel %vm666, %v2207, 0
    %2296 = vmatpush.bf16.xpose.msra.mxu0 0
    %2297 = vmatpush.bf16.xpose.msra.mxu0 0
    %2298 = vmatpush.bf16.xpose.msra.mxu0 0
    %2299 = vmatpush.bf16.xpose.msra.mxu0 0
    %2300 = vmatpush.bf16.xpose.msra.mxu0 0
    %2301 = vmatpush.bf16.xpose.msra.mxu0 0
    %2302 = vmatpush.bf16.xpose.msra.mxu0 0
    %2303 = vmatpush.bf16.xpose.msra.mxu0 %v2294
    %2304 = vmatmul.bf16.gmra.mxu0 %v2291
    %v2305 = vpop.f32.mrf.mxu0
    %v2306 = vadd.f32 0.0, %v2305
    %v2307 = vpop.f32.mrf.mxu0
    %2308 = vdwg.mxu0
    %v2310 = vsel %vm666, %v2195, 0
    %v2313 = vsel %vm666, %v2209, 0
    %2315 = vmatpush.bf16.xpose.msra.mxu0 0
    %2316 = vmatpush.bf16.xpose.msra.mxu0 0
    %2317 = vmatpush.bf16.xpose.msra.mxu0 0
    %2318 = vmatpush.bf16.xpose.msra.mxu0 0
    %2319 = vmatpush.bf16.xpose.msra.mxu0 0
    %2320 = vmatpush.bf16.xpose.msra.mxu0 0
    %2321 = vmatpush.bf16.xpose.msra.mxu0 0
    %2322 = vmatpush.bf16.xpose.msra.mxu0 %v2313
    %2323 = vmatmul.bf16.gmra.mxu0 %v2310
    %v2324 = vpop.f32.mrf.mxu0
    %v2325 = vadd.f32 0.0, %v2324
    %v2326 = vpop.f32.mrf.mxu0
    %2327 = vdwg.mxu0
    %v2329 = vsel %vm666, %v2197, 0
    %v2332 = vsel %vm666, %v2211, 0
    %2334 = vmatpush.bf16.xpose.msra.mxu0 0
    %2335 = vmatpush.bf16.xpose.msra.mxu0 0
    %2336 = vmatpush.bf16.xpose.msra.mxu0 0
    %2337 = vmatpush.bf16.xpose.msra.mxu0 0
    %2338 = vmatpush.bf16.xpose.msra.mxu0 0
    %2339 = vmatpush.bf16.xpose.msra.mxu0 0
    %2340 = vmatpush.bf16.xpose.msra.mxu0 0
    %2341 = vmatpush.bf16.xpose.msra.mxu0 %v2332
    %2342 = vmatmul.bf16.gmra.mxu0 %v2329
    %v2343 = vpop.f32.mrf.mxu0
    %v2344 = vadd.f32 0.0, %v2343
    %v2345 = vpop.f32.mrf.mxu0
    %2346 = vdwg.mxu0
    %v2348 = vsel %vm666, %v2199, 0
    %v2351 = vsel %vm666, %v2213, 0
    %2353 = vmatpush.bf16.xpose.msra.mxu0 0
    %2354 = vmatpush.bf16.xpose.msra.mxu0 0
    %2355 = vmatpush.bf16.xpose.msra.mxu0 0
    %2356 = vmatpush.bf16.xpose.msra.mxu0 0
    %2357 = vmatpush.bf16.xpose.msra.mxu0 0
    %2358 = vmatpush.bf16.xpose.msra.mxu0 0
    %2359 = vmatpush.bf16.xpose.msra.mxu0 0
    %2360 = vmatpush.bf16.xpose.msra.mxu0 %v2351
    %2361 = vmatmul.bf16.gmra.mxu0 %v2348
    %v2362 = vpop.f32.mrf.mxu0
    %v2363 = vadd.f32 0.0, %v2362
    %v2364 = vpop.f32.mrf.mxu0
    %2365 = vdwg.mxu0
    %v2366 = vsel %vm666, %v2230, -inf
    %2367 = vmax.xlane.f32.xlu0 %v2366
    %v2368 = vpop.xlane.xlu0 %2367
    %v2369 = vsel %vm666, %v2249, -inf
    %2370 = vmax.xlane.f32.xlu0 %v2369
    %v2371 = vpop.xlane.xlu0 %2370
    %v2372 = vsel %vm666, %v2268, -inf
    %2373 = vmax.xlane.f32.xlu0 %v2372
    %v2374 = vpop.xlane.xlu0 %2373
    %v2375 = vsel %vm666, %v2287, -inf
    %2376 = vmax.xlane.f32.xlu0 %v2375
    %v2377 = vpop.xlane.xlu0 %2376
    %v2378 = vsel %vm666, %v2306, -inf
    %2379 = vmax.xlane.f32.xlu0 %v2378
    %v2380 = vpop.xlane.xlu0 %2379
    %v2381 = vsel %vm666, %v2325, -inf
    %2382 = vmax.xlane.f32.xlu0 %v2381
    %v2383 = vpop.xlane.xlu0 %2382
    %v2384 = vsel %vm666, %v2344, -inf
    %2385 = vmax.xlane.f32.xlu0 %v2384
    %v2386 = vpop.xlane.xlu0 %2385
    %v2387 = vsel %vm666, %v2363, -inf
    %2388 = vmax.xlane.f32.xlu0 %v2387
    %v2389 = vpop.xlane.xlu0 %2388
    %v2390 = vsub.f32 %v2230, %v2368
    %v2391 = vsub.f32 %v2249, %v2371
    %v2392 = vsub.f32 %v2268, %v2374
    %v2393 = vsub.f32 %v2287, %v2377
    %v2394 = vsub.f32 %v2306, %v2380
    %v2395 = vsub.f32 %v2325, %v2383
    %v2396 = vsub.f32 %v2344, %v2386
    %v2397 = vsub.f32 %v2363, %v2389
    %v2398 = vmul.f32 %v2390, 1.442695
    %v2399 = vpow.pop %v2398
    %v2400 = vmul.f32 %v2391, 1.442695
    %v2401 = vpow.pop %v2400
    %v2402 = vmul.f32 %v2392, 1.442695
    %v2403 = vpow.pop %v2402
    %v2404 = vmul.f32 %v2393, 1.442695
    %v2405 = vpow.pop %v2404
    %v2406 = vmul.f32 %v2394, 1.442695
    %v2407 = vpow.pop %v2406
    %v2408 = vmul.f32 %v2395, 1.442695
    %v2409 = vpow.pop %v2408
    %v2410 = vmul.f32 %v2396, 1.442695
    %v2411 = vpow.pop %v2410
    %v2412 = vmul.f32 %v2397, 1.442695
    %v2413 = vpow.pop %v2412
    %v2414 = vsel %vm666, %v2399, 0.0
    %2415 = vadd.xlane.f32.xlu0 %v2414
    %v2416 = vpop.xlane.xlu0 %2415
    %v2417 = vsel %vm666, %v2401, 0.0
    %2418 = vadd.xlane.f32.xlu0 %v2417
    %v2419 = vpop.xlane.xlu0 %2418
    %v2420 = vsel %vm666, %v2403, 0.0
    %2421 = vadd.xlane.f32.xlu0 %v2420
    %v2422 = vpop.xlane.xlu0 %2421
    %v2423 = vsel %vm666, %v2405, 0.0
    %2424 = vadd.xlane.f32.xlu0 %v2423
    %v2425 = vpop.xlane.xlu0 %2424
    %v2426 = vsel %vm666, %v2407, 0.0
    %2427 = vadd.xlane.f32.xlu0 %v2426
    %v2428 = vpop.xlane.xlu0 %2427
    %v2429 = vsel %vm666, %v2409, 0.0
    %2430 = vadd.xlane.f32.xlu0 %v2429
    %v2431 = vpop.xlane.xlu0 %2430
    %v2432 = vsel %vm666, %v2411, 0.0
    %2433 = vadd.xlane.f32.xlu0 %v2432
    %v2434 = vpop.xlane.xlu0 %2433
    %v2435 = vsel %vm666, %v2413, 0.0
    %2436 = vadd.xlane.f32.xlu0 %v2435
    %v2437 = vpop.xlane.xlu0 %2436
    %v2438 = vrcp.pop %v2416
    %v2439 = vrcp.pop %v2419
    %v2440 = vrcp.pop %v2422
    %v2441 = vrcp.pop %v2425
    %v2442 = vrcp.pop %v2428
    %v2443 = vrcp.pop %v2431
    %v2444 = vrcp.pop %v2434
    %v2445 = vrcp.pop %v2437
    %v2446 = vmul.f32 %v2399, %v2438
    %v2447 = vmul.f32 %v2401, %v2439
    %v2448 = vmul.f32 %v2403, %v2440
    %v2449 = vmul.f32 %v2405, %v2441
    %v2450 = vmul.f32 %v2407, %v2442
    %v2451 = vmul.f32 %v2409, %v2443
    %v2452 = vmul.f32 %v2411, %v2444
    %v2453 = vmul.f32 %v2413, %v2445
    %v2454 = vpack.c.bf16 %v2446, %v2446
    %v2455 = vpack.c.bf16 %v2447, %v2447
    %v2456 = vpack.c.bf16 %v2448, %v2448
    %v2457 = vpack.c.bf16 %v2449, %v2449
    %v2458 = vpack.c.bf16 %v2450, %v2450
    %v2459 = vpack.c.bf16 %v2451, %v2451
    %v2460 = vpack.c.bf16 %v2452, %v2452
    %v2461 = vpack.c.bf16 %v2453, %v2453
    %v2462 = vunpack.c.l.b16 %v2184
    %v2463 = vpack.c.b16 %v2462, %v2462
    %2464 = vrot.lane.b32.xlu0 %v2463, 96
    %v2465 = vpop.permute.xlu0 %2464
    %v2467 = vsel %vm666, %v2454, 0
    %v2470 = vsel %vm922, %v2465, 0
    %2472 = vmatpush.bf16.msra.mxu0 0
    %2473 = vmatpush.bf16.msra.mxu0 0
    %2474 = vmatpush.bf16.msra.mxu0 0
    %2475 = vmatpush.bf16.msra.mxu0 0
    %2476 = vmatpush.bf16.msra.mxu0 0
    %2477 = vmatpush.bf16.msra.mxu0 0
    %2478 = vmatpush.bf16.msra.mxu0 0
    %2479 = vmatpush.bf16.msra.mxu0 %v2470
    %2480 = vmatmul.bf16.gmra.mxu0 %v2467
    %v2481 = vpop.f32.mrf.mxu0
    %v2482 = vadd.f32 0.0, %v2481
    %v2483 = vpop.f32.mrf.mxu0
    %2484 = vdwg.mxu0
    %v2485 = vunpack.c.l.b16 %v2185
    %v2486 = vpack.c.b16 %v2485, %v2485
    %2487 = vrot.lane.b32.xlu0 %v2486, 96
    %v2488 = vpop.permute.xlu0 %2487
    %v2490 = vsel %vm666, %v2455, 0
    %v2493 = vsel %vm922, %v2488, 0
    %2495 = vmatpush.bf16.msra.mxu0 0
    %2496 = vmatpush.bf16.msra.mxu0 0
    %2497 = vmatpush.bf16.msra.mxu0 0
    %2498 = vmatpush.bf16.msra.mxu0 0
    %2499 = vmatpush.bf16.msra.mxu0 0
    %2500 = vmatpush.bf16.msra.mxu0 0
    %2501 = vmatpush.bf16.msra.mxu0 0
    %2502 = vmatpush.bf16.msra.mxu0 %v2493
    %2503 = vmatmul.bf16.gmra.mxu0 %v2490
    %v2504 = vpop.f32.mrf.mxu0
    %v2505 = vadd.f32 0.0, %v2504
    %v2506 = vpop.f32.mrf.mxu0
    %2507 = vdwg.mxu0
    %v2508 = vunpack.c.l.b16 %v2203
    %v2509 = vpack.c.b16 %v2508, %v2508
    %2510 = vrot.lane.b32.xlu0 %v2509, 96
    %v2511 = vpop.permute.xlu0 %2510
    %v2513 = vsel %vm666, %v2456, 0
    %v2516 = vsel %vm922, %v2511, 0
    %2518 = vmatpush.bf16.msra.mxu0 0
    %2519 = vmatpush.bf16.msra.mxu0 0
    %2520 = vmatpush.bf16.msra.mxu0 0
    %2521 = vmatpush.bf16.msra.mxu0 0
    %2522 = vmatpush.bf16.msra.mxu0 0
    %2523 = vmatpush.bf16.msra.mxu0 0
    %2524 = vmatpush.bf16.msra.mxu0 0
    %2525 = vmatpush.bf16.msra.mxu0 %v2516
    %2526 = vmatmul.bf16.gmra.mxu0 %v2513
    %v2527 = vpop.f32.mrf.mxu0
    %v2528 = vadd.f32 0.0, %v2527
    %v2529 = vpop.f32.mrf.mxu0
    %2530 = vdwg.mxu0
    %v2531 = vunpack.c.l.b16 %v2205
    %v2532 = vpack.c.b16 %v2531, %v2531
    %2533 = vrot.lane.b32.xlu0 %v2532, 96
    %v2534 = vpop.permute.xlu0 %2533
    %v2536 = vsel %vm666, %v2457, 0
    %v2539 = vsel %vm922, %v2534, 0
    %2541 = vmatpush.bf16.msra.mxu0 0
    %2542 = vmatpush.bf16.msra.mxu0 0
    %2543 = vmatpush.bf16.msra.mxu0 0
    %2544 = vmatpush.bf16.msra.mxu0 0
    %2545 = vmatpush.bf16.msra.mxu0 0
    %2546 = vmatpush.bf16.msra.mxu0 0
    %2547 = vmatpush.bf16.msra.mxu0 0
    %2548 = vmatpush.bf16.msra.mxu0 %v2539
    %2549 = vmatmul.bf16.gmra.mxu0 %v2536
    %v2550 = vpop.f32.mrf.mxu0
    %v2551 = vadd.f32 0.0, %v2550
    %v2552 = vpop.f32.mrf.mxu0
    %2553 = vdwg.mxu0
    %v2554 = vunpack.c.l.b16 %v2207
    %v2555 = vpack.c.b16 %v2554, %v2554
    %2556 = vrot.lane.b32.xlu0 %v2555, 96
    %v2557 = vpop.permute.xlu0 %2556
    %v2559 = vsel %vm666, %v2458, 0
    %v2562 = vsel %vm922, %v2557, 0
    %2564 = vmatpush.bf16.msra.mxu0 0
    %2565 = vmatpush.bf16.msra.mxu0 0
    %2566 = vmatpush.bf16.msra.mxu0 0
    %2567 = vmatpush.bf16.msra.mxu0 0
    %2568 = vmatpush.bf16.msra.mxu0 0
    %2569 = vmatpush.bf16.msra.mxu0 0
    %2570 = vmatpush.bf16.msra.mxu0 0
    %2571 = vmatpush.bf16.msra.mxu0 %v2562
    %2572 = vmatmul.bf16.gmra.mxu0 %v2559
    %v2573 = vpop.f32.mrf.mxu0
    %v2574 = vadd.f32 0.0, %v2573
    %v2575 = vpop.f32.mrf.mxu0
    %2576 = vdwg.mxu0
    %v2577 = vunpack.c.l.b16 %v2209
    %v2578 = vpack.c.b16 %v2577, %v2577
    %2579 = vrot.lane.b32.xlu0 %v2578, 96
    %v2580 = vpop.permute.xlu0 %2579
    %v2582 = vsel %vm666, %v2459, 0
    %v2585 = vsel %vm922, %v2580, 0
    %2587 = vmatpush.bf16.msra.mxu0 0
    %2588 = vmatpush.bf16.msra.mxu0 0
    %2589 = vmatpush.bf16.msra.mxu0 0
    %2590 = vmatpush.bf16.msra.mxu0 0
    %2591 = vmatpush.bf16.msra.mxu0 0
    %2592 = vmatpush.bf16.msra.mxu0 0
    %2593 = vmatpush.bf16.msra.mxu0 0
    %2594 = vmatpush.bf16.msra.mxu0 %v2585
    %2595 = vmatmul.bf16.gmra.mxu0 %v2582
    %v2596 = vpop.f32.mrf.mxu0
    %v2597 = vadd.f32 0.0, %v2596
    %v2598 = vpop.f32.mrf.mxu0
    %2599 = vdwg.mxu0
    %v2600 = vunpack.c.l.b16 %v2211
    %v2601 = vpack.c.b16 %v2600, %v2600
    %2602 = vrot.lane.b32.xlu0 %v2601, 96
    %v2603 = vpop.permute.xlu0 %2602
    %v2605 = vsel %vm666, %v2460, 0
    %v2608 = vsel %vm922, %v2603, 0
    %2610 = vmatpush.bf16.msra.mxu0 0
    %2611 = vmatpush.bf16.msra.mxu0 0
    %2612 = vmatpush.bf16.msra.mxu0 0
    %2613 = vmatpush.bf16.msra.mxu0 0
    %2614 = vmatpush.bf16.msra.mxu0 0
    %2615 = vmatpush.bf16.msra.mxu0 0
    %2616 = vmatpush.bf16.msra.mxu0 0
    %2617 = vmatpush.bf16.msra.mxu0 %v2608
    %2618 = vmatmul.bf16.gmra.mxu0 %v2605
    %v2619 = vpop.f32.mrf.mxu0
    %v2620 = vadd.f32 0.0, %v2619
    %v2621 = vpop.f32.mrf.mxu0
    %2622 = vdwg.mxu0
    %v2623 = vunpack.c.l.b16 %v2213
    %v2624 = vpack.c.b16 %v2623, %v2623
    %2625 = vrot.lane.b32.xlu0 %v2624, 96
    %v2626 = vpop.permute.xlu0 %2625
    %v2628 = vsel %vm666, %v2461, 0
    %v2631 = vsel %vm922, %v2626, 0
    %2633 = vmatpush.bf16.msra.mxu0 0
    %2634 = vmatpush.bf16.msra.mxu0 0
    %2635 = vmatpush.bf16.msra.mxu0 0
    %2636 = vmatpush.bf16.msra.mxu0 0
    %2637 = vmatpush.bf16.msra.mxu0 0
    %2638 = vmatpush.bf16.msra.mxu0 0
    %2639 = vmatpush.bf16.msra.mxu0 0
    %2640 = vmatpush.bf16.msra.mxu0 %v2631
    %2641 = vmatmul.bf16.gmra.mxu0 %v2628
    %v2642 = vpop.f32.mrf.mxu0
    %v2643 = vadd.f32 0.0, %v2642
    %v2644 = vpop.f32.mrf.mxu0
    %2645 = vdwg.mxu0
    %v2646 = vld [vmem:[#allocation28] sm:$0xf]
    %v2647 = vld [vmem:[#allocation28 + $0x4] sm:$0xf]
    %v2648 = vld [vmem:[#allocation28 + $0x8] sm:$0xf]
    %v2649 = vld [vmem:[#allocation28 + $0xc] sm:$0xf]
    %v2650 = vpack.c.bf16 %v2505, %v2482
    %v2651 = vpack.c.bf16 %v2551, %v2528
    %v2653 = vsel %vm666, %v2651, 0
    %v2656 = vsel %vm922, %v2647, 0
    %2658 = vmatpush.bf16.msra.mxu0 0
    %2659 = vmatpush.bf16.msra.mxu0 0
    %2660 = vmatpush.bf16.msra.mxu0 0
    %2661 = vmatpush.bf16.msra.mxu0 0
    %2662 = vmatpush.bf16.msra.mxu0 0
    %2663 = vmatpush.bf16.msra.mxu0 0
    %2664 = vmatpush.bf16.msra.mxu0 0
    %2665 = vmatpush.bf16.msra.mxu0 %v2656
    %2666 = vmatmul.bf16.gmra.mxu0 %v2653
    %v2667 = vpop.f32.mrf.mxu0
    %v2668 = vadd.f32 0.0, %v2667
    %v2669 = vpop.f32.mrf.mxu0
    %v2670 = vadd.f32 0.0, %v2669
    %2671 = vdwg.mxu0
    %v2673 = vsel %vm666, %v2650, 0
    %v2676 = vsel %vm922, %v2646, 0
    %2678 = vmatpush.bf16.msra.mxu0 0
    %2679 = vmatpush.bf16.msra.mxu0 0
    %2680 = vmatpush.bf16.msra.mxu0 0
    %2681 = vmatpush.bf16.msra.mxu0 0
    %2682 = vmatpush.bf16.msra.mxu0 0
    %2683 = vmatpush.bf16.msra.mxu0 0
    %2684 = vmatpush.bf16.msra.mxu0 0
    %2685 = vmatpush.bf16.msra.mxu0 %v2676
    %2686 = vmatmul.bf16.gmra.mxu0 %v2673
    %v2687 = vpop.f32.mrf.mxu0
    %v2688 = vadd.f32 %v2668, %v2687
    %v2689 = vpop.f32.mrf.mxu0
    %v2690 = vadd.f32 %v2670, %v2689
    %2691 = vdwg.mxu0
    %v2692 = vpack.c.bf16 %v2597, %v2574
    %v2694 = vsel %vm666, %v2692, 0
    %v2697 = vsel %vm922, %v2648, 0
    %2699 = vmatpush.bf16.msra.mxu0 0
    %2700 = vmatpush.bf16.msra.mxu0 0
    %2701 = vmatpush.bf16.msra.mxu0 0
    %2702 = vmatpush.bf16.msra.mxu0 0
    %2703 = vmatpush.bf16.msra.mxu0 0
    %2704 = vmatpush.bf16.msra.mxu0 0
    %2705 = vmatpush.bf16.msra.mxu0 0
    %2706 = vmatpush.bf16.msra.mxu0 %v2697
    %2707 = vmatmul.bf16.gmra.mxu0 %v2694
    %v2708 = vpop.f32.mrf.mxu0
    %v2709 = vadd.f32 0.0, %v2708
    %v2710 = vpop.f32.mrf.mxu0
    %v2711 = vadd.f32 0.0, %v2710
    %2712 = vdwg.mxu0
    %v2713 = vadd.f32 %v2688, %v2709
    %v2714 = vadd.f32 %v2690, %v2711
    %v2715 = vpack.c.bf16 %v2643, %v2620
    %v2717 = vsel %vm666, %v2715, 0
    %v2720 = vsel %vm922, %v2649, 0
    %2722 = vmatpush.bf16.msra.mxu0 0
    %2723 = vmatpush.bf16.msra.mxu0 0
    %2724 = vmatpush.bf16.msra.mxu0 0
    %2725 = vmatpush.bf16.msra.mxu0 0
    %2726 = vmatpush.bf16.msra.mxu0 0
    %2727 = vmatpush.bf16.msra.mxu0 0
    %2728 = vmatpush.bf16.msra.mxu0 0
    %2729 = vmatpush.bf16.msra.mxu0 %v2720
    %2730 = vmatmul.bf16.gmra.mxu0 %v2717
    %v2731 = vpop.f32.mrf.mxu0
    %v2732 = vadd.f32 0.0, %v2731
    %v2733 = vpop.f32.mrf.mxu0
    %v2734 = vadd.f32 0.0, %v2733
    %2735 = vdwg.mxu0
    %v2736 = vadd.f32 %v2713, %v2732
    %v2737 = vadd.f32 %v2714, %v2734
    %v2738 = vld [vmem:[#allocation29] sm:$0x1]
    %v2740 = vperm.slane %v2738, 0
    %v2742 = vadd.f32 %v2736, %v2740
    %v2743 = vadd.f32 %v2737, %v2740
    %v2744 = vadd.f32 %v2742, %v2104
    %v2745 = vadd.f32 %v2743, %v2105
    %v2746 = vsel %vm582, %v2744, 0.0
    %2747 = vadd.xlane.f32.xlu0 %v2746
    %v2748 = vpop.xlane.xlu0 %2747
    %v2749 = vsel %vm582, %v2745, 0.0
    %2750 = vadd.xlane.f32.xlu0 %v2749
    %v2751 = vpop.xlane.xlu0 %2750
    %v2752 = vmul.f32 %v2748, %v1212
    %v2753 = vmul.f32 %v2751, %v1212
    %v2754 = vmul.f32 %v2744, %v2744
    %v2755 = vmul.f32 %v2745, %v2745
    %v2756 = vsel %vm582, %v2754, 0.0
    %2757 = vadd.xlane.f32.xlu0 %v2756
    %v2758 = vpop.xlane.xlu0 %2757
    %v2759 = vsel %vm582, %v2755, 0.0
    %2760 = vadd.xlane.f32.xlu0 %v2759
    %v2761 = vpop.xlane.xlu0 %2760
    %v2762 = vmul.f32 %v2758, %v1212
    %v2763 = vmul.f32 %v2761, %v1212
    %v2764 = vmul.f32 %v2752, %v2752
    %v2765 = vmul.f32 %v2753, %v2753
    %v2766 = vsub.f32 %v2762, %v2764
    %v2767 = vsub.f32 %v2763, %v2765
    %v2768 = vsub.f32 %v2744, %v2752
    %v2769 = vsub.f32 %v2745, %v2753
    %v2770 = vadd.f32 %v2766, 1e-05
    %v2771 = vadd.f32 %v2767, 1e-05
    %v2772 = vrsqrt.pop %v2770
    %v2773 = vmul.f32 %v2772, %v2770
    %v2774 = vmul.f32 %v2773, %v2772
    %v2775 = vmul.f32 0.5, %v2774
    %v2776 = vsub.f32 1.5, %v2775
    %v2777 = vmul.f32 %v2772, %v2776
    %vm2778 = vweird.f32 %v2770
    %vm2779 = vweird.f32 %v2772
    %vm2780 = vmor %vm2778, %vm2779
    %v2781 = vsel %vm2780, %v2772, %v2777
    %v2782 = vrsqrt.pop %v2771
    %v2783 = vmul.f32 %v2782, %v2771
    %v2784 = vmul.f32 %v2783, %v2782
    %v2785 = vmul.f32 0.5, %v2784
    %v2786 = vsub.f32 1.5, %v2785
    %v2787 = vmul.f32 %v2782, %v2786
    %vm2788 = vweird.f32 %v2771
    %vm2789 = vweird.f32 %v2782
    %vm2790 = vmor %vm2788, %vm2789
    %v2791 = vsel %vm2790, %v2782, %v2787
    %v2792 = vmul.f32 %v2768, %v2781
    %v2793 = vmul.f32 %v2769, %v2791
    %v2795 = vperm.slane %v2108, 0
    %v2797 = vmul.f32 %v2792, %v2795
    %v2798 = vmul.f32 %v2793, %v2795
    %v2800 = vperm.slane %v2109, 0
    %v2802 = vadd.f32 %v2797, %v2800
    %v2803 = vadd.f32 %v2798, %v2800
    %v2804 = vpack.c.bf16 %v2803, %v2802
    %v2805 = vld [vmem:[#allocation31] sm:$0xf]
    %v2806 = vld [vmem:[#allocation31 + $0x4] sm:$0xf]
    %v2807 = vld [vmem:[#allocation31 + $0x8] sm:$0xf]
    %v2808 = vld [vmem:[#allocation31 + $0xc] sm:$0xf]
    %v2809 = vld [vmem:[#allocation32] sm:$0x1]
    %v2811 = vperm.slane %v2809, 0
    %v2817 = vunpack.c.l.b16 %v2805
    %v2818 = vunpack.c.l.b16 %v2806
    %v2819 = vunpack.c.l.b16 %v2807
    %v2820 = vunpack.c.l.b16 %v2808
    %v2821 = vpack.c.b16 %v2818, %v2817
    %v2822 = vpack.c.b16 %v2820, %v2819
    %v2826 = vsel %vm582, %v2804, 0
    %2828 = vmatpush.bf16.msra.mxu0 0
    %2829 = vmatpush.bf16.msra.mxu0 0
    %2830 = vmatpush.bf16.msra.mxu0 0
    %2831 = vmatpush.bf16.msra.mxu0 0
    %2832 = vmatpush.bf16.msra.mxu0 0
    %2833 = vmatpush.bf16.msra.mxu0 0
    %2834 = vmatpush.bf16.msra.mxu0 %v2822
    %2835 = vmatpush.bf16.msra.mxu0 %v2821
    %2836 = vmatmul.bf16.gmra.mxu0 %v2826
    %v2837 = vpop.f32.mrf.mxu0
    %v2838 = vadd.f32 %v2811, %v2837
    %v2839 = vpop.f32.mrf.mxu0
    %v2840 = vadd.f32 %v2811, %v2839
    %2841 = vdwg.mxu0
    %v2842 = vpack.c.bf16 %v2838, %v2838
    %v2843 = vpack.c.bf16 %v2840, %v2840
    %v2844 = vld [vmem:[#allocation34] sm:$0xf]
    %v2845 = vld [vmem:[#allocation34 + $0x4] sm:$0xf]
    %v2846 = vld [vmem:[#allocation34 + $0x8] sm:$0xf]
    %v2847 = vld [vmem:[#allocation34 + $0xc] sm:$0xf]
    %v2848 = vld [vmem:[#allocation35] sm:$0x1]
    %v2850 = vperm.slane %v2848, 0
    %v2856 = vunpack.c.l.b16 %v2844
    %v2857 = vunpack.c.l.b16 %v2845
    %v2858 = vunpack.c.l.b16 %v2846
    %v2859 = vunpack.c.l.b16 %v2847
    %v2860 = vpack.c.b16 %v2857, %v2856
    %v2861 = vpack.c.b16 %v2859, %v2858
    %2864 = vmatpush.bf16.msra.mxu0 0
    %2865 = vmatpush.bf16.msra.mxu0 0
    %2866 = vmatpush.bf16.msra.mxu0 0
    %2867 = vmatpush.bf16.msra.mxu0 0
    %2868 = vmatpush.bf16.msra.mxu0 0
    %2869 = vmatpush.bf16.msra.mxu0 0
    %2870 = vmatpush.bf16.msra.mxu0 %v2861
    %2871 = vmatpush.bf16.msra.mxu0 %v2860
    %2872 = vmatmul.bf16.gmra.mxu0 %v1327
    %v2873 = vpop.f32.mrf.mxu0
    %v2874 = vadd.f32 %v2850, %v2873
    %v2875 = vpop.f32.mrf.mxu0
    %v2876 = vadd.f32 %v2850, %v2875
    %2877 = vdwg.mxu0
    %v2878 = vpack.c.bf16 %v2874, %v2874
    %v2879 = vpack.c.bf16 %v2876, %v2876
    %2882 = vrot.lane.b32.xlu0 %v2842, 120
    %v2883 = vpop.permute.xlu0 %2882
    %2884 = vrot.lane.b32.xlu0 %v2843, 120
    %v2885 = vpop.permute.xlu0 %2884
    %2886 = vrot.lane.b32.xlu0 %v2842, 112
    %v2887 = vpop.permute.xlu0 %2886
    %2888 = vrot.lane.b32.xlu0 %v2843, 112
    %v2889 = vpop.permute.xlu0 %2888
    %2890 = vrot.lane.b32.xlu0 %v2842, 104
    %v2891 = vpop.permute.xlu0 %2890
    %2892 = vrot.lane.b32.xlu0 %v2843, 104
    %v2893 = vpop.permute.xlu0 %2892
    %2896 = vrot.lane.b32.xlu0 %v2878, 120
    %v2897 = vpop.permute.xlu0 %2896
    %2898 = vrot.lane.b32.xlu0 %v2879, 120
    %v2899 = vpop.permute.xlu0 %2898
    %2900 = vrot.lane.b32.xlu0 %v2878, 112
    %v2901 = vpop.permute.xlu0 %2900
    %2902 = vrot.lane.b32.xlu0 %v2879, 112
    %v2903 = vpop.permute.xlu0 %2902
    %2904 = vrot.lane.b32.xlu0 %v2878, 104
    %v2905 = vpop.permute.xlu0 %2904
    %2906 = vrot.lane.b32.xlu0 %v2879, 104
    %v2907 = vpop.permute.xlu0 %2906
    %v2909 = vsel %vm666, %v2842, 0
    %v2912 = vsel %vm666, %v2878, 0
    %2914 = vmatpush.bf16.xpose.msra.mxu0 0
    %2915 = vmatpush.bf16.xpose.msra.mxu0 0
    %2916 = vmatpush.bf16.xpose.msra.mxu0 0
    %2917 = vmatpush.bf16.xpose.msra.mxu0 0
    %2918 = vmatpush.bf16.xpose.msra.mxu0 0
    %2919 = vmatpush.bf16.xpose.msra.mxu0 0
    %2920 = vmatpush.bf16.xpose.msra.mxu0 0
    %2921 = vmatpush.bf16.xpose.msra.mxu0 %v2912
    %2922 = vmatmul.bf16.gmra.mxu0 %v2909
    %v2923 = vpop.f32.mrf.mxu0
    %v2924 = vadd.f32 0.0, %v2923
    %v2925 = vpop.f32.mrf.mxu0
    %2926 = vdwg.mxu0
    %v2928 = vsel %vm666, %v2843, 0
    %v2931 = vsel %vm666, %v2879, 0
    %2933 = vmatpush.bf16.xpose.msra.mxu0 0
    %2934 = vmatpush.bf16.xpose.msra.mxu0 0
    %2935 = vmatpush.bf16.xpose.msra.mxu0 0
    %2936 = vmatpush.bf16.xpose.msra.mxu0 0
    %2937 = vmatpush.bf16.xpose.msra.mxu0 0
    %2938 = vmatpush.bf16.xpose.msra.mxu0 0
    %2939 = vmatpush.bf16.xpose.msra.mxu0 0
    %2940 = vmatpush.bf16.xpose.msra.mxu0 %v2931
    %2941 = vmatmul.bf16.gmra.mxu0 %v2928
    %v2942 = vpop.f32.mrf.mxu0
    %v2943 = vadd.f32 0.0, %v2942
    %v2944 = vpop.f32.mrf.mxu0
    %2945 = vdwg.mxu0
    %v2947 = vsel %vm666, %v2883, 0
    %v2950 = vsel %vm666, %v2897, 0
    %2952 = vmatpush.bf16.xpose.msra.mxu0 0
    %2953 = vmatpush.bf16.xpose.msra.mxu0 0
    %2954 = vmatpush.bf16.xpose.msra.mxu0 0
    %2955 = vmatpush.bf16.xpose.msra.mxu0 0
    %2956 = vmatpush.bf16.xpose.msra.mxu0 0
    %2957 = vmatpush.bf16.xpose.msra.mxu0 0
    %2958 = vmatpush.bf16.xpose.msra.mxu0 0
    %2959 = vmatpush.bf16.xpose.msra.mxu0 %v2950
    %2960 = vmatmul.bf16.gmra.mxu0 %v2947
    %v2961 = vpop.f32.mrf.mxu0
    %v2962 = vadd.f32 0.0, %v2961
    %v2963 = vpop.f32.mrf.mxu0
    %2964 = vdwg.mxu0
    %v2966 = vsel %vm666, %v2885, 0
    %v2969 = vsel %vm666, %v2899, 0
    %2971 = vmatpush.bf16.xpose.msra.mxu0 0
    %2972 = vmatpush.bf16.xpose.msra.mxu0 0
    %2973 = vmatpush.bf16.xpose.msra.mxu0 0
    %2974 = vmatpush.bf16.xpose.msra.mxu0 0
    %2975 = vmatpush.bf16.xpose.msra.mxu0 0
    %2976 = vmatpush.bf16.xpose.msra.mxu0 0
    %2977 = vmatpush.bf16.xpose.msra.mxu0 0
    %2978 = vmatpush.bf16.xpose.msra.mxu0 %v2969
    %2979 = vmatmul.bf16.gmra.mxu0 %v2966
    %v2980 = vpop.f32.mrf.mxu0
    %v2981 = vadd.f32 0.0, %v2980
    %v2982 = vpop.f32.mrf.mxu0
    %2983 = vdwg.mxu0
    %v2985 = vsel %vm666, %v2887, 0
    %v2988 = vsel %vm666, %v2901, 0
    %2990 = vmatpush.bf16.xpose.msra.mxu0 0
    %2991 = vmatpush.bf16.xpose.msra.mxu0 0
    %2992 = vmatpush.bf16.xpose.msra.mxu0 0
    %2993 = vmatpush.bf16.xpose.msra.mxu0 0
    %2994 = vmatpush.bf16.xpose.msra.mxu0 0
    %2995 = vmatpush.bf16.xpose.msra.mxu0 0
    %2996 = vmatpush.bf16.xpose.msra.mxu0 0
    %2997 = vmatpush.bf16.xpose.msra.mxu0 %v2988
    %2998 = vmatmul.bf16.gmra.mxu0 %v2985
    %v2999 = vpop.f32.mrf.mxu0
    %v3000 = vadd.f32 0.0, %v2999
    %v3001 = vpop.f32.mrf.mxu0
    %3002 = vdwg.mxu0
    %v3004 = vsel %vm666, %v2889, 0
    %v3007 = vsel %vm666, %v2903, 0
    %3009 = vmatpush.bf16.xpose.msra.mxu0 0
    %3010 = vmatpush.bf16.xpose.msra.mxu0 0
    %3011 = vmatpush.bf16.xpose.msra.mxu0 0
    %3012 = vmatpush.bf16.xpose.msra.mxu0 0
    %3013 = vmatpush.bf16.xpose.msra.mxu0 0
    %3014 = vmatpush.bf16.xpose.msra.mxu0 0
    %3015 = vmatpush.bf16.xpose.msra.mxu0 0
    %3016 = vmatpush.bf16.xpose.msra.mxu0 %v3007
    %3017 = vmatmul.bf16.gmra.mxu0 %v3004
    %v3018 = vpop.f32.mrf.mxu0
    %v3019 = vadd.f32 0.0, %v3018
    %v3020 = vpop.f32.mrf.mxu0
    %3021 = vdwg.mxu0
    %v3023 = vsel %vm666, %v2891, 0
    %v3026 = vsel %vm666, %v2905, 0
    %3028 = vmatpush.bf16.xpose.msra.mxu0 0
    %3029 = vmatpush.bf16.xpose.msra.mxu0 0
    %3030 = vmatpush.bf16.xpose.msra.mxu0 0
    %3031 = vmatpush.bf16.xpose.msra.mxu0 0
    %3032 = vmatpush.bf16.xpose.msra.mxu0 0
    %3033 = vmatpush.bf16.xpose.msra.mxu0 0
    %3034 = vmatpush.bf16.xpose.msra.mxu0 0
    %3035 = vmatpush.bf16.xpose.msra.mxu0 %v3026
    %3036 = vmatmul.bf16.gmra.mxu0 %v3023
    %v3037 = vpop.f32.mrf.mxu0
    %v3038 = vadd.f32 0.0, %v3037
    %v3039 = vpop.f32.mrf.mxu0
    %3040 = vdwg.mxu0
    %v3042 = vsel %vm666, %v2893, 0
    %v3045 = vsel %vm666, %v2907, 0
    %3047 = vmatpush.bf16.xpose.msra.mxu0 0
    %3048 = vmatpush.bf16.xpose.msra.mxu0 0
    %3049 = vmatpush.bf16.xpose.msra.mxu0 0
    %3050 = vmatpush.bf16.xpose.msra.mxu0 0
    %3051 = vmatpush.bf16.xpose.msra.mxu0 0
    %3052 = vmatpush.bf16.xpose.msra.mxu0 0
    %3053 = vmatpush.bf16.xpose.msra.mxu0 0
    %3054 = vmatpush.bf16.xpose.msra.mxu0 %v3045
    %3055 = vmatmul.bf16.gmra.mxu0 %v3042
    %v3056 = vpop.f32.mrf.mxu0
    %v3057 = vadd.f32 0.0, %v3056
    %v3058 = vpop.f32.mrf.mxu0
    %3059 = vdwg.mxu0
    %v3060 = vsel %vm666, %v2924, -inf
    %3061 = vmax.xlane.f32.xlu0 %v3060
    %v3062 = vpop.xlane.xlu0 %3061
    %v3063 = vsel %vm666, %v2943, -inf
    %3064 = vmax.xlane.f32.xlu0 %v3063
    %v3065 = vpop.xlane.xlu0 %3064
    %v3066 = vsel %vm666, %v2962, -inf
    %3067 = vmax.xlane.f32.xlu0 %v3066
    %v3068 = vpop.xlane.xlu0 %3067
    %v3069 = vsel %vm666, %v2981, -inf
    %3070 = vmax.xlane.f32.xlu0 %v3069
    %v3071 = vpop.xlane.xlu0 %3070
    %v3072 = vsel %vm666, %v3000, -inf
    %3073 = vmax.xlane.f32.xlu0 %v3072
    %v3074 = vpop.xlane.xlu0 %3073
    %v3075 = vsel %vm666, %v3019, -inf
    %3076 = vmax.xlane.f32.xlu0 %v3075
    %v3077 = vpop.xlane.xlu0 %3076
    %v3078 = vsel %vm666, %v3038, -inf
    %3079 = vmax.xlane.f32.xlu0 %v3078
    %v3080 = vpop.xlane.xlu0 %3079
    %v3081 = vsel %vm666, %v3057, -inf
    %3082 = vmax.xlane.f32.xlu0 %v3081
    %v3083 = vpop.xlane.xlu0 %3082
    %v3084 = vsub.f32 %v2924, %v3062
    %v3085 = vsub.f32 %v2943, %v3065
    %v3086 = vsub.f32 %v2962, %v3068
    %v3087 = vsub.f32 %v2981, %v3071
    %v3088 = vsub.f32 %v3000, %v3074
    %v3089 = vsub.f32 %v3019, %v3077
    %v3090 = vsub.f32 %v3038, %v3080
    %v3091 = vsub.f32 %v3057, %v3083
    %v3092 = vmul.f32 %v3084, 1.442695
    %v3093 = vpow.pop %v3092
    %v3094 = vmul.f32 %v3085, 1.442695
    %v3095 = vpow.pop %v3094
    %v3096 = vmul.f32 %v3086, 1.442695
    %v3097 = vpow.pop %v3096
    %v3098 = vmul.f32 %v3087, 1.442695
    %v3099 = vpow.pop %v3098
    %v3100 = vmul.f32 %v3088, 1.442695
    %v3101 = vpow.pop %v3100
    %v3102 = vmul.f32 %v3089, 1.442695
    %v3103 = vpow.pop %v3102
    %v3104 = vmul.f32 %v3090, 1.442695
    %v3105 = vpow.pop %v3104
    %v3106 = vmul.f32 %v3091, 1.442695
    %v3107 = vpow.pop %v3106
    %v3108 = vsel %vm666, %v3093, 0.0
    %3109 = vadd.xlane.f32.xlu0 %v3108
    %v3110 = vpop.xlane.xlu0 %3109
    %v3111 = vsel %vm666, %v3095, 0.0
    %3112 = vadd.xlane.f32.xlu0 %v3111
    %v3113 = vpop.xlane.xlu0 %3112
    %v3114 = vsel %vm666, %v3097, 0.0
    %3115 = vadd.xlane.f32.xlu0 %v3114
    %v3116 = vpop.xlane.xlu0 %3115
    %v3117 = vsel %vm666, %v3099, 0.0
    %3118 = vadd.xlane.f32.xlu0 %v3117
    %v3119 = vpop.xlane.xlu0 %3118
    %v3120 = vsel %vm666, %v3101, 0.0
    %3121 = vadd.xlane.f32.xlu0 %v3120
    %v3122 = vpop.xlane.xlu0 %3121
    %v3123 = vsel %vm666, %v3103, 0.0
    %3124 = vadd.xlane.f32.xlu0 %v3123
    %v3125 = vpop.xlane.xlu0 %3124
    %v3126 = vsel %vm666, %v3105, 0.0
    %3127 = vadd.xlane.f32.xlu0 %v3126
    %v3128 = vpop.xlane.xlu0 %3127
    %v3129 = vsel %vm666, %v3107, 0.0
    %3130 = vadd.xlane.f32.xlu0 %v3129
    %v3131 = vpop.xlane.xlu0 %3130
    %v3132 = vrcp.pop %v3110
    %v3133 = vrcp.pop %v3113
    %v3134 = vrcp.pop %v3116
    %v3135 = vrcp.pop %v3119
    %v3136 = vrcp.pop %v3122
    %v3137 = vrcp.pop %v3125
    %v3138 = vrcp.pop %v3128
    %v3139 = vrcp.pop %v3131
    %v3140 = vmul.f32 %v3093, %v3132
    %v3141 = vmul.f32 %v3095, %v3133
    %v3142 = vmul.f32 %v3097, %v3134
    %v3143 = vmul.f32 %v3099, %v3135
    %v3144 = vmul.f32 %v3101, %v3136
    %v3145 = vmul.f32 %v3103, %v3137
    %v3146 = vmul.f32 %v3105, %v3138
    %v3147 = vmul.f32 %v3107, %v3139
    %v3148 = vpack.c.bf16 %v3140, %v3140
    %v3149 = vpack.c.bf16 %v3141, %v3141
    %v3150 = vpack.c.bf16 %v3142, %v3142
    %v3151 = vpack.c.bf16 %v3143, %v3143
    %v3152 = vpack.c.bf16 %v3144, %v3144
    %v3153 = vpack.c.bf16 %v3145, %v3145
    %v3154 = vpack.c.bf16 %v3146, %v3146
    %v3155 = vpack.c.bf16 %v3147, %v3147
    %v3156 = vunpack.c.l.b16 %v2878
    %v3157 = vpack.c.b16 %v3156, %v3156
    %3158 = vrot.lane.b32.xlu0 %v3157, 96
    %v3159 = vpop.permute.xlu0 %3158
    %v3161 = vsel %vm666, %v3148, 0
    %v3164 = vsel %vm922, %v3159, 0
    %3166 = vmatpush.bf16.msra.mxu0 0
    %3167 = vmatpush.bf16.msra.mxu0 0
    %3168 = vmatpush.bf16.msra.mxu0 0
    %3169 = vmatpush.bf16.msra.mxu0 0
    %3170 = vmatpush.bf16.msra.mxu0 0
    %3171 = vmatpush.bf16.msra.mxu0 0
    %3172 = vmatpush.bf16.msra.mxu0 0
    %3173 = vmatpush.bf16.msra.mxu0 %v3164
    %3174 = vmatmul.bf16.gmra.mxu0 %v3161
    %v3175 = vpop.f32.mrf.mxu0
    %v3176 = vadd.f32 0.0, %v3175
    %v3177 = vpop.f32.mrf.mxu0
    %3178 = vdwg.mxu0
    %v3179 = vunpack.c.l.b16 %v2879
    %v3180 = vpack.c.b16 %v3179, %v3179
    %3181 = vrot.lane.b32.xlu0 %v3180, 96
    %v3182 = vpop.permute.xlu0 %3181
    %v3184 = vsel %vm666, %v3149, 0
    %v3187 = vsel %vm922, %v3182, 0
    %3189 = vmatpush.bf16.msra.mxu0 0
    %3190 = vmatpush.bf16.msra.mxu0 0
    %3191 = vmatpush.bf16.msra.mxu0 0
    %3192 = vmatpush.bf16.msra.mxu0 0
    %3193 = vmatpush.bf16.msra.mxu0 0
    %3194 = vmatpush.bf16.msra.mxu0 0
    %3195 = vmatpush.bf16.msra.mxu0 0
    %3196 = vmatpush.bf16.msra.mxu0 %v3187
    %3197 = vmatmul.bf16.gmra.mxu0 %v3184
    %v3198 = vpop.f32.mrf.mxu0
    %v3199 = vadd.f32 0.0, %v3198
    %v3200 = vpop.f32.mrf.mxu0
    %3201 = vdwg.mxu0
    %v3202 = vunpack.c.l.b16 %v2897
    %v3203 = vpack.c.b16 %v3202, %v3202
    %3204 = vrot.lane.b32.xlu0 %v3203, 96
    %v3205 = vpop.permute.xlu0 %3204
    %v3207 = vsel %vm666, %v3150, 0
    %v3210 = vsel %vm922, %v3205, 0
    %3212 = vmatpush.bf16.msra.mxu0 0
    %3213 = vmatpush.bf16.msra.mxu0 0
    %3214 = vmatpush.bf16.msra.mxu0 0
    %3215 = vmatpush.bf16.msra.mxu0 0
    %3216 = vmatpush.bf16.msra.mxu0 0
    %3217 = vmatpush.bf16.msra.mxu0 0
    %3218 = vmatpush.bf16.msra.mxu0 0
    %3219 = vmatpush.bf16.msra.mxu0 %v3210
    %3220 = vmatmul.bf16.gmra.mxu0 %v3207
    %v3221 = vpop.f32.mrf.mxu0
    %v3222 = vadd.f32 0.0, %v3221
    %v3223 = vpop.f32.mrf.mxu0
    %3224 = vdwg.mxu0
    %v3225 = vunpack.c.l.b16 %v2899
    %v3226 = vpack.c.b16 %v3225, %v3225
    %3227 = vrot.lane.b32.xlu0 %v3226, 96
    %v3228 = vpop.permute.xlu0 %3227
    %v3230 = vsel %vm666, %v3151, 0
    %v3233 = vsel %vm922, %v3228, 0
    %3235 = vmatpush.bf16.msra.mxu0 0
    %3236 = vmatpush.bf16.msra.mxu0 0
    %3237 = vmatpush.bf16.msra.mxu0 0
    %3238 = vmatpush.bf16.msra.mxu0 0
    %3239 = vmatpush.bf16.msra.mxu0 0
    %3240 = vmatpush.bf16.msra.mxu0 0
    %3241 = vmatpush.bf16.msra.mxu0 0
    %3242 = vmatpush.bf16.msra.mxu0 %v3233
    %3243 = vmatmul.bf16.gmra.mxu0 %v3230
    %v3244 = vpop.f32.mrf.mxu0
    %v3245 = vadd.f32 0.0, %v3244
    %v3246 = vpop.f32.mrf.mxu0
    %3247 = vdwg.mxu0
    %v3248 = vunpack.c.l.b16 %v2901
    %v3249 = vpack.c.b16 %v3248, %v3248
    %3250 = vrot.lane.b32.xlu0 %v3249, 96
    %v3251 = vpop.permute.xlu0 %3250
    %v3253 = vsel %vm666, %v3152, 0
    %v3256 = vsel %vm922, %v3251, 0
    %3258 = vmatpush.bf16.msra.mxu0 0
    %3259 = vmatpush.bf16.msra.mxu0 0
    %3260 = vmatpush.bf16.msra.mxu0 0
    %3261 = vmatpush.bf16.msra.mxu0 0
    %3262 = vmatpush.bf16.msra.mxu0 0
    %3263 = vmatpush.bf16.msra.mxu0 0
    %3264 = vmatpush.bf16.msra.mxu0 0
    %3265 = vmatpush.bf16.msra.mxu0 %v3256
    %3266 = vmatmul.bf16.gmra.mxu0 %v3253
    %v3267 = vpop.f32.mrf.mxu0
    %v3268 = vadd.f32 0.0, %v3267
    %v3269 = vpop.f32.mrf.mxu0
    %3270 = vdwg.mxu0
    %v3271 = vunpack.c.l.b16 %v2903
    %v3272 = vpack.c.b16 %v3271, %v3271
    %3273 = vrot.lane.b32.xlu0 %v3272, 96
    %v3274 = vpop.permute.xlu0 %3273
    %v3276 = vsel %vm666, %v3153, 0
    %v3279 = vsel %vm922, %v3274, 0
    %3281 = vmatpush.bf16.msra.mxu0 0
    %3282 = vmatpush.bf16.msra.mxu0 0
    %3283 = vmatpush.bf16.msra.mxu0 0
    %3284 = vmatpush.bf16.msra.mxu0 0
    %3285 = vmatpush.bf16.msra.mxu0 0
    %3286 = vmatpush.bf16.msra.mxu0 0
    %3287 = vmatpush.bf16.msra.mxu0 0
    %3288 = vmatpush.bf16.msra.mxu0 %v3279
    %3289 = vmatmul.bf16.gmra.mxu0 %v3276
    %v3290 = vpop.f32.mrf.mxu0
    %v3291 = vadd.f32 0.0, %v3290
    %v3292 = vpop.f32.mrf.mxu0
    %3293 = vdwg.mxu0
    %v3294 = vunpack.c.l.b16 %v2905
    %v3295 = vpack.c.b16 %v3294, %v3294
    %3296 = vrot.lane.b32.xlu0 %v3295, 96
    %v3297 = vpop.permute.xlu0 %3296
    %v3299 = vsel %vm666, %v3154, 0
    %v3302 = vsel %vm922, %v3297, 0
    %3304 = vmatpush.bf16.msra.mxu0 0
    %3305 = vmatpush.bf16.msra.mxu0 0
    %3306 = vmatpush.bf16.msra.mxu0 0
    %3307 = vmatpush.bf16.msra.mxu0 0
    %3308 = vmatpush.bf16.msra.mxu0 0
    %3309 = vmatpush.bf16.msra.mxu0 0
    %3310 = vmatpush.bf16.msra.mxu0 0
    %3311 = vmatpush.bf16.msra.mxu0 %v3302
    %3312 = vmatmul.bf16.gmra.mxu0 %v3299
    %v3313 = vpop.f32.mrf.mxu0
    %v3314 = vadd.f32 0.0, %v3313
    %v3315 = vpop.f32.mrf.mxu0
    %3316 = vdwg.mxu0
    %v3317 = vunpack.c.l.b16 %v2907
    %v3318 = vpack.c.b16 %v3317, %v3317
    %3319 = vrot.lane.b32.xlu0 %v3318, 96
    %v3320 = vpop.permute.xlu0 %3319
    %v3322 = vsel %vm666, %v3155, 0
    %v3325 = vsel %vm922, %v3320, 0
    %3327 = vmatpush.bf16.msra.mxu0 0
    %3328 = vmatpush.bf16.msra.mxu0 0
    %3329 = vmatpush.bf16.msra.mxu0 0
    %3330 = vmatpush.bf16.msra.mxu0 0
    %3331 = vmatpush.bf16.msra.mxu0 0
    %3332 = vmatpush.bf16.msra.mxu0 0
    %3333 = vmatpush.bf16.msra.mxu0 0
    %3334 = vmatpush.bf16.msra.mxu0 %v3325
    %3335 = vmatmul.bf16.gmra.mxu0 %v3322
    %v3336 = vpop.f32.mrf.mxu0
    %v3337 = vadd.f32 0.0, %v3336
    %v3338 = vpop.f32.mrf.mxu0
    %3339 = vdwg.mxu0
    %v3340 = vld [vmem:[#allocation37] sm:$0xf]
    %v3341 = vld [vmem:[#allocation37 + $0x4] sm:$0xf]
    %v3342 = vld [vmem:[#allocation37 + $0x8] sm:$0xf]
    %v3343 = vld [vmem:[#allocation37 + $0xc] sm:$0xf]
    %v3344 = vpack.c.bf16 %v3199, %v3176
    %v3345 = vpack.c.bf16 %v3245, %v3222
    %v3347 = vsel %vm666, %v3345, 0
    %v3350 = vsel %vm922, %v3341, 0
    %3352 = vmatpush.bf16.msra.mxu0 0
    %3353 = vmatpush.bf16.msra.mxu0 0
    %3354 = vmatpush.bf16.msra.mxu0 0
    %3355 = vmatpush.bf16.msra.mxu0 0
    %3356 = vmatpush.bf16.msra.mxu0 0
    %3357 = vmatpush.bf16.msra.mxu0 0
    %3358 = vmatpush.bf16.msra.mxu0 0
    %3359 = vmatpush.bf16.msra.mxu0 %v3350
    %3360 = vmatmul.bf16.gmra.mxu0 %v3347
    %v3361 = vpop.f32.mrf.mxu0
    %v3362 = vadd.f32 0.0, %v3361
    %v3363 = vpop.f32.mrf.mxu0
    %v3364 = vadd.f32 0.0, %v3363
    %3365 = vdwg.mxu0
    %v3367 = vsel %vm666, %v3344, 0
    %v3370 = vsel %vm922, %v3340, 0
    %3372 = vmatpush.bf16.msra.mxu0 0
    %3373 = vmatpush.bf16.msra.mxu0 0
    %3374 = vmatpush.bf16.msra.mxu0 0
    %3375 = vmatpush.bf16.msra.mxu0 0
    %3376 = vmatpush.bf16.msra.mxu0 0
    %3377 = vmatpush.bf16.msra.mxu0 0
    %3378 = vmatpush.bf16.msra.mxu0 0
    %3379 = vmatpush.bf16.msra.mxu0 %v3370
    %3380 = vmatmul.bf16.gmra.mxu0 %v3367
    %v3381 = vpop.f32.mrf.mxu0
    %v3382 = vadd.f32 %v3362, %v3381
    %v3383 = vpop.f32.mrf.mxu0
    %v3384 = vadd.f32 %v3364, %v3383
    %3385 = vdwg.mxu0
    %v3386 = vpack.c.bf16 %v3291, %v3268
    %v3388 = vsel %vm666, %v3386, 0
    %v3391 = vsel %vm922, %v3342, 0
    %3393 = vmatpush.bf16.msra.mxu0 0
    %3394 = vmatpush.bf16.msra.mxu0 0
    %3395 = vmatpush.bf16.msra.mxu0 0
    %3396 = vmatpush.bf16.msra.mxu0 0
    %3397 = vmatpush.bf16.msra.mxu0 0
    %3398 = vmatpush.bf16.msra.mxu0 0
    %3399 = vmatpush.bf16.msra.mxu0 0
    %3400 = vmatpush.bf16.msra.mxu0 %v3391
    %3401 = vmatmul.bf16.gmra.mxu0 %v3388
    %v3402 = vpop.f32.mrf.mxu0
    %v3403 = vadd.f32 0.0, %v3402
    %v3404 = vpop.f32.mrf.mxu0
    %v3405 = vadd.f32 0.0, %v3404
    %3406 = vdwg.mxu0
    %v3407 = vadd.f32 %v3382, %v3403
    %v3408 = vadd.f32 %v3384, %v3405
    %v3409 = vpack.c.bf16 %v3337, %v3314
    %v3411 = vsel %vm666, %v3409, 0
    %v3414 = vsel %vm922, %v3343, 0
    %3416 = vmatpush.bf16.msra.mxu0 0
    %3417 = vmatpush.bf16.msra.mxu0 0
    %3418 = vmatpush.bf16.msra.mxu0 0
    %3419 = vmatpush.bf16.msra.mxu0 0
    %3420 = vmatpush.bf16.msra.mxu0 0
    %3421 = vmatpush.bf16.msra.mxu0 0
    %3422 = vmatpush.bf16.msra.mxu0 0
    %3423 = vmatpush.bf16.msra.mxu0 %v3414
    %3424 = vmatmul.bf16.gmra.mxu0 %v3411
    %v3425 = vpop.f32.mrf.mxu0
    %v3426 = vadd.f32 0.0, %v3425
    %v3427 = vpop.f32.mrf.mxu0
    %v3428 = vadd.f32 0.0, %v3427
    %3429 = vdwg.mxu0
    %v3430 = vadd.f32 %v3407, %v3426
    %v3431 = vadd.f32 %v3408, %v3428
    %v3432 = vld [vmem:[#allocation38] sm:$0x1]
    %v3434 = vperm.slane %v3432, 0
    %v3436 = vadd.f32 %v3430, %v3434
    %v3437 = vadd.f32 %v3431, %v3434
    %v3438 = vadd.f32 %v3436, %v2802
    %v3439 = vadd.f32 %v3437, %v2803
    %v3440 = vsel %vm582, %v3438, 0.0
    %3441 = vadd.xlane.f32.xlu0 %v3440
    %v3442 = vpop.xlane.xlu0 %3441
    %v3443 = vsel %vm582, %v3439, 0.0
    %3444 = vadd.xlane.f32.xlu0 %v3443
    %v3445 = vpop.xlane.xlu0 %3444
    %v3446 = vmul.f32 %v3442, %v1212
    %v3447 = vmul.f32 %v3445, %v1212
    %v3448 = vmul.f32 %v3438, %v3438
    %v3449 = vmul.f32 %v3439, %v3439
    %v3450 = vsel %vm582, %v3448, 0.0
    %3451 = vadd.xlane.f32.xlu0 %v3450
    %v3452 = vpop.xlane.xlu0 %3451
    %v3453 = vsel %vm582, %v3449, 0.0
    %3454 = vadd.xlane.f32.xlu0 %v3453
    %v3455 = vpop.xlane.xlu0 %3454
    %v3456 = vmul.f32 %v3452, %v1212
    %v3457 = vmul.f32 %v3455, %v1212
    %v3458 = vmul.f32 %v3446, %v3446
    %v3459 = vmul.f32 %v3447, %v3447
    %v3460 = vsub.f32 %v3456, %v3458
    %v3461 = vsub.f32 %v3457, %v3459
    %v3462 = vsub.f32 %v3438, %v3446
    %v3463 = vsub.f32 %v3439, %v3447
    %v3464 = vadd.f32 %v3460, 1e-05
    %v3465 = vadd.f32 %v3461, 1e-05
    %v3466 = vrsqrt.pop %v3464
    %v3467 = vmul.f32 %v3466, %v3464
    %v3468 = vmul.f32 %v3467, %v3466
    %v3469 = vmul.f32 0.5, %v3468
    %v3470 = vsub.f32 1.5, %v3469
    %v3471 = vmul.f32 %v3466, %v3470
    %vm3472 = vweird.f32 %v3464
    %vm3473 = vweird.f32 %v3466
    %vm3474 = vmor %vm3472, %vm3473
    %v3475 = vsel %vm3474, %v3466, %v3471
    %v3476 = vrsqrt.pop %v3465
    %v3477 = vmul.f32 %v3476, %v3465
    %v3478 = vmul.f32 %v3477, %v3476
    %v3479 = vmul.f32 0.5, %v3478
    %v3480 = vsub.f32 1.5, %v3479
    %v3481 = vmul.f32 %v3476, %v3480
    %vm3482 = vweird.f32 %v3465
    %vm3483 = vweird.f32 %v3476
    %vm3484 = vmor %vm3482, %vm3483
    %v3485 = vsel %vm3484, %v3476, %v3481
    %v3486 = vmul.f32 %v3462, %v3475
    %v3487 = vmul.f32 %v3463, %v3485
    %v3488 = vmul.f32 %v3486, %v2795
    %v3489 = vmul.f32 %v3487, %v2795
    %v3490 = vadd.f32 %v3488, %v2800
    %v3491 = vadd.f32 %v3489, %v2800
    %v3492 = vpack.c.bf16 %v3491, %v3490
    %v3493 = vld [vmem:[#allocation40] sm:$0xf]
    %v3494 = vld [vmem:[#allocation40 + $0x4] sm:$0xf]
    %v3495 = vld [vmem:[#allocation40 + $0x8] sm:$0xf]
    %v3496 = vld [vmem:[#allocation40 + $0xc] sm:$0xf]
    %v3497 = vld [vmem:[#allocation41] sm:$0x1]
    %v3499 = vperm.slane %v3497, 0
    %v3505 = vunpack.c.l.b16 %v3493
    %v3506 = vunpack.c.l.b16 %v3494
    %v3507 = vunpack.c.l.b16 %v3495
    %v3508 = vunpack.c.l.b16 %v3496
    %v3509 = vpack.c.b16 %v3506, %v3505
    %v3510 = vpack.c.b16 %v3508, %v3507
    %v3514 = vsel %vm582, %v3492, 0
    %3516 = vmatpush.bf16.msra.mxu0 0
    %3517 = vmatpush.bf16.msra.mxu0 0
    %3518 = vmatpush.bf16.msra.mxu0 0
    %3519 = vmatpush.bf16.msra.mxu0 0
    %3520 = vmatpush.bf16.msra.mxu0 0
    %3521 = vmatpush.bf16.msra.mxu0 0
    %3522 = vmatpush.bf16.msra.mxu0 %v3510
    %3523 = vmatpush.bf16.msra.mxu0 %v3509
    %3524 = vmatmul.bf16.gmra.mxu0 %v3514
    %v3525 = vpop.f32.mrf.mxu0
    %v3526 = vadd.f32 %v3499, %v3525
    %v3527 = vpop.f32.mrf.mxu0
    %v3528 = vadd.f32 %v3499, %v3527
    %3529 = vdwg.mxu0
    %v3530 = vmax.f32 %v3526, 0.0
    %v3531 = vmax.f32 %v3528, 0.0
    %v3532 = vpack.c.bf16 %v3531, %v3530
    %v3533 = vld [vmem:[%s69] sm:$0xf]
    %v3534 = vld [vmem:[%s69 + $0x4] sm:$0xf]
    %v3535 = vld [vmem:[%s69 + $0x8] sm:$0xf]
    %v3536 = vld [vmem:[%s69 + $0xc] sm:$0xf]
    %v3537 = vld [vmem:[%s69 + $0x10] sm:$0xf]
    %v3538 = vld [vmem:[%s69 + $0x14] sm:$0xf]
    %v3539 = vld [vmem:[%s69 + $0x18] sm:$0xf]
    %v3540 = vld [vmem:[%s69 + $0x1c] sm:$0xf]
    %v3541 = vld [vmem:[#allocation43] sm:$0x1]
    %v3543 = vperm.slane %v3541, 0
    %v3553 = vunpack.c.l.b16 %v3533
    %v3554 = vunpack.c.l.b16 %v3534
    %v3555 = vunpack.c.l.b16 %v3535
    %v3556 = vunpack.c.l.b16 %v3536
    %v3557 = vunpack.c.l.b16 %v3537
    %v3558 = vunpack.c.l.b16 %v3538
    %v3559 = vunpack.c.l.b16 %v3539
    %v3560 = vunpack.c.l.b16 %v3540
    %v3561 = vpack.c.b16 %v3554, %v3553
    %v3562 = vpack.c.b16 %v3556, %v3555
    %v3563 = vpack.c.b16 %v3558, %v3557
    %v3564 = vpack.c.b16 %v3560, %v3559
    %v3570 = vsel %vm2034, %v3532, 0
    %3572 = vmatpush.bf16.msra.mxu0 0
    %3573 = vmatpush.bf16.msra.mxu0 0
    %3574 = vmatpush.bf16.msra.mxu0 0
    %3575 = vmatpush.bf16.msra.mxu0 0
    %3576 = vmatpush.bf16.msra.mxu0 %v3564
    %3577 = vmatpush.bf16.msra.mxu0 %v3563
    %3578 = vmatpush.bf16.msra.mxu0 %v3562
    %3579 = vmatpush.bf16.msra.mxu0 %v3561
    %3580 = vmatmul.bf16.gmra.mxu0 %v3570
    %v3581 = vpop.f32.mrf.mxu0
    %v3582 = vadd.f32 %v3543, %v3581
    %v3583 = vpop.f32.mrf.mxu0
    %v3584 = vadd.f32 %v3543, %v3583
    %3585 = vdwg.mxu0
    %v3586 = vadd.f32 %v3582, %v3490
    %v3587 = vadd.f32 %v3584, %v3491
    %v3588 = vsel %vm582, %v3586, 0.0
    %3589 = vadd.xlane.f32.xlu0 %v3588
    %v3590 = vpop.xlane.xlu0 %3589
    %v3591 = vsel %vm582, %v3587, 0.0
    %3592 = vadd.xlane.f32.xlu0 %v3591
    %v3593 = vpop.xlane.xlu0 %3592
    %v3594 = vmul.f32 %v3590, %v1212
    %v3595 = vmul.f32 %v3593, %v1212
    %v3596 = vmul.f32 %v3586, %v3586
    %v3597 = vmul.f32 %v3587, %v3587
    %v3598 = vsel %vm582, %v3596, 0.0
    %3599 = vadd.xlane.f32.xlu0 %v3598
    %v3600 = vpop.xlane.xlu0 %3599
    %v3601 = vsel %vm582, %v3597, 0.0
    %3602 = vadd.xlane.f32.xlu0 %v3601
    %v3603 = vpop.xlane.xlu0 %3602
    %v3604 = vmul.f32 %v3600, %v1212
    %v3605 = vmul.f32 %v3603, %v1212
    %v3606 = vmul.f32 %v3594, %v3594
    %v3607 = vmul.f32 %v3595, %v3595
    %v3608 = vsub.f32 %v3604, %v3606
    %v3609 = vsub.f32 %v3605, %v3607
    %v3610 = vsub.f32 %v3586, %v3594
    %v3611 = vsub.f32 %v3587, %v3595
    %v3612 = vadd.f32 %v3608, 1e-05
    %v3613 = vadd.f32 %v3609, 1e-05
    %v3614 = vrsqrt.pop %v3612
    %v3615 = vmul.f32 %v3614, %v3612
    %v3616 = vmul.f32 %v3615, %v3614
    %v3617 = vmul.f32 0.5, %v3616
    %v3618 = vsub.f32 1.5, %v3617
    %v3619 = vmul.f32 %v3614, %v3618
    %vm3620 = vweird.f32 %v3612
    %vm3621 = vweird.f32 %v3614
    %vm3622 = vmor %vm3620, %vm3621
    %v3623 = vsel %vm3622, %v3614, %v3619
    %v3624 = vrsqrt.pop %v3613
    %v3625 = vmul.f32 %v3624, %v3613
    %v3626 = vmul.f32 %v3625, %v3624
    %v3627 = vmul.f32 0.5, %v3626
    %v3628 = vsub.f32 1.5, %v3627
    %v3629 = vmul.f32 %v3624, %v3628
    %vm3630 = vweird.f32 %v3613
    %vm3631 = vweird.f32 %v3624
    %vm3632 = vmor %vm3630, %vm3631
    %v3633 = vsel %vm3632, %v3624, %v3629
    %v3634 = vmul.f32 %v3610, %v3623
    %v3635 = vmul.f32 %v3611, %v3633
    %v3636 = vmul.f32 %v3634, %v2795
    %v3637 = vmul.f32 %v3635, %v2795
    %v3638 = vadd.f32 %v3636, %v2800
    %v3639 = vadd.f32 %v3637, %v2800
    %v3640 = vpack.c.bf16 %v3639, %v3638
    %v3641 = vld [vmem:[%s77] sm:$0xf]
    %v3642 = vld [vmem:[%s77 + $0x4] sm:$0xf]
    %v3643 = vld [vmem:[%s77 + $0x8] sm:$0xf]
    %v3644 = vld [vmem:[%s77 + $0xc] sm:$0xf]
    %v3645 = vld [vmem:[%s79] sm:$0x1]
    %v3647 = vperm.slane %v3645, 0
    %v3653 = vunpack.c.l.b16 %v3641
    %v3654 = vunpack.c.l.b16 %v3642
    %v3655 = vunpack.c.l.b16 %v3643
    %v3656 = vunpack.c.l.b16 %v3644
    %v3657 = vpack.c.b16 %v3654, %v3653
    %v3658 = vpack.c.b16 %v3656, %v3655
    %v3662 = vsel %vm582, %v3640, 0
    %3664 = vmatpush.bf16.msra.mxu0 0
    %3665 = vmatpush.bf16.msra.mxu0 0
    %3666 = vmatpush.bf16.msra.mxu0 0
    %3667 = vmatpush.bf16.msra.mxu0 0
    %3668 = vmatpush.bf16.msra.mxu0 0
    %3669 = vmatpush.bf16.msra.mxu0 0
    %3670 = vmatpush.bf16.msra.mxu0 %v3658
    %3671 = vmatpush.bf16.msra.mxu0 %v3657
    %3672 = vmatmul.bf16.gmra.mxu0 %v3662
    %v3673 = vpop.f32.mrf.mxu0
    %v3674 = vadd.f32 %v3647, %v3673
    %v3675 = vpop.f32.mrf.mxu0
    %v3676 = vadd.f32 %v3647, %v3675
    %3677 = vdwg.mxu0
    %3678 = vst [vmem:[#allocation44] sm:$0xff] %v3674
    %3679 = vst [vmem:[#allocation44 + $0x8] sm:$0xff] %v3676
    // Predicated region
    $region270: #{tpu_custom_call.1} parent=1 // pred_check
      _
    $region271: #{tpu_custom_call.1} parent=1 // pred_check_branch
      %3681 = sbr.rel (0) target = $region273
    $region272: #{tpu_custom_call.1} parent=1 // pred_region
      %3683 = vsyncadd [#allocation4], 0
      %s3684 = sshll.u32 [#allocation44], 4
      %s3685 = int_to_ptr.vmem [resolvable:$true] %s3684
      %s3686 = sshll.u32 %s81, 4
      %s3687 = int_to_ptr.hbm [resolvable:$true] %s3686
      %3692 = dma.vmem_to_hbm [thread:$0]  %s3685, 256, %s3687, [#allocation4], 128, 128, 8
    $region273: #{tpu_custom_call.1} parent=1 // pred_fallthru
      _
    // Predicated region
    $region274: #{tpu_custom_call.1} parent=1 // pred_check
      _
    $region275: #{tpu_custom_call.1} parent=1 // pred_check_branch
      %3694 = sbr.rel (0) target = $region277
    $region276: #{tpu_custom_call.1} parent=1 // pred_region
      %3696 = vsyncadd [#allocation46], 0
      %s3697 = sshll.u32 [#allocation45], 4
      %s3698 = int_to_ptr.vmem [resolvable:$true] %s3697
      %s3699 = sshll.u32 %s83, 4
      %s3700 = int_to_ptr.hbm [resolvable:$true] %s3699
      %3705 = dma.vmem_to_hbm [thread:$0]  %s3698, 256, %s3700, [#allocation46], 128, 128, 8
    $region277: #{tpu_custom_call.1} parent=1 // pred_fallthru
      _
    // Predicated region
    $region278: #{tpu_custom_call.1} parent=1 // pred_check
      _
    $region279: #{tpu_custom_call.1} parent=1 // pred_check_branch
      %3707 = sbr.rel (0) target = $region281
    $region280: #{tpu_custom_call.1} parent=1 // pred_region
      %3709 = dma.done [#allocation4], 256
    $region281: #{tpu_custom_call.1} parent=1 // pred_fallthru
      _
    // Predicated region
    $region282: #{tpu_custom_call.1} parent=1 // pred_check
      _
    $region283: #{tpu_custom_call.1} parent=1 // pred_check_branch
      %3711 = sbr.rel (0) target = $region285
    $region284: #{tpu_custom_call.1} parent=1 // pred_region
      %3713 = dma.done [#allocation46], 256
    $region285: #{tpu_custom_call.1} parent=1 // pred_fallthru
      _
    %3714 = vsyncpa [#allocation3], 1
    %3715 = vsyncpa [#allocation6], 1
    %3716 = vsyncpa [#allocation9], 1
    %3717 = vsyncpa [#allocation12], 1
    %3718 = vsyncpa [#allocation15], 1
    %3719 = vsyncpa [#allocation18], 1
    %3720 = vsyncpa [#allocation21], 1
    %3721 = vsyncpa [#allocation24], 1
    %3722 = vsyncpa [#allocation27], 1
    %3723 = vsyncpa [#allocation30], 1
    %3724 = vsyncpa [#allocation33], 1
    %3725 = vsyncpa [#allocation36], 1
    %3726 = vsyncpa [#allocation39], 1
    %3727 = vsyncpa [#allocation42], 1
    %3728 = vsyncpa [#allocation4], 1
    %3729 = vsyncpa [#allocation46], 1

</llo_original>
